<compile_context>
chip_gen: v6e
topology: v6e:2x2x1
jax: 0.10.0
libtpu: 0.0.40
codegen_flags: <defaults>
</compile_context>

<pallas_src>
import functools

import jax
import jax.numpy as jnp
import numpy as np
from jax import lax
from jax.experimental import pallas as pl
from jax.experimental.pallas import tpu as pltpu

EPS = 1e-5            # PyTorch BatchNorm2d default eps
CPAD = 128            # lane-pad output channels (128-multiple works on v5e/v6e/v7x)
DEF_TILE_M = 1024     # rows per grid step (per-step VMEM footprint is ~1 MiB)


def _round_up(x, m):
    return (x + m - 1) // m * m


def _choose_tile_m(m):
    # cap at M/2 so the parallel grid axis has >= 2 steps (v7x megacore),
    # and at DEF_TILE_M so large problems still pipeline through VMEM.
    half = _round_up(max(m // 2, 8), 8)
    return max(8, min(DEF_TILE_M, half))


def _vmem_limit_bytes():
    # generation-aware scoped-VMEM limit: half of physical, capped at 64 MiB
    # (=> 64 MiB on v5e/v6e's 128 MiB VMEM, 32 MiB on v7x's 64 MiB VMEM).
    try:
        cap = pltpu.get_tpu_info().vmem_capacity_bytes
    except Exception:
        cap = 64 * 1024 * 1024
    return int(min(64 * 1024 * 1024, max(cap // 2, 32 * 1024 * 1024)))


_VMEM_LIMIT = _vmem_limit_bytes()


def _compiler_params():
    return pltpu.CompilerParams(
        dimension_semantics=("parallel",),
        vmem_limit_bytes=_VMEM_LIMIT,
    )


# ---------------------------------------------------------------------------
# Pass 1 kernel: conv-as-matmul (bf16 -> f32 acc, bf16 store) + BN partial stats
# ---------------------------------------------------------------------------
def _matmul_stats_kernel(p_ref, w_ref, y_ref, st_ref):
    tile_m = p_ref.shape[0]
    y = jnp.dot(p_ref[...], w_ref[...], preferred_element_type=jnp.float32)
    y_ref[...] = y.astype(y_ref.dtype)          # bf16 store: halves pass-2 HBM read

    # Per-channel partial BN stats on the (nearly idle) MXU: selector rows route
    # the per-channel sum into sublane 0 and the sum-of-squares into sublane 1
    # of the (8, C) stats tile; rows 2..7 are exact zeros.  Single dense store.
    row = lax.broadcasted_iota(jnp.int32, (8, tile_m), 0)
    sel_sum = (row == 0).astype(jnp.float32)
    sel_sq = (row == 1).astype(jnp.float32)
    st_ref[...] = (
        jnp.dot(sel_sum, y, preferred_element_type=jnp.float32)
        + jnp.dot(sel_sq, y * y, preferred_element_type=jnp.float32)
    )


def conv_matmul_stats(patches, weight, tile_m):
    """patches: (M_pad, K) bf16; weight: (K, C) bf16 with C a multiple of 128.

    Returns (y_bf16 (M_pad, C), stats_f32 (T*8, C)) where rows t*8+0 / t*8+1 of
    `stats` hold tile t's per-channel sum / sum-of-squares.
    """
    m_pad, k = patches.shape
    c = weight.shape[1]
    t = m_pad // tile_m
    y, st = pl.pallas_call(
        _matmul_stats_kernel,
        grid=(t,),
        in_specs=[pl.BlockSpec((tile_m, k), lambda i: (i, 0)),
                  pl.BlockSpec((k, c), lambda i: (0, 0))],
        out_specs=[pl.BlockSpec((tile_m, c), lambda i: (i, 0)),
                   pl.BlockSpec((8, c), lambda i: (i, 0))],
        out_shape=[jax.ShapeDtypeStruct((m_pad, c), jnp.bfloat16),
                   jax.ShapeDtypeStruct((t * 8, c), jnp.float32)],
        compiler_params=_compiler_params(),
    )(patches, weight)
    return y, st


# ---------------------------------------------------------------------------
# Pass 2 kernel: y*scale + shift (+ReLU), optionally fused with the residual
# branch's BN + add + final ReLU (so the residual never round-trips HBM as f32)
# ---------------------------------------------------------------------------
def _bn_act_kernel(relu, has_res, *refs):
    if has_res:
        y_ref, sc_ref, sh_ref, yr_ref, scr_ref, shr_ref, o_ref = refs
    else:
        y_ref, sc_ref, sh_ref, o_ref = refs
    out = y_ref[...].astype(jnp.float32) * sc_ref[...] + sh_ref[...]
    if relu:
        out = jnp.maximum(out, 0.0)
    if has_res:
        res = yr_ref[...].astype(jnp.float32) * scr_ref[...] + shr_ref[...]
        out = jnp.maximum(out + res, 0.0)
    o_ref[...] = out.astype(o_ref.dtype)


def bn_act(y, scale, shift, *, tile_m, relu, out_dtype, lane_block=0, res=None):
    """Normalize (+ReLU) one 128-lane block of `y`.

    `res = (y_r, scale_r, shift_r, lane_block_r)` fuses the residual branch's
    BatchNorm, the residual add and the final ReLU into the same pass.
    """
    m_pad = y.shape[0]
    t = m_pad // tile_m

    def yspec(lb):
        return pl.BlockSpec((tile_m, CPAD), lambda i, lb=lb: (i, lb))

    vec_spec = pl.BlockSpec((1, CPAD), lambda i: (0, 0))
    args = [y, scale.reshape(1, CPAD), shift.reshape(1, CPAD)]
    in_specs = [yspec(lane_block), vec_spec, vec_spec]
    if res is not None:
        y_r, sc_r, sh_r, lb_r = res
        args += [y_r, sc_r.reshape(1, CPAD), sh_r.reshape(1, CPAD)]
        in_specs += [yspec(lb_r), vec_spec, vec_spec]

    return pl.pallas_call(
        functools.partial(_bn_act_kernel, relu, res is not None),
        grid=(t,),
        in_specs=in_specs,
        out_specs=pl.BlockSpec((tile_m, CPAD), lambda i: (i, 0)),
        out_shape=jax.ShapeDtypeStruct((m_pad, CPAD), out_dtype),
        compiler_params=_compiler_params(),
    )(*args)


# ---------------------------------------------------------------------------
# Plain-JAX glue: stats -> scale/shift, im2col (NHWC), weight/param prep
# ---------------------------------------------------------------------------
def bn_scale_shift(stats, gamma_pad, beta_pad, m_true):
    c = stats.shape[1]
    st = stats.reshape(-1, 8, c)
    ssum = st[:, 0, :].sum(axis=0)
    ssq = st[:, 1, :].sum(axis=0)
    mean = ssum / m_true
    var = jnp.maximum(ssq / m_true - mean * mean, 0.0)   # biased (training-mode) var
    scale = gamma_pad * lax.rsqrt(var + EPS)
    shift = beta_pad - mean * scale
    return scale, shift


def im2col_nhwc(x, kh, kw, stride, pad):
    """x: (N, H, W, C) -> patches (N*Ho*Wo, kh*kw*C), K ordered (kh, kw, C)."""
    N, H, W, C = x.shape
    xp = jnp.pad(x, ((0, 0), (pad, pad), (pad, pad), (0, 0)))
    Ho = (H + 2 * pad - kh) // stride + 1
    Wo = (W + 2 * pad - kw) // stride + 1
    cols = [
        xp[:, i:i + stride * Ho:stride, j:j + stride * Wo:stride, :]
        for i in range(kh) for j in range(kw)
    ]
    patches = jnp.concatenate(cols, axis=-1)
    return patches.reshape(N * Ho * Wo, kh * kw * C), Ho, Wo


def prep_weight(w_oihw):
    """PyTorch (Cout, Cin, kh, kw) -> bf16 (kh*kw*Cin, CPAD), zero-padded Cout."""
    cout = w_oihw.shape[0]
    w = jnp.transpose(w_oihw, (2, 3, 1, 0)).reshape(-1, cout)
    return jnp.pad(w, ((0, 0), (0, CPAD - cout))).astype(jnp.bfloat16)


def pad_vec(v):
    return jnp.pad(v.astype(jnp.float32), (0, CPAD - v.shape[0]))


def pad_rows(p, m_pad):
    return jnp.pad(p, ((0, m_pad - p.shape[0]), (0, 0)))


# ---------------------------------------------------------------------------
# DecoderResidualBlock forward (Pallas)
# ---------------------------------------------------------------------------
def pallas_forward(x_nchw, skip_nchw, prm):
    N = x_nchw.shape[0]
    cout = prm["w1"].shape[0]

    x = jnp.transpose(x_nchw, (0, 2, 3, 1)).astype(jnp.bfloat16)      # channels-last
    skip = jnp.transpose(skip_nchw, (0, 2, 3, 1)).astype(jnp.bfloat16)

    # im2col for the two stride-2 convs that both read x; pack them along K into
    # one block-diagonal matmul with a 256-lane output (residual lanes 0:128,
    # conv1 lanes 128:256) to match the 256-wide MXU on v6e/v7x.
    pr, Ho, Wo = im2col_nhwc(x, 2, 2, 2, 0)          # residual Conv2d(k=2, s=2)
    p1, _, _ = im2col_nhwc(x, 3, 3, 2, 1)            # conv1 (k=3, s=2, p=1)
    M = N * Ho * Wo
    tile_m = _choose_tile_m(M)
    m_pad = _round_up(M, tile_m)

    p01 = pad_rows(jnp.concatenate([pr, p1], axis=1), m_pad)          # (m_pad, Kr+K1)
    wr, w1 = prep_weight(prm["wres"]), prep_weight(prm["w1"])
    w01 = jnp.concatenate(
        [jnp.concatenate([wr, jnp.zeros_like(wr)], axis=1),
         jnp.concatenate([jnp.zeros_like(w1), w1], axis=1)], axis=0)  # block-diag (K, 256)

    # pass 1 (fused residual + conv1): one 256-lane matmul + BN partial stats.
    # Conv biases are dropped: training-mode BatchNorm cancels them exactly.
    y01, st01 = conv_matmul_stats(p01, w01, tile_m)
    g01 = jnp.concatenate([pad_vec(prm["gres"]), pad_vec(prm["g1"])])
    b01 = jnp.concatenate([pad_vec(prm["btres"]), pad_vec(prm["bt1"])])
    sc01, sh01 = bn_scale_shift(st01, g01, b01, M)
    sc_r, sh_r = sc01[:CPAD], sh01[:CPAD]
    sc_1, sh_1 = sc01[CPAD:], sh01[CPAD:]

    # pass 2: normalize + ReLU only the conv1 half.  The residual half of y01 is
    # kept un-normalized (bf16) and its BN is fused into the final pass instead.
    out1 = bn_act(y01, sc_1, sh_1, tile_m=tile_m, relu=True,
                  out_dtype=jnp.bfloat16, lane_block=1)

    # concat with skip along the channel (lane) axis — stays channels-last
    out1_sp = out1[:M, :cout].reshape(N, Ho, Wo, cout)
    cat = jnp.concatenate([out1_sp, skip], axis=-1)

    # conv2: ConvBlock(2*out, out, k=3, s=1, p=1)
    p2, _, _ = im2col_nhwc(cat, 3, 3, 1, 1)
    y2, st2 = conv_matmul_stats(pad_rows(p2, m_pad), prep_weight(prm["w2"]), tile_m)
    sc_2, sh_2 = bn_scale_shift(st2, pad_vec(prm["g2"]), pad_vec(prm["bt2"]), M)
    out2 = bn_act(y2, sc_2, sh_2, tile_m=tile_m, relu=True, out_dtype=jnp.bfloat16)

    # conv3: ConvBlock(out, out, k=3, s=1, p=1), with the residual branch's BN,
    # the residual add and the final ReLU fused into the same normalize pass.
    out2_sp = out2[:M, :cout].reshape(N, Ho, Wo, cout)
    p3, _, _ = im2col_nhwc(out2_sp, 3, 3, 1, 1)
    y3, st3 = conv_matmul_stats(pad_rows(p3, m_pad), prep_weight(prm["w3"]), tile_m)
    sc_3, sh_3 = bn_scale_shift(st3, pad_vec(prm["g3"]), pad_vec(prm["bt3"]), M)
    out3 = bn_act(y3, sc_3, sh_3, tile_m=tile_m, relu=True, out_dtype=jnp.float32,
                  res=(y01, sc_r, sh_r, 0))

    out = out3[:M, :cout].reshape(N, Ho, Wo, cout)
    return jnp.transpose(out, (0, 3, 1, 2))          # NCHW only at module boundary


# ---------------------------------------------------------------------------
# Pure-JAX reference (module semantics, f32 HIGHEST) for the correctness check
# ---------------------------------------------------------------------------
def _ref_conv(x, w, b, stride, pad):
    y = lax.conv_general_dilated(
        x, w, (stride, stride), ((pad, pad), (pad, pad)),
        dimension_numbers=("NCHW", "OIHW", "NCHW"),
        precision=lax.Precision.HIGHEST)
    return y + b.reshape(1, -1, 1, 1)


def _ref_bn(y, g, bt):
    mean = y.mean(axis=(0, 2, 3), keepdims=True)
    var = ((y - mean) ** 2).mean(axis=(0, 2, 3), keepdims=True)
    return (y - mean) * lax.rsqrt(var + EPS) * g.reshape(1, -1, 1, 1) \
        + bt.reshape(1, -1, 1, 1)


def ref_forward(x, skip, prm):
    def convblock(z, w, b, g, bt, stride, pad):
        return jnp.maximum(_ref_bn(_ref_conv(z, w, b, stride, pad), g, bt), 0.0)

    res = _ref_bn(_ref_conv(x, prm["wres"], prm["bres"], 2, 0),
                  prm["gres"], prm["btres"])
    out1 = convblock(x, prm["w1"], prm["b1"], prm["g1"], prm["bt1"], 2, 1)
    out1 = jnp.concatenate([out1, skip], axis=1)
    out2 = convblock(out1, prm["w2"], prm["b2"], prm["g2"], prm["bt2"], 1, 1)
    out3 = convblock(out2, prm["w3"], prm["b3"], prm["g3"], prm["bt3"], 1, 1)
    return jnp.maximum(out3 + res, 0.0)


# ---------------------------------------------------------------------------
if __name__ == "__main__":
    in_ch, out_ch = 4, 8
    N, H, W = 2, 16, 16
    Ho, Wo = 8, 8

    key = jax.random.PRNGKey(0)
    ks = jax.random.split(key, 20)

    def wgen(k, shape, scale=0.1):
        return (scale * jax.random.normal(k, shape)).astype(jnp.float32)

    params = {
        "w1": wgen(ks[0], (out_ch, in_ch, 3, 3)),
        "b1": wgen(ks[1], (out_ch,), 0.05),
        "g1": (1.0 + 0.1 * jax.random.normal(ks[2], (out_ch,))).astype(jnp.float32),
        "bt1": wgen(ks[3], (out_ch,), 0.05),
        "w2": wgen(ks[4], (out_ch, 2 * out_ch, 3, 3)),
        "b2": wgen(ks[5], (out_ch,), 0.05),
        "g2": (1.0 + 0.1 * jax.random.normal(ks[6], (out_ch,))).astype(jnp.float32),
        "bt2": wgen(ks[7], (out_ch,), 0.05),
        "w3": wgen(ks[8], (out_ch, out_ch, 3, 3)),
        "b3": wgen(ks[9], (out_ch,), 0.05),
        "g3": (1.0 + 0.1 * jax.random.normal(ks[10], (out_ch,))).astype(jnp.float32),
        "bt3": wgen(ks[11], (out_ch,), 0.05),
        "wres": wgen(ks[12], (out_ch, in_ch, 2, 2)),
        "bres": wgen(ks[13], (out_ch,), 0.05),
        "gres": (1.0 + 0.1 * jax.random.normal(ks[14], (out_ch,))).astype(jnp.float32),
        "btres": wgen(ks[15], (out_ch,), 0.05),
    }

    # module input is the tuple (x, skip)
    x = jax.random.normal(ks[16], (N, in_ch, H, W), dtype=jnp.float32)
    skip = jax.random.normal(ks[17], (N, out_ch, Ho, Wo), dtype=jnp.float32)

    out = jax.block_until_ready(jax.jit(pallas_forward)(x, skip, params))
    ref = jax.block_until_ready(jax.jit(ref_forward)(x, skip, params))

    assert out.shape == (N, out_ch, Ho, Wo), out.shape
    # bf16 MXU inputs + bf16 intermediate activations => bf16-level tolerance
    np.testing.assert_allclose(np.asarray(out), np.asarray(ref), rtol=5e-2, atol=5e-2)

    print("KERNEL_OK")
</pallas_src>

<mosaic_0001>
module attributes {stable_mosaic.version = 11 : i64} {
  func.func @_matmul_stats_kernel(%arg0: i32, %arg1: memref<64x52xbf16, #tpu.memory_space<vmem>>, %arg2: memref<52x256xbf16, #tpu.memory_space<vmem>>, %arg3: memref<64x256xbf16, #tpu.memory_space<vmem>>, %arg4: memref<8x256xf32, #tpu.memory_space<vmem>>) attributes {dimension_semantics = [#tpu.dimension_semantics<parallel>], iteration_bounds = array<i64: 2>, scalar_prefetch = 0 : i64, scratch_operands = 0 : i64, tpu.core_type = #tpu.core_type<tc>, window_params = [{transform_indices = @transform_0, window_bounds = array<i64: 64, 52>}, {pipeline_mode = #tpu.pipeline_mode<synchronous>, transform_indices = @transform_1, window_bounds = array<i64: 52, 256>}, {transform_indices = @transform_2, window_bounds = array<i64: 64, 256>}, {transform_indices = @transform_3, window_bounds = array<i64: 8, 256>}]} {
    %c0 = arith.constant 0 : index
    %c0_0 = arith.constant 0 : index
    %0 = vector.load %arg1[%c0, %c0_0] : memref<64x52xbf16, #tpu.memory_space<vmem>>, vector<64x52xbf16>
    %c0_1 = arith.constant 0 : index
    %c0_2 = arith.constant 0 : index
    %1 = vector.load %arg2[%c0_1, %c0_2] : memref<52x256xbf16, #tpu.memory_space<vmem>>, vector<52x256xbf16>
    %cst = arith.constant dense<0.000000e+00> : vector<64x256xf32>
    %2 = tpu.matmul %0, %1, %cst {dimension_numbers = #tpu.dot_dimension_numbers<[1], [0], [0], [1], [0, 0, 1, 1], [], []>} : vector<64x52xbf16>, vector<52x256xbf16>, vector<64x256xf32> -> vector<64x256xf32>
    %3 = arith.truncf %2 : vector<64x256xf32> to vector<64x256xbf16>
    %c0_3 = arith.constant 0 : index
    %c0_4 = arith.constant 0 : index
    %4 = vector.load %arg3[%c0_3, %c0_4] : memref<64x256xbf16, #tpu.memory_space<vmem>>, vector<64x256xbf16>
    tpu.vector_store %arg3[%c0_3, %c0_4], %3 {strides = array<i32>} : memref<64x256xbf16, #tpu.memory_space<vmem>>, vector<64x256xbf16>,
    %5 = tpu.iota {dimensions = array<i32: 0>} : vector<8x64xi32>
    %c0_i32 = arith.constant 0 : i32
    %6 = vector.broadcast %c0_i32 : i32 to vector<8x64xi32>
    %7 = arith.cmpi eq, %5, %6 : vector<8x64xi32>
    %8 = arith.extui %7 : vector<8x64xi1> to vector<8x64xi32>
    %9 = arith.sitofp %8 : vector<8x64xi32> to vector<8x64xf32>
    %c1_i32 = arith.constant 1 : i32
    %10 = vector.broadcast %c1_i32 : i32 to vector<8x64xi32>
    %11 = arith.cmpi eq, %5, %10 : vector<8x64xi32>
    %12 = arith.extui %11 : vector<8x64xi1> to vector<8x64xi32>
    %13 = arith.sitofp %12 : vector<8x64xi32> to vector<8x64xf32>
    %cst_5 = arith.constant dense<0.000000e+00> : vector<8x256xf32>
    %14 = tpu.matmul %9, %2, %cst_5 {dimension_numbers = #tpu.dot_dimension_numbers<[1], [0], [0], [1], [0, 0, 1, 1], [], []>} : vector<8x64xf32>, vector<64x256xf32>, vector<8x256xf32> -> vector<8x256xf32>
    %15 = arith.mulf %2, %2 : vector<64x256xf32>
    %cst_6 = arith.constant dense<0.000000e+00> : vector<8x256xf32>
    %16 = tpu.matmul %13, %15, %cst_6 {dimension_numbers = #tpu.dot_dimension_numbers<[1], [0], [0], [1], [0, 0, 1, 1], [], []>} : vector<8x64xf32>, vector<64x256xf32>, vector<8x256xf32> -> vector<8x256xf32>
    %17 = arith.addf %14, %16 : vector<8x256xf32>
    %c0_7 = arith.constant 0 : index
    %c0_8 = arith.constant 0 : index
    %18 = vector.load %arg4[%c0_7, %c0_8] : memref<8x256xf32, #tpu.memory_space<vmem>>, vector<8x256xf32>
    tpu.vector_store %arg4[%c0_7, %c0_8], %17 {strides = array<i32>} : memref<8x256xf32, #tpu.memory_space<vmem>>, vector<8x256xf32>,
    return
  }
  func.func @transform_0(%arg0: i32) -> (i32, i32) {
    %c0_i32 = arith.constant 0 : i32
    %c0_i32_0 = arith.constant 0 : i32
    return %arg0, %c0_i32 : i32, i32
  }
  func.func @transform_1(%arg0: i32) -> (i32, i32) {
    %c0_i32 = arith.constant 0 : i32
    %c0_i32_0 = arith.constant 0 : i32
    %c0_i32_1 = arith.constant 0 : i32
    return %c0_i32, %c0_i32_0 : i32, i32
  }
  func.func @transform_2(%arg0: i32) -> (i32, i32) {
    %c0_i32 = arith.constant 0 : i32
    %c0_i32_0 = arith.constant 0 : i32
    return %arg0, %c0_i32 : i32, i32
  }
  func.func @transform_3(%arg0: i32) -> (i32, i32) {
    %c0_i32 = arith.constant 0 : i32
    %c0_i32_0 = arith.constant 0 : i32
    return %arg0, %c0_i32 : i32, i32
  }
}

module attributes {stable_mosaic.version = 11 : i64} {
  func.func @_bn_act_kernel(%arg0: i32, %arg1: memref<64x128xbf16, #tpu.memory_space<vmem>>, %arg2: memref<1x128xf32, #tpu.memory_space<vmem>>, %arg3: memref<1x128xf32, #tpu.memory_space<vmem>>, %arg4: memref<64x128xbf16, #tpu.memory_space<vmem>>) attributes {dimension_semantics = [#tpu.dimension_semantics<parallel>], iteration_bounds = array<i64: 2>, scalar_prefetch = 0 : i64, scratch_operands = 0 : i64, tpu.core_type = #tpu.core_type<tc>, window_params = [{transform_indices = @transform_0, window_bounds = array<i64: 64, 128>}, {pipeline_mode = #tpu.pipeline_mode<synchronous>, transform_indices = @transform_1, window_bounds = array<i64: 1, 128>}, {pipeline_mode = #tpu.pipeline_mode<synchronous>, transform_indices = @transform_2, window_bounds = array<i64: 1, 128>}, {transform_indices = @transform_3, window_bounds = array<i64: 64, 128>}]} {
    %c0 = arith.constant 0 : index
    %c0_0 = arith.constant 0 : index
    %0 = vector.load %arg1[%c0, %c0_0] : memref<64x128xbf16, #tpu.memory_space<vmem>>, vector<64x128xbf16>
    %1 = arith.extf %0 : vector<64x128xbf16> to vector<64x128xf32>
    %c0_1 = arith.constant 0 : index
    %c0_2 = arith.constant 0 : index
    %2 = vector.load %arg2[%c0_1, %c0_2] : memref<1x128xf32, #tpu.memory_space<vmem>>, vector<1x128xf32>
    %3 = vector.broadcast %2 : vector<1x128xf32> to vector<64x128xf32>
    %4 = arith.mulf %1, %3 : vector<64x128xf32>
    %c0_3 = arith.constant 0 : index
    %c0_4 = arith.constant 0 : index
    %5 = vector.load %arg3[%c0_3, %c0_4] : memref<1x128xf32, #tpu.memory_space<vmem>>, vector<1x128xf32>
    %6 = vector.broadcast %5 : vector<1x128xf32> to vector<64x128xf32>
    %7 = arith.addf %4, %6 : vector<64x128xf32>
    %cst = arith.constant 0.000000e+00 : f32
    %8 = vector.broadcast %cst : f32 to vector<64x128xf32>
    %9 = arith.maximumf %7, %8 : vector<64x128xf32>
    %10 = arith.truncf %9 : vector<64x128xf32> to vector<64x128xbf16>
    %c0_5 = arith.constant 0 : index
    %c0_6 = arith.constant 0 : index
    %11 = vector.load %arg4[%c0_5, %c0_6] : memref<64x128xbf16, #tpu.memory_space<vmem>>, vector<64x128xbf16>
    tpu.vector_store %arg4[%c0_5, %c0_6], %10 {strides = array<i32>} : memref<64x128xbf16, #tpu.memory_space<vmem>>, vector<64x128xbf16>,
    return
  }
  func.func @transform_0(%arg0: i32) -> (i32, i32) {
    %c1_i32 = arith.constant 1 : i32
    %c0_i32 = arith.constant 0 : i32
    return %arg0, %c1_i32 : i32, i32
  }
  func.func @transform_1(%arg0: i32) -> (i32, i32) {
    %c0_i32 = arith.constant 0 : i32
    %c0_i32_0 = arith.constant 0 : i32
    %c0_i32_1 = arith.constant 0 : i32
    return %c0_i32, %c0_i32_0 : i32, i32
  }
  func.func @transform_2(%arg0: i32) -> (i32, i32) {
    %c0_i32 = arith.constant 0 : i32
    %c0_i32_0 = arith.constant 0 : i32
    %c0_i32_1 = arith.constant 0 : i32
    return %c0_i32, %c0_i32_0 : i32, i32
  }
  func.func @transform_3(%arg0: i32) -> (i32, i32) {
    %c0_i32 = arith.constant 0 : i32
    %c0_i32_0 = arith.constant 0 : i32
    return %arg0, %c0_i32 : i32, i32
  }
}

module attributes {stable_mosaic.version = 11 : i64} {
  func.func @_matmul_stats_kernel(%arg0: i32, %arg1: memref<64x144xbf16, #tpu.memory_space<vmem>>, %arg2: memref<144x128xbf16, #tpu.memory_space<vmem>>, %arg3: memref<64x128xbf16, #tpu.memory_space<vmem>>, %arg4: memref<8x128xf32, #tpu.memory_space<vmem>>) attributes {dimension_semantics = [#tpu.dimension_semantics<parallel>], iteration_bounds = array<i64: 2>, scalar_prefetch = 0 : i64, scratch_operands = 0 : i64, tpu.core_type = #tpu.core_type<tc>, window_params = [{transform_indices = @transform_0, window_bounds = array<i64: 64, 144>}, {pipeline_mode = #tpu.pipeline_mode<synchronous>, transform_indices = @transform_1, window_bounds = array<i64: 144, 128>}, {transform_indices = @transform_2, window_bounds = array<i64: 64, 128>}, {transform_indices = @transform_3, window_bounds = array<i64: 8, 128>}]} {
    %c0 = arith.constant 0 : index
    %c0_0 = arith.constant 0 : index
    %0 = vector.load %arg1[%c0, %c0_0] : memref<64x144xbf16, #tpu.memory_space<vmem>>, vector<64x144xbf16>
    %c0_1 = arith.constant 0 : index
    %c0_2 = arith.constant 0 : index
    %1 = vector.load %arg2[%c0_1, %c0_2] : memref<144x128xbf16, #tpu.memory_space<vmem>>, vector<144x128xbf16>
    %cst = arith.constant dense<0.000000e+00> : vector<64x128xf32>
    %2 = tpu.matmul %0, %1, %cst {dimension_numbers = #tpu.dot_dimension_numbers<[1], [0], [0], [1], [0, 0, 1, 1], [], []>} : vector<64x144xbf16>, vector<144x128xbf16>, vector<64x128xf32> -> vector<64x128xf32>
    %3 = arith.truncf %2 : vector<64x128xf32> to vector<64x128xbf16>
    %c0_3 = arith.constant 0 : index
    %c0_4 = arith.constant 0 : index
    %4 = vector.load %arg3[%c0_3, %c0_4] : memref<64x128xbf16, #tpu.memory_space<vmem>>, vector<64x128xbf16>
    tpu.vector_store %arg3[%c0_3, %c0_4], %3 {strides = array<i32>} : memref<64x128xbf16, #tpu.memory_space<vmem>>, vector<64x128xbf16>,
    %5 = tpu.iota {dimensions = array<i32: 0>} : vector<8x64xi32>
    %c0_i32 = arith.constant 0 : i32
    %6 = vector.broadcast %c0_i32 : i32 to vector<8x64xi32>
    %7 = arith.cmpi eq, %5, %6 : vector<8x64xi32>
    %8 = arith.extui %7 : vector<8x64xi1> to vector<8x64xi32>
    %9 = arith.sitofp %8 : vector<8x64xi32> to vector<8x64xf32>
    %c1_i32 = arith.constant 1 : i32
    %10 = vector.broadcast %c1_i32 : i32 to vector<8x64xi32>
    %11 = arith.cmpi eq, %5, %10 : vector<8x64xi32>
    %12 = arith.extui %11 : vector<8x64xi1> to vector<8x64xi32>
    %13 = arith.sitofp %12 : vector<8x64xi32> to vector<8x64xf32>
    %cst_5 = arith.constant dense<0.000000e+00> : vector<8x128xf32>
    %14 = tpu.matmul %9, %2, %cst_5 {dimension_numbers = #tpu.dot_dimension_numbers<[1], [0], [0], [1], [0, 0, 1, 1], [], []>} : vector<8x64xf32>, vector<64x128xf32>, vector<8x128xf32> -> vector<8x128xf32>
    %15 = arith.mulf %2, %2 : vector<64x128xf32>
    %cst_6 = arith.constant dense<0.000000e+00> : vector<8x128xf32>
    %16 = tpu.matmul %13, %15, %cst_6 {dimension_numbers = #tpu.dot_dimension_numbers<[1], [0], [0], [1], [0, 0, 1, 1], [], []>} : vector<8x64xf32>, vector<64x128xf32>, vector<8x128xf32> -> vector<8x128xf32>
    %17 = arith.addf %14, %16 : vector<8x128xf32>
    %c0_7 = arith.constant 0 : index
    %c0_8 = arith.constant 0 : index
    %18 = vector.load %arg4[%c0_7, %c0_8] : memref<8x128xf32, #tpu.memory_space<vmem>>, vector<8x128xf32>
    tpu.vector_store %arg4[%c0_7, %c0_8], %17 {strides = array<i32>} : memref<8x128xf32, #tpu.memory_space<vmem>>, vector<8x128xf32>,
    return
  }
  func.func @transform_0(%arg0: i32) -> (i32, i32) {
    %c0_i32 = arith.constant 0 : i32
    %c0_i32_0 = arith.constant 0 : i32
    return %arg0, %c0_i32 : i32, i32
  }
  func.func @transform_1(%arg0: i32) -> (i32, i32) {
    %c0_i32 = arith.constant 0 : i32
    %c0_i32_0 = arith.constant 0 : i32
    %c0_i32_1 = arith.constant 0 : i32
    return %c0_i32, %c0_i32_0 : i32, i32
  }
  func.func @transform_2(%arg0: i32) -> (i32, i32) {
    %c0_i32 = arith.constant 0 : i32
    %c0_i32_0 = arith.constant 0 : i32
    return %arg0, %c0_i32 : i32, i32
  }
  func.func @transform_3(%arg0: i32) -> (i32, i32) {
    %c0_i32 = arith.constant 0 : i32
    %c0_i32_0 = arith.constant 0 : i32
    return %arg0, %c0_i32 : i32, i32
  }
}

module attributes {stable_mosaic.version = 11 : i64} {
  func.func @_bn_act_kernel(%arg0: i32, %arg1: memref<64x128xbf16, #tpu.memory_space<vmem>>, %arg2: memref<1x128xf32, #tpu.memory_space<vmem>>, %arg3: memref<1x128xf32, #tpu.memory_space<vmem>>, %arg4: memref<64x128xbf16, #tpu.memory_space<vmem>>) attributes {dimension_semantics = [#tpu.dimension_semantics<parallel>], iteration_bounds = array<i64: 2>, scalar_prefetch = 0 : i64, scratch_operands = 0 : i64, tpu.core_type = #tpu.core_type<tc>, window_params = [{transform_indices = @transform_0, window_bounds = array<i64: 64, 128>}, {pipeline_mode = #tpu.pipeline_mode<synchronous>, transform_indices = @transform_1, window_bounds = array<i64: 1, 128>}, {pipeline_mode = #tpu.pipeline_mode<synchronous>, transform_indices = @transform_2, window_bounds = array<i64: 1, 128>}, {transform_indices = @transform_3, window_bounds = array<i64: 64, 128>}]} {
    %c0 = arith.constant 0 : index
    %c0_0 = arith.constant 0 : index
    %0 = vector.load %arg1[%c0, %c0_0] : memref<64x128xbf16, #tpu.memory_space<vmem>>, vector<64x128xbf16>
    %1 = arith.extf %0 : vector<64x128xbf16> to vector<64x128xf32>
    %c0_1 = arith.constant 0 : index
    %c0_2 = arith.constant 0 : index
    %2 = vector.load %arg2[%c0_1, %c0_2] : memref<1x128xf32, #tpu.memory_space<vmem>>, vector<1x128xf32>
    %3 = vector.broadcast %2 : vector<1x128xf32> to vector<64x128xf32>
    %4 = arith.mulf %1, %3 : vector<64x128xf32>
    %c0_3 = arith.constant 0 : index
    %c0_4 = arith.constant 0 : index
    %5 = vector.load %arg3[%c0_3, %c0_4] : memref<1x128xf32, #tpu.memory_space<vmem>>, vector<1x128xf32>
    %6 = vector.broadcast %5 : vector<1x128xf32> to vector<64x128xf32>
    %7 = arith.addf %4, %6 : vector<64x128xf32>
    %cst = arith.constant 0.000000e+00 : f32
    %8 = vector.broadcast %cst : f32 to vector<64x128xf32>
    %9 = arith.maximumf %7, %8 : vector<64x128xf32>
    %10 = arith.truncf %9 : vector<64x128xf32> to vector<64x128xbf16>
    %c0_5 = arith.constant 0 : index
    %c0_6 = arith.constant 0 : index
    %11 = vector.load %arg4[%c0_5, %c0_6] : memref<64x128xbf16, #tpu.memory_space<vmem>>, vector<64x128xbf16>
    tpu.vector_store %arg4[%c0_5, %c0_6], %10 {strides = array<i32>} : memref<64x128xbf16, #tpu.memory_space<vmem>>, vector<64x128xbf16>,
    return
  }
  func.func @transform_0(%arg0: i32) -> (i32, i32) {
    %c0_i32 = arith.constant 0 : i32
    %c0_i32_0 = arith.constant 0 : i32
    return %arg0, %c0_i32 : i32, i32
  }
  func.func @transform_1(%arg0: i32) -> (i32, i32) {
    %c0_i32 = arith.constant 0 : i32
    %c0_i32_0 = arith.constant 0 : i32
    %c0_i32_1 = arith.constant 0 : i32
    return %c0_i32, %c0_i32_0 : i32, i32
  }
  func.func @transform_2(%arg0: i32) -> (i32, i32) {
    %c0_i32 = arith.constant 0 : i32
    %c0_i32_0 = arith.constant 0 : i32
    %c0_i32_1 = arith.constant 0 : i32
    return %c0_i32, %c0_i32_0 : i32, i32
  }
  func.func @transform_3(%arg0: i32) -> (i32, i32) {
    %c0_i32 = arith.constant 0 : i32
    %c0_i32_0 = arith.constant 0 : i32
    return %arg0, %c0_i32 : i32, i32
  }
}

module attributes {stable_mosaic.version = 11 : i64} {
  func.func @_matmul_stats_kernel(%arg0: i32, %arg1: memref<64x72xbf16, #tpu.memory_space<vmem>>, %arg2: memref<72x128xbf16, #tpu.memory_space<vmem>>, %arg3: memref<64x128xbf16, #tpu.memory_space<vmem>>, %arg4: memref<8x128xf32, #tpu.memory_space<vmem>>) attributes {dimension_semantics = [#tpu.dimension_semantics<parallel>], iteration_bounds = array<i64: 2>, scalar_prefetch = 0 : i64, scratch_operands = 0 : i64, tpu.core_type = #tpu.core_type<tc>, window_params = [{transform_indices = @transform_0, window_bounds = array<i64: 64, 72>}, {pipeline_mode = #tpu.pipeline_mode<synchronous>, transform_indices = @transform_1, window_bounds = array<i64: 72, 128>}, {transform_indices = @transform_2, window_bounds = array<i64: 64, 128>}, {transform_indices = @transform_3, window_bounds = array<i64: 8, 128>}]} {
    %c0 = arith.constant 0 : index
    %c0_0 = arith.constant 0 : index
    %0 = vector.load %arg1[%c0, %c0_0] : memref<64x72xbf16, #tpu.memory_space<vmem>>, vector<64x72xbf16>
    %c0_1 = arith.constant 0 : index
    %c0_2 = arith.constant 0 : index
    %1 = vector.load %arg2[%c0_1, %c0_2] : memref<72x128xbf16, #tpu.memory_space<vmem>>, vector<72x128xbf16>
    %cst = arith.constant dense<0.000000e+00> : vector<64x128xf32>
    %2 = tpu.matmul %0, %1, %cst {dimension_numbers = #tpu.dot_dimension_numbers<[1], [0], [0], [1], [0, 0, 1, 1], [], []>} : vector<64x72xbf16>, vector<72x128xbf16>, vector<64x128xf32> -> vector<64x128xf32>
    %3 = arith.truncf %2 : vector<64x128xf32> to vector<64x128xbf16>
    %c0_3 = arith.constant 0 : index
    %c0_4 = arith.constant 0 : index
    %4 = vector.load %arg3[%c0_3, %c0_4] : memref<64x128xbf16, #tpu.memory_space<vmem>>, vector<64x128xbf16>
    tpu.vector_store %arg3[%c0_3, %c0_4], %3 {strides = array<i32>} : memref<64x128xbf16, #tpu.memory_space<vmem>>, vector<64x128xbf16>,
    %5 = tpu.iota {dimensions = array<i32: 0>} : vector<8x64xi32>
    %c0_i32 = arith.constant 0 : i32
    %6 = vector.broadcast %c0_i32 : i32 to vector<8x64xi32>
    %7 = arith.cmpi eq, %5, %6 : vector<8x64xi32>
    %8 = arith.extui %7 : vector<8x64xi1> to vector<8x64xi32>
    %9 = arith.sitofp %8 : vector<8x64xi32> to vector<8x64xf32>
    %c1_i32 = arith.constant 1 : i32
    %10 = vector.broadcast %c1_i32 : i32 to vector<8x64xi32>
    %11 = arith.cmpi eq, %5, %10 : vector<8x64xi32>
    %12 = arith.extui %11 : vector<8x64xi1> to vector<8x64xi32>
    %13 = arith.sitofp %12 : vector<8x64xi32> to vector<8x64xf32>
    %cst_5 = arith.constant dense<0.000000e+00> : vector<8x128xf32>
    %14 = tpu.matmul %9, %2, %cst_5 {dimension_numbers = #tpu.dot_dimension_numbers<[1], [0], [0], [1], [0, 0, 1, 1], [], []>} : vector<8x64xf32>, vector<64x128xf32>, vector<8x128xf32> -> vector<8x128xf32>
    %15 = arith.mulf %2, %2 : vector<64x128xf32>
    %cst_6 = arith.constant dense<0.000000e+00> : vector<8x128xf32>
    %16 = tpu.matmul %13, %15, %cst_6 {dimension_numbers = #tpu.dot_dimension_numbers<[1], [0], [0], [1], [0, 0, 1, 1], [], []>} : vector<8x64xf32>, vector<64x128xf32>, vector<8x128xf32> -> vector<8x128xf32>
    %17 = arith.addf %14, %16 : vector<8x128xf32>
    %c0_7 = arith.constant 0 : index
    %c0_8 = arith.constant 0 : index
    %18 = vector.load %arg4[%c0_7, %c0_8] : memref<8x128xf32, #tpu.memory_space<vmem>>, vector<8x128xf32>
    tpu.vector_store %arg4[%c0_7, %c0_8], %17 {strides = array<i32>} : memref<8x128xf32, #tpu.memory_space<vmem>>, vector<8x128xf32>,
    return
  }
  func.func @transform_0(%arg0: i32) -> (i32, i32) {
    %c0_i32 = arith.constant 0 : i32
    %c0_i32_0 = arith.constant 0 : i32
    return %arg0, %c0_i32 : i32, i32
  }
  func.func @transform_1(%arg0: i32) -> (i32, i32) {
    %c0_i32 = arith.constant 0 : i32
    %c0_i32_0 = arith.constant 0 : i32
    %c0_i32_1 = arith.constant 0 : i32
    return %c0_i32, %c0_i32_0 : i32, i32
  }
  func.func @transform_2(%arg0: i32) -> (i32, i32) {
    %c0_i32 = arith.constant 0 : i32
    %c0_i32_0 = arith.constant 0 : i32
    return %arg0, %c0_i32 : i32, i32
  }
  func.func @transform_3(%arg0: i32) -> (i32, i32) {
    %c0_i32 = arith.constant 0 : i32
    %c0_i32_0 = arith.constant 0 : i32
    return %arg0, %c0_i32 : i32, i32
  }
}

module attributes {stable_mosaic.version = 11 : i64} {
  func.func @_bn_act_kernel(%arg0: i32, %arg1: memref<64x128xbf16, #tpu.memory_space<vmem>>, %arg2: memref<1x128xf32, #tpu.memory_space<vmem>>, %arg3: memref<1x128xf32, #tpu.memory_space<vmem>>, %arg4: memref<64x128xbf16, #tpu.memory_space<vmem>>, %arg5: memref<1x128xf32, #tpu.memory_space<vmem>>, %arg6: memref<1x128xf32, #tpu.memory_space<vmem>>, %arg7: memref<64x128xf32, #tpu.memory_space<vmem>>) attributes {dimension_semantics = [#tpu.dimension_semantics<parallel>], iteration_bounds = array<i64: 2>, scalar_prefetch = 0 : i64, scratch_operands = 0 : i64, tpu.core_type = #tpu.core_type<tc>, window_params = [{transform_indices = @transform_0, window_bounds = array<i64: 64, 128>}, {pipeline_mode = #tpu.pipeline_mode<synchronous>, transform_indices = @transform_1, window_bounds = array<i64: 1, 128>}, {pipeline_mode = #tpu.pipeline_mode<synchronous>, transform_indices = @transform_2, window_bounds = array<i64: 1, 128>}, {transform_indices = @transform_3, window_bounds = array<i64: 64, 128>}, {pipeline_mode = #tpu.pipeline_mode<synchronous>, transform_indices = @transform_4, window_bounds = array<i64: 1, 128>}, {pipeline_mode = #tpu.pipeline_mode<synchronous>, transform_indices = @transform_5, window_bounds = array<i64: 1, 128>}, {transform_indices = @transform_6, window_bounds = array<i64: 64, 128>}]} {
    %c0 = arith.constant 0 : index
    %c0_0 = arith.constant 0 : index
    %0 = vector.load %arg1[%c0, %c0_0] : memref<64x128xbf16, #tpu.memory_space<vmem>>, vector<64x128xbf16>
    %1 = arith.extf %0 : vector<64x128xbf16> to vector<64x128xf32>
    %c0_1 = arith.constant 0 : index
    %c0_2 = arith.constant 0 : index
    %2 = vector.load %arg2[%c0_1, %c0_2] : memref<1x128xf32, #tpu.memory_space<vmem>>, vector<1x128xf32>
    %3 = vector.broadcast %2 : vector<1x128xf32> to vector<64x128xf32>
    %4 = arith.mulf %1, %3 : vector<64x128xf32>
    %c0_3 = arith.constant 0 : index
    %c0_4 = arith.constant 0 : index
    %5 = vector.load %arg3[%c0_3, %c0_4] : memref<1x128xf32, #tpu.memory_space<vmem>>, vector<1x128xf32>
    %6 = vector.broadcast %5 : vector<1x128xf32> to vector<64x128xf32>
    %7 = arith.addf %4, %6 : vector<64x128xf32>
    %cst = arith.constant 0.000000e+00 : f32
    %8 = vector.broadcast %cst : f32 to vector<64x128xf32>
    %9 = arith.maximumf %7, %8 : vector<64x128xf32>
    %c0_5 = arith.constant 0 : index
    %c0_6 = arith.constant 0 : index
    %10 = vector.load %arg4[%c0_5, %c0_6] : memref<64x128xbf16, #tpu.memory_space<vmem>>, vector<64x128xbf16>
    %11 = arith.extf %10 : vector<64x128xbf16> to vector<64x128xf32>
    %c0_7 = arith.constant 0 : index
    %c0_8 = arith.constant 0 : index
    %12 = vector.load %arg5[%c0_7, %c0_8] : memref<1x128xf32, #tpu.memory_space<vmem>>, vector<1x128xf32>
    %13 = vector.broadcast %12 : vector<1x128xf32> to vector<64x128xf32>
    %14 = arith.mulf %11, %13 : vector<64x128xf32>
    %c0_9 = arith.constant 0 : index
    %c0_10 = arith.constant 0 : index
    %15 = vector.load %arg6[%c0_9, %c0_10] : memref<1x128xf32, #tpu.memory_space<vmem>>, vector<1x128xf32>
    %16 = vector.broadcast %15 : vector<1x128xf32> to vector<64x128xf32>
    %17 = arith.addf %14, %16 : vector<64x128xf32>
    %18 = arith.addf %9, %17 : vector<64x128xf32>
    %cst_11 = arith.constant 0.000000e+00 : f32
    %19 = vector.broadcast %cst_11 : f32 to vector<64x128xf32>
    %20 = arith.maximumf %18, %19 : vector<64x128xf32>
    %c0_12 = arith.constant 0 : index
    %c0_13 = arith.constant 0 : index
    %21 = vector.load %arg7[%c0_12, %c0_13] : memref<64x128xf32, #tpu.memory_space<vmem>>, vector<64x128xf32>
    tpu.vector_store %arg7[%c0_12, %c0_13], %20 {strides = array<i32>} : memref<64x128xf32, #tpu.memory_space<vmem>>, vector<64x128xf32>,
    return
  }
  func.func @transform_0(%arg0: i32) -> (i32, i32) {
    %c0_i32 = arith.constant 0 : i32
    %c0_i32_0 = arith.constant 0 : i32
    return %arg0, %c0_i32 : i32, i32
  }
  func.func @transform_1(%arg0: i32) -> (i32, i32) {
    %c0_i32 = arith.constant 0 : i32
    %c0_i32_0 = arith.constant 0 : i32
    %c0_i32_1 = arith.constant 0 : i32
    return %c0_i32, %c0_i32_0 : i32, i32
  }
  func.func @transform_2(%arg0: i32) -> (i32, i32) {
    %c0_i32 = arith.constant 0 : i32
    %c0_i32_0 = arith.constant 0 : i32
    %c0_i32_1 = arith.constant 0 : i32
    return %c0_i32, %c0_i32_0 : i32, i32
  }
  func.func @transform_3(%arg0: i32) -> (i32, i32) {
    %c0_i32 = arith.constant 0 : i32
    %c0_i32_0 = arith.constant 0 : i32
    return %arg0, %c0_i32 : i32, i32
  }
  func.func @transform_4(%arg0: i32) -> (i32, i32) {
    %c0_i32 = arith.constant 0 : i32
    %c0_i32_0 = arith.constant 0 : i32
    %c0_i32_1 = arith.constant 0 : i32
    return %c0_i32, %c0_i32_0 : i32, i32
  }
  func.func @transform_5(%arg0: i32) -> (i32, i32) {
    %c0_i32 = arith.constant 0 : i32
    %c0_i32_0 = arith.constant 0 : i32
    %c0_i32_1 = arith.constant 0 : i32
    return %c0_i32, %c0_i32_0 : i32, i32
  }
  func.func @transform_6(%arg0: i32) -> (i32, i32) {
    %c0_i32 = arith.constant 0 : i32
    %c0_i32_0 = arith.constant 0 : i32
    return %arg0, %c0_i32 : i32, i32
  }
}

</mosaic_0001>

<llo_original>
// kernel: pallas_forward.7
$region0: #{pallas_forward.7}
  #allocation0 [shape = 'u32[]', space=smem, size = 0x4, offset = 0x4, fixed_abs, tag = 'smem constant byte address 0x4 - core index']
  #allocation1 [shape = 'u32[144,128]{1,0:T(1,128)}', space=vmem, size = 0x12000, scoped, tag = 'internal scratch']
  %s0 = inlined_call_operand.vmem [shape: bf16[128,256], index: 0, kind: input, shape index: {}]
  %s1 = inlined_call_operand.vmem [shape: f32[1,128], index: 1, kind: input, shape index: {}]
  %s2 = inlined_call_operand.vmem [shape: f32[1,128], index: 2, kind: input, shape index: {}]
  %s3 = inlined_call_operand.vmem [shape: bf16[128,128], index: 3, kind: output, shape index: {}]
  %s4 = sld [smem:[#allocation0]]
  $region86: #{pallas_forward.7} parent=0
    _
  %s6 = ssub.s32 1, %s4
  %s7 = scalar_select 0, %s6, %s4
  $region1: #{pallas_forward.7} parent=0
    #allocation2 [shape = 'u8[32768]{0}', space=vmem, size = 0x8000, scoped, tag = 'input window, operand 0']
    loop: start=0, step=1, limit=4
    $region2: #{pallas_forward.7} parent=1 // loop_pre_header
      _
    $region3: #{pallas_forward.7} parent=1 // loop_header
      %s9 = sphi 0, %s13
      %p10 = scmp.ge.s32.totalorder %s9, 4
      %s19 = sphi 0, %s21
      %s22 = sphi 0, %s19
      %s23 = sphi 0, %s22
      %s39 = sphi 0, %s23
      %s43 = sphi 0, %s43
      %s45 = sphi 0, %s43
      %s46 = sphi 0, %s45
      %s60 = sphi 0, %s46
      %s64 = sphi 0, %s64
      %s66 = sphi 0, %s64
      %s67 = sphi 0, %s66
      %s81 = sphi 0, %s67
      %s87 = sphi 0, %s89
      %s90 = sphi 0, %s87
      %s91 = sphi 0, %s90
      %s107 = sphi 0, %s91
    $region4: #{pallas_forward.7} parent=1 // loop_header_branch
      %12 = sbr.rel (%p10) target = $region8
    $region5: #{pallas_forward.7} parent=1 // loop_body
      %s14 = ssub.s32 %s9, 1
      %s15 = ssub.s32 %s9, 2
      %s16 = sadd.s32 %s9, 1
      %s17 = ssub.s32 %s9, %s16
      %p18 = scmp.eq.s32.totalorder %s17, 0
      %s20 = sadd.s32 %s19, 1
      %s21 = scalar_select %p18, %s19, %s20
      %p24 = pneg %p18
      %p25 = scmp.eq.s32.totalorder %s9, 1
      %p26 = por %p24, %p25
      %p27 = scmp.ne.s32.totalorder %s19, %s22
      %p28 = scmp.eq.s32.totalorder %s9, 0
      %p29 = por %p27, %p28
      %p30 = scmp.ne.s32.totalorder %s19, %s22
      %p31 = scmp.eq.s32.totalorder %s14, 1
      %p32 = por %p30, %p31
      %p33 = scmp.ne.s32.totalorder %s22, %s23
      %p34 = scmp.eq.s32.totalorder %s14, 0
      %p35 = por %p33, %p34
      %p36 = scmp.ne.s32.totalorder %s22, %s23
      %p37 = scmp.eq.s32.totalorder %s15, 1
      %p38 = por %p36, %p37
      %p40 = scmp.ne.s32.totalorder %s23, %s39
      %p41 = scmp.eq.s32.totalorder %s15, 0
      %p42 = por %p40, %p41
      %s44 = sadd.s32 %s43, 1
      %p47 = scmp.eq.s32.totalorder %s9, 1
      %p48 = scmp.ne.s32.totalorder %s43, %s45
      %p49 = scmp.eq.s32.totalorder %s9, 0
      %p50 = por %p48, %p49
      %p51 = scmp.ne.s32.totalorder %s43, %s45
      %p52 = scmp.eq.s32.totalorder %s14, 1
      %p53 = por %p51, %p52
      %p54 = scmp.ne.s32.totalorder %s45, %s46
      %p55 = scmp.eq.s32.totalorder %s14, 0
      %p56 = por %p54, %p55
      %p57 = scmp.ne.s32.totalorder %s45, %s46
      %p58 = scmp.eq.s32.totalorder %s15, 1
      %p59 = por %p57, %p58
      %p61 = scmp.ne.s32.totalorder %s46, %s60
      %p62 = scmp.eq.s32.totalorder %s15, 0
      %p63 = por %p61, %p62
      %s65 = sadd.s32 %s64, 1
      %p68 = scmp.eq.s32.totalorder %s9, 1
      %p69 = scmp.ne.s32.totalorder %s64, %s66
      %p70 = scmp.eq.s32.totalorder %s9, 0
      %p71 = por %p69, %p70
      %p72 = scmp.ne.s32.totalorder %s64, %s66
      %p73 = scmp.eq.s32.totalorder %s14, 1
      %p74 = por %p72, %p73
      %p75 = scmp.ne.s32.totalorder %s66, %s67
      %p76 = scmp.eq.s32.totalorder %s14, 0
      %p77 = por %p75, %p76
      %p78 = scmp.ne.s32.totalorder %s66, %s67
      %p79 = scmp.eq.s32.totalorder %s15, 1
      %p80 = por %p78, %p79
      %p82 = scmp.ne.s32.totalorder %s67, %s81
      %p83 = scmp.eq.s32.totalorder %s15, 0
      %p84 = por %p82, %p83
      %s85 = ssub.s32 %s9, %s16
      %p86 = scmp.eq.s32.totalorder %s85, 0
      %s88 = sadd.s32 %s87, 1
      %s89 = scalar_select %p86, %s87, %s88
      %p92 = pneg %p86
      %p93 = scmp.eq.s32.totalorder %s9, 1
      %p94 = por %p92, %p93
      %p95 = scmp.ne.s32.totalorder %s87, %s90
      %p96 = scmp.eq.s32.totalorder %s9, 0
      %p97 = por %p95, %p96
      %p98 = scmp.ne.s32.totalorder %s87, %s90
      %p99 = scmp.eq.s32.totalorder %s14, 1
      %p100 = por %p98, %p99
      %p101 = scmp.ne.s32.totalorder %s90, %s91
      %p102 = scmp.eq.s32.totalorder %s14, 0
      %p103 = por %p101, %p102
      %p104 = scmp.ne.s32.totalorder %s90, %s91
      %p105 = scmp.eq.s32.totalorder %s15, 1
      %p106 = por %p104, %p105
      %p108 = scmp.ne.s32.totalorder %s91, %s107
      %p109 = scmp.eq.s32.totalorder %s15, 0
      %p110 = por %p108, %p109
      %p111 = scmp.le.s32.totalorder 1, %s9
      %p112 = scmp.lt.s32.totalorder %s9, 3
      %p113 = pnand %p111, %p112
      %p114 = pneg %p113
      // Predicated region
      $region9: #{pallas_forward.7} parent=5 // pred_check
        _
      $region10: #{pallas_forward.7} parent=5 // pred_check_branch
        %116 = sbr.rel (%p113) target = $region12
      $region11: #{pallas_forward.7} parent=5 // pred_region
        %s117 = ssub.s32 %s9, 1
        // Predicated region
        $region13: #{pallas_forward.7} parent=11 // pred_check
          %p118 = pneg %p56
        $region14: #{pallas_forward.7} parent=11 // pred_check_branch
          %120 = sbr.rel (%p118) target = $region16
        $region15: #{pallas_forward.7} parent=11 // pred_region
          _
        $region16: #{pallas_forward.7} parent=11 // pred_fallthru
          _
        // Predicated region
        $region17: #{pallas_forward.7} parent=11 // pred_check
          %p121 = pneg %p77
        $region18: #{pallas_forward.7} parent=11 // pred_check_branch
          %123 = sbr.rel (%p121) target = $region20
        $region19: #{pallas_forward.7} parent=11 // pred_region
          _
        $region20: #{pallas_forward.7} parent=11 // pred_fallthru
          _
      $region12: #{pallas_forward.7} parent=5 // pred_fallthru
        _
      %p124 = scmp.lt.s32.totalorder %s9, 2
      // Predicated region
      $region21: #{pallas_forward.7} parent=5 // pred_check
        %p125 = pneg %p124
      $region22: #{pallas_forward.7} parent=5 // pred_check_branch
        %127 = sbr.rel (%p125) target = $region24
      $region23: #{pallas_forward.7} parent=5 // pred_region
        // Predicated region
        $region25: #{pallas_forward.7} parent=23 // pred_check
          %p128 = pneg %p29
        $region26: #{pallas_forward.7} parent=23 // pred_check_branch
          %130 = sbr.rel (%p128) target = $region28
        $region27: #{pallas_forward.7} parent=23 // pred_region
          %s131 = sand.u32 %s19, 1
          %s132 = sand.u32 %s19, 1
          %s133 = smul.addr %s132, 32
          %s134 = scalar_lea.vmem [#allocation2], %s133
          %s135 = smul.u32 8, %s9
          %s136 = smul.addr %s135, 2
          %s137 = sadd.s32 1, %s136
          %s138 = smul.addr %s137, 4
          %s139 = scalar_lea.vmem %s0, %s138
          // Predicated region
          $region29: #{pallas_forward.7} parent=27 // pred_check
            _
          $region30: #{pallas_forward.7} parent=27 // pred_check_branch
            %141 = sbr.rel (0) target = $region32
          $region31: #{pallas_forward.7} parent=27 // pred_region
            // Predicated region
            $region33: #{pallas_forward.7} parent=31 // pred_check
              _
            $region34: #{pallas_forward.7} parent=31 // pred_check_branch
              %143 = sbr.rel target = $region36
            $region35: #{pallas_forward.7} parent=31 // pred_region
              // Predicated region
              $region48: #{pallas_forward.7} parent=35 // pred_check
                _
              $region49: #{pallas_forward.7} parent=35 // pred_check_branch
                %173 = sbr.rel (0) target = $region51
              $region50: #{pallas_forward.7} parent=35 // pred_region
                loop: start=0, step=1, limit=1
                $region52: #{pallas_forward.7} parent=50 // loop_pre_header
                  _
                $region53: #{pallas_forward.7} parent=50 // loop_header
                  %s175 = sphi 0, %s179
                  %p176 = scmp.ge.s32.totalorder %s175, 1
                  %s180 = sphi %s139, %s139
                  %s181 = sphi %s134, %s134
                $region54: #{pallas_forward.7} parent=50 // loop_header_branch
                  %178 = sbr.rel (%p176) target = $region58
                $region55: #{pallas_forward.7} parent=50 // loop_body
                  _
                $region56: #{pallas_forward.7} parent=50 // loop_footer
                  %s179 = sadd.s32 1, %s175
                $region57: #{pallas_forward.7} parent=50 // loop_footer_branch
                  %174 = sbr.rel target = $region53
                $region58: #{pallas_forward.7} parent=50 // loop_exit
                  _
                %s183 = ssub.s32 16, 1
                loop: start=0, step=1, limit=1
                $region59: #{pallas_forward.7} parent=50 // loop_pre_header
                  _
                $region60: #{pallas_forward.7} parent=50 // loop_header
                  %s185 = sphi 0, %s189
                  %p186 = scmp.ge.s32.totalorder %s185, 1
                  %s190 = sphi %s139, %s139
                  %s191 = sphi %s134, %s134
                $region61: #{pallas_forward.7} parent=50 // loop_header_branch
                  %188 = sbr.rel (%p186) target = $region65
                $region62: #{pallas_forward.7} parent=50 // loop_body
                  %v192 = vld [vmem:[%s190] sm:%s183]
                  %193 = vst [vmem:[%s191] sm:%s183] %v192
                  %v194 = vld [vmem:[%s190 + $0x8] sm:%s183]
                  %195 = vst [vmem:[%s191 + $0x4] sm:%s183] %v194
                  %v196 = vld [vmem:[%s190 + $0x10] sm:%s183]
                  %197 = vst [vmem:[%s191 + $0x8] sm:%s183] %v196
                  %v198 = vld [vmem:[%s190 + $0x18] sm:%s183]
                  %199 = vst [vmem:[%s191 + $0xc] sm:%s183] %v198
                  %v200 = vld [vmem:[%s190 + $0x20] sm:%s183]
                  %201 = vst [vmem:[%s191 + $0x10] sm:%s183] %v200
                  %v202 = vld [vmem:[%s190 + $0x28] sm:%s183]
                  %203 = vst [vmem:[%s191 + $0x14] sm:%s183] %v202
                  %v204 = vld [vmem:[%s190 + $0x30] sm:%s183]
                  %205 = vst [vmem:[%s191 + $0x18] sm:%s183] %v204
                  %v206 = vld [vmem:[%s190 + $0x38] sm:%s183]
                  %207 = vst [vmem:[%s191 + $0x1c] sm:%s183] %v206
                $region63: #{pallas_forward.7} parent=50 // loop_footer
                  %s189 = sadd.s32 1, %s185
                $region64: #{pallas_forward.7} parent=50 // loop_footer_branch
                  %184 = sbr.rel target = $region60
                $region65: #{pallas_forward.7} parent=50 // loop_exit
                  _
              $region51: #{pallas_forward.7} parent=35 // pred_fallthru
                _
            $region36: #{pallas_forward.7} parent=31 // pred_fallthru
              _
            // Predicated region
            $region37: #{pallas_forward.7} parent=31 // pred_check
              _
            $region38: #{pallas_forward.7} parent=31 // pred_check_branch
              %145 = sbr.rel (0) target = $region40
            $region39: #{pallas_forward.7} parent=31 // pred_region
              %s147 = ssub.s32 16, 1
              loop: start=0, step=1, limit=1
              $region41: #{pallas_forward.7} parent=39 // loop_pre_header
                _
              $region42: #{pallas_forward.7} parent=39 // loop_header
                %s149 = sphi 0, %s153
                %p150 = scmp.ge.s32.totalorder %s149, 1
                %s154 = sphi %s139, %s139
                %s155 = sphi %s134, %s134
              $region43: #{pallas_forward.7} parent=39 // loop_header_branch
                %152 = sbr.rel (%p150) target = $region47
              $region44: #{pallas_forward.7} parent=39 // loop_body
                %v156 = vld [vmem:[%s154] sm:%s147]
                %157 = vst [vmem:[%s155] sm:%s147] %v156
                %v158 = vld [vmem:[%s154 + $0x8] sm:%s147]
                %159 = vst [vmem:[%s155 + $0x4] sm:%s147] %v158
                %v160 = vld [vmem:[%s154 + $0x10] sm:%s147]
                %161 = vst [vmem:[%s155 + $0x8] sm:%s147] %v160
                %v162 = vld [vmem:[%s154 + $0x18] sm:%s147]
                %163 = vst [vmem:[%s155 + $0xc] sm:%s147] %v162
                %v164 = vld [vmem:[%s154 + $0x20] sm:%s147]
                %165 = vst [vmem:[%s155 + $0x10] sm:%s147] %v164
                %v166 = vld [vmem:[%s154 + $0x28] sm:%s147]
                %167 = vst [vmem:[%s155 + $0x14] sm:%s147] %v166
                %v168 = vld [vmem:[%s154 + $0x30] sm:%s147]
                %169 = vst [vmem:[%s155 + $0x18] sm:%s147] %v168
                %v170 = vld [vmem:[%s154 + $0x38] sm:%s147]
                %171 = vst [vmem:[%s155 + $0x1c] sm:%s147] %v170
              $region45: #{pallas_forward.7} parent=39 // loop_footer
                %s153 = sadd.s32 1, %s149
              $region46: #{pallas_forward.7} parent=39 // loop_footer_branch
                %148 = sbr.rel target = $region42
              $region47: #{pallas_forward.7} parent=39 // loop_exit
                _
            $region40: #{pallas_forward.7} parent=31 // pred_fallthru
              _
          $region32: #{pallas_forward.7} parent=27 // pred_fallthru
            _
          %208 = vnop
        $region28: #{pallas_forward.7} parent=23 // pred_fallthru
          _
      $region24: #{pallas_forward.7} parent=5 // pred_fallthru
        _
      %p209 = scmp.le.s32.totalorder 1, %s9
      %p210 = scmp.lt.s32.totalorder %s9, 3
      %p211 = pnand %p209, %p210
      %p212 = pneg %p211
      // Predicated region
      $region66: #{pallas_forward.7} parent=5 // pred_check
        _
      $region67: #{pallas_forward.7} parent=5 // pred_check_branch
        %214 = sbr.rel (%p211) target = $region69
      $region68: #{pallas_forward.7} parent=5 // pred_region
        %s215 = ssub.s32 %s9, 1
        %s216 = sand.u32 %s22, 1
        %s217 = sand.u32 %s22, 1
        %s218 = smul.addr %s217, 32
        %s219 = scalar_lea.vmem [#allocation2], %s218
        // Predicated region
        $region70: #{pallas_forward.7} parent=68 // pred_check
          %p220 = pneg %p35
        $region71: #{pallas_forward.7} parent=68 // pred_check_branch
          %222 = sbr.rel (%p220) target = $region73
        $region72: #{pallas_forward.7} parent=68 // pred_region
          _
        $region73: #{pallas_forward.7} parent=68 // pred_fallthru
          _
        %s223 = sand.u32 %s22, 1
        %s224 = sand.u32 %s22, 1
        %s225 = smul.addr %s224, 32
        %s226 = scalar_lea.vmem [#allocation2], %s225
        %p227 = pneg %p35
        %p228 = pneg %p32
        %p229 = pneg %p56
        %p230 = pneg %p53
        %p231 = pneg %p77
        %p232 = pneg %p74
        %p233 = pneg %p103
        %p234 = pneg %p100
        %s235 = smul.u32 8, %s14
        %p236 = scmp.lt.s32.totalorder %s235, 15
        %s237 = scalar_select %p236, %s235, 15
        %s238 = smul.addr %s237, 4
        %s239 = scalar_lea.vmem %s3, %s238
        %s240 = smul.u32 8, %s14
        %s241 = smul.u32 8, %s14
        %p242 = scmp.lt.s32.totalorder %s241, 15
        %s243 = scalar_select %p242, %s241, 15
        %s244 = smul.addr %s243, 4
        %s245 = scalar_lea.vmem %s3, %s244
        %s246 = smul.u32 8, %s14
        %v247 = vld [vmem:[%s219] sm:$0xf]
        %v248 = vld [vmem:[%s219 + $0x4] sm:$0xf]
        %v249 = vld [vmem:[%s219 + $0x8] sm:$0xf]
        %v250 = vld [vmem:[%s219 + $0xc] sm:$0xf]
        %v251 = vld [vmem:[%s219 + $0x10] sm:$0xf]
        %v252 = vld [vmem:[%s219 + $0x14] sm:$0xf]
        %v253 = vld [vmem:[%s219 + $0x18] sm:$0xf]
        %v254 = vld [vmem:[%s219 + $0x1c] sm:$0xf]
        %v255 = vunpack.c.l.bf16 %v247
        %v256 = vunpack.c.l.bf16 %v248
        %v257 = vunpack.c.l.bf16 %v249
        %v258 = vunpack.c.l.bf16 %v250
        %v259 = vunpack.c.l.bf16 %v251
        %v260 = vunpack.c.l.bf16 %v252
        %v261 = vunpack.c.l.bf16 %v253
        %v262 = vunpack.c.l.bf16 %v254
        %v263 = vld [vmem:[%s1] sm:$0x1]
        %v265 = vlaneseq
        %v266 = vshrl.u32 %v265, 7
        %v267 = vsub.s32 0, %v266
        %v268 = vrot.slane %v263, %v267
        %v270 = vmul.f32 %v255, %v268
        %v271 = vmul.f32 %v256, %v268
        %v272 = vmul.f32 %v257, %v268
        %v273 = vmul.f32 %v258, %v268
        %v274 = vmul.f32 %v259, %v268
        %v275 = vmul.f32 %v260, %v268
        %v276 = vmul.f32 %v261, %v268
        %v277 = vmul.f32 %v262, %v268
        %v278 = vld [vmem:[%s2] sm:$0x1]
        %v280 = vlaneseq
        %v281 = vshrl.u32 %v280, 7
        %v282 = vsub.s32 0, %v281
        %v283 = vrot.slane %v278, %v282
        %v285 = vadd.f32 %v270, %v283
        %v286 = vadd.f32 %v271, %v283
        %v287 = vadd.f32 %v272, %v283
        %v288 = vadd.f32 %v273, %v283
        %v289 = vadd.f32 %v274, %v283
        %v290 = vadd.f32 %v275, %v283
        %v291 = vadd.f32 %v276, %v283
        %v292 = vadd.f32 %v277, %v283
        %v293 = vmax.f32 %v285, 0.0
        %v294 = vmax.f32 %v286, 0.0
        %v295 = vmax.f32 %v287, 0.0
        %v296 = vmax.f32 %v288, 0.0
        %v297 = vmax.f32 %v289, 0.0
        %v298 = vmax.f32 %v290, 0.0
        %v299 = vmax.f32 %v291, 0.0
        %v300 = vmax.f32 %v292, 0.0
        %v301 = vpack.c.bf16 %v294, %v293
        %v302 = vpack.c.bf16 %v296, %v295
        %v303 = vpack.c.bf16 %v298, %v297
        %v304 = vpack.c.bf16 %v300, %v299
        %v309 = vunpack.c.l.b16 %v301
        %v310 = vunpack.c.h.b16 %v301
        %v311 = vunpack.c.l.b16 %v302
        %v312 = vunpack.c.h.b16 %v302
        %v313 = vunpack.c.l.b16 %v303
        %v314 = vunpack.c.h.b16 %v303
        %v315 = vunpack.c.l.b16 %v304
        %v316 = vunpack.c.h.b16 %v304
        %v317 = vpack.c.b16 %v309, %v309
        %v318 = vpack.c.b16 %v310, %v310
        %v319 = vpack.c.b16 %v311, %v311
        %v320 = vpack.c.b16 %v312, %v312
        %v321 = vpack.c.b16 %v313, %v313
        %v322 = vpack.c.b16 %v314, %v314
        %v323 = vpack.c.b16 %v315, %v315
        %v324 = vpack.c.b16 %v316, %v316
        %333 = vst [vmem:[%s245] sm:$0xf] %v317
        %334 = vst [vmem:[%s245 + $0x4] sm:$0xf] %v318
        %335 = vst [vmem:[%s245 + $0x8] sm:$0xf] %v319
        %336 = vst [vmem:[%s245 + $0xc] sm:$0xf] %v320
        %337 = vst [vmem:[%s245 + $0x10] sm:$0xf] %v321
        %338 = vst [vmem:[%s245 + $0x14] sm:$0xf] %v322
        %339 = vst [vmem:[%s245 + $0x18] sm:$0xf] %v323
        %340 = vst [vmem:[%s245 + $0x1c] sm:$0xf] %v324
        %s341 = smul.u32 8, %s14
        %p342 = scmp.lt.s32.totalorder %s341, 15
        %s343 = scalar_select %p342, %s341, 15
        %s344 = smul.addr %s343, 4
        %s345 = scalar_lea.vmem %s3, %s344
        // Predicated region
        $region74: #{pallas_forward.7} parent=68 // pred_check
          %p346 = pneg %p100
        $region75: #{pallas_forward.7} parent=68 // pred_check_branch
          %348 = sbr.rel (%p346) target = $region77
        $region76: #{pallas_forward.7} parent=68 // pred_region
          %s349 = smul.u32 8, %s14
        $region77: #{pallas_forward.7} parent=68 // pred_fallthru
          _
      $region69: #{pallas_forward.7} parent=5 // pred_fallthru
        _
      %p350 = scmp.le.s32.totalorder 2, %s9
      // Predicated region
      $region78: #{pallas_forward.7} parent=5 // pred_check
        %p351 = pneg %p350
      $region79: #{pallas_forward.7} parent=5 // pred_check_branch
        %353 = sbr.rel (%p351) target = $region81
      $region80: #{pallas_forward.7} parent=5 // pred_region
        %s354 = ssub.s32 %s9, 2
        // Predicated region
        $region82: #{pallas_forward.7} parent=80 // pred_check
          %p355 = pneg %p106
        $region83: #{pallas_forward.7} parent=80 // pred_check_branch
          %357 = sbr.rel (%p355) target = $region85
        $region84: #{pallas_forward.7} parent=80 // pred_region
          %s358 = smul.u32 8, %s15
          %p359 = scmp.lt.s32.totalorder %s358, 15
          %s360 = scalar_select %p359, %s358, 15
          %s361 = smul.addr %s360, 4
          %s362 = scalar_lea.vmem %s3, %s361
        $region85: #{pallas_forward.7} parent=80 // pred_fallthru
          _
      $region81: #{pallas_forward.7} parent=5 // pred_fallthru
        _
    $region6: #{pallas_forward.7} parent=1 // loop_footer
      %s13 = sadd.s32 1, %s9
    $region7: #{pallas_forward.7} parent=1 // loop_footer_branch
      %8 = sbr.rel target = $region3
    $region8: #{pallas_forward.7} parent=1 // loop_exit
      _

// kernel: pallas_forward.6
$region0: #{pallas_forward.6}
  #allocation0 [shape = 'u32[]', space=smem, size = 0x4, offset = 0x4, fixed_abs, tag = 'smem constant byte address 0x4 - core index']
  #allocation1 [shape = 'u32[144,128]{1,0:T(1,128)}', space=vmem, size = 0x12000, scoped, tag = 'internal scratch']
  %s0 = inlined_call_operand.vmem [shape: bf16[128,52], index: 0, kind: input, shape index: {}]
  %s1 = inlined_call_operand.vmem [shape: bf16[52,256], index: 1, kind: input, shape index: {}]
  %s2 = inlined_call_operand.vmem [shape: bf16[128,256], index: 2, kind: output, shape index: {0}]
  %s3 = inlined_call_operand.vmem [shape: f32[16,256], index: 3, kind: output, shape index: {1}]
  %4 = xla_tuple %s2, %s3
  %s5 = sld [smem:[#allocation0]]
  $region49: #{pallas_forward.6} parent=0
    _
  %s7 = ssub.s32 1, %s5
  %s8 = scalar_select 0, %s7, %s5
  loop: start=0, step=1, limit=4
  $region2: #{pallas_forward.6} parent=0 // loop_pre_header
    _
  $region3: #{pallas_forward.6} parent=0 // loop_header
    %s10 = sphi 0, %s14
    %p11 = scmp.ge.s32.totalorder %s10, 4
    %s20 = sphi 0, %s22
    %s23 = sphi 0, %s20
    %s24 = sphi 0, %s23
    %s40 = sphi 0, %s24
    %s44 = sphi 0, %s44
    %s46 = sphi 0, %s44
    %s47 = sphi 0, %s46
    %s61 = sphi 0, %s47
    %s67 = sphi 0, %s69
    %s70 = sphi 0, %s67
    %s71 = sphi 0, %s70
    %s87 = sphi 0, %s71
    %s93 = sphi 0, %s95
    %s96 = sphi 0, %s93
    %s97 = sphi 0, %s96
    %s113 = sphi 0, %s97
  $region4: #{pallas_forward.6} parent=0 // loop_header_branch
    %13 = sbr.rel (%p11) target = $region8
  $region5: #{pallas_forward.6} parent=0 // loop_body
    %s15 = ssub.s32 %s10, 1
    %s16 = ssub.s32 %s10, 2
    %s17 = sadd.s32 %s10, 1
    %s18 = ssub.s32 %s10, %s17
    %p19 = scmp.eq.s32.totalorder %s18, 0
    %s21 = sadd.s32 %s20, 1
    %s22 = scalar_select %p19, %s20, %s21
    %p25 = pneg %p19
    %p26 = scmp.eq.s32.totalorder %s10, 1
    %p27 = por %p25, %p26
    %p28 = scmp.ne.s32.totalorder %s20, %s23
    %p29 = scmp.eq.s32.totalorder %s10, 0
    %p30 = por %p28, %p29
    %p31 = scmp.ne.s32.totalorder %s20, %s23
    %p32 = scmp.eq.s32.totalorder %s15, 1
    %p33 = por %p31, %p32
    %p34 = scmp.ne.s32.totalorder %s23, %s24
    %p35 = scmp.eq.s32.totalorder %s15, 0
    %p36 = por %p34, %p35
    %p37 = scmp.ne.s32.totalorder %s23, %s24
    %p38 = scmp.eq.s32.totalorder %s16, 1
    %p39 = por %p37, %p38
    %p41 = scmp.ne.s32.totalorder %s24, %s40
    %p42 = scmp.eq.s32.totalorder %s16, 0
    %p43 = por %p41, %p42
    %s45 = sadd.s32 %s44, 1
    %p48 = scmp.eq.s32.totalorder %s10, 1
    %p49 = scmp.ne.s32.totalorder %s44, %s46
    %p50 = scmp.eq.s32.totalorder %s10, 0
    %p51 = por %p49, %p50
    %p52 = scmp.ne.s32.totalorder %s44, %s46
    %p53 = scmp.eq.s32.totalorder %s15, 1
    %p54 = por %p52, %p53
    %p55 = scmp.ne.s32.totalorder %s46, %s47
    %p56 = scmp.eq.s32.totalorder %s15, 0
    %p57 = por %p55, %p56
    %p58 = scmp.ne.s32.totalorder %s46, %s47
    %p59 = scmp.eq.s32.totalorder %s16, 1
    %p60 = por %p58, %p59
    %p62 = scmp.ne.s32.totalorder %s47, %s61
    %p63 = scmp.eq.s32.totalorder %s16, 0
    %p64 = por %p62, %p63
    %s65 = ssub.s32 %s10, %s17
    %p66 = scmp.eq.s32.totalorder %s65, 0
    %s68 = sadd.s32 %s67, 1
    %s69 = scalar_select %p66, %s67, %s68
    %p72 = pneg %p66
    %p73 = scmp.eq.s32.totalorder %s10, 1
    %p74 = por %p72, %p73
    %p75 = scmp.ne.s32.totalorder %s67, %s70
    %p76 = scmp.eq.s32.totalorder %s10, 0
    %p77 = por %p75, %p76
    %p78 = scmp.ne.s32.totalorder %s67, %s70
    %p79 = scmp.eq.s32.totalorder %s15, 1
    %p80 = por %p78, %p79
    %p81 = scmp.ne.s32.totalorder %s70, %s71
    %p82 = scmp.eq.s32.totalorder %s15, 0
    %p83 = por %p81, %p82
    %p84 = scmp.ne.s32.totalorder %s70, %s71
    %p85 = scmp.eq.s32.totalorder %s16, 1
    %p86 = por %p84, %p85
    %p88 = scmp.ne.s32.totalorder %s71, %s87
    %p89 = scmp.eq.s32.totalorder %s16, 0
    %p90 = por %p88, %p89
    %s91 = ssub.s32 %s10, %s17
    %p92 = scmp.eq.s32.totalorder %s91, 0
    %s94 = sadd.s32 %s93, 1
    %s95 = scalar_select %p92, %s93, %s94
    %p98 = pneg %p92
    %p99 = scmp.eq.s32.totalorder %s10, 1
    %p100 = por %p98, %p99
    %p101 = scmp.ne.s32.totalorder %s93, %s96
    %p102 = scmp.eq.s32.totalorder %s10, 0
    %p103 = por %p101, %p102
    %p104 = scmp.ne.s32.totalorder %s93, %s96
    %p105 = scmp.eq.s32.totalorder %s15, 1
    %p106 = por %p104, %p105
    %p107 = scmp.ne.s32.totalorder %s96, %s97
    %p108 = scmp.eq.s32.totalorder %s15, 0
    %p109 = por %p107, %p108
    %p110 = scmp.ne.s32.totalorder %s96, %s97
    %p111 = scmp.eq.s32.totalorder %s16, 1
    %p112 = por %p110, %p111
    %p114 = scmp.ne.s32.totalorder %s97, %s113
    %p115 = scmp.eq.s32.totalorder %s16, 0
    %p116 = por %p114, %p115
    %p117 = scmp.le.s32.totalorder 1, %s10
    %p118 = scmp.lt.s32.totalorder %s10, 3
    %p119 = pnand %p117, %p118
    %p120 = pneg %p119
    // Predicated region
    $region9: #{pallas_forward.6} parent=5 // pred_check
      _
    $region10: #{pallas_forward.6} parent=5 // pred_check_branch
      %122 = sbr.rel (%p119) target = $region12
    $region11: #{pallas_forward.6} parent=5 // pred_region
      %s123 = ssub.s32 %s10, 1
      // Predicated region
      $region13: #{pallas_forward.6} parent=11 // pred_check
        %p124 = pneg %p57
      $region14: #{pallas_forward.6} parent=11 // pred_check_branch
        %126 = sbr.rel (%p124) target = $region16
      $region15: #{pallas_forward.6} parent=11 // pred_region
        _
      $region16: #{pallas_forward.6} parent=11 // pred_fallthru
        _
    $region12: #{pallas_forward.6} parent=5 // pred_fallthru
      _
    %p127 = scmp.lt.s32.totalorder %s10, 2
    // Predicated region
    $region17: #{pallas_forward.6} parent=5 // pred_check
      %p128 = pneg %p127
    $region18: #{pallas_forward.6} parent=5 // pred_check_branch
      %130 = sbr.rel (%p128) target = $region20
    $region19: #{pallas_forward.6} parent=5 // pred_region
      // Predicated region
      $region21: #{pallas_forward.6} parent=19 // pred_check
        %p131 = pneg %p30
      $region22: #{pallas_forward.6} parent=19 // pred_check_branch
        %133 = sbr.rel (%p131) target = $region24
      $region23: #{pallas_forward.6} parent=19 // pred_region
        %s134 = smul.u32 8, %s10
        %p135 = scmp.lt.s32.totalorder %s134, 15
        %s136 = scalar_select %p135, %s134, 15
        %s137 = smul.addr %s136, 4
        %s138 = scalar_lea.vmem %s0, %s137
        %s139 = smul.u32 8, %s10
      $region24: #{pallas_forward.6} parent=19 // pred_fallthru
        _
    $region20: #{pallas_forward.6} parent=5 // pred_fallthru
      _
    %p140 = scmp.le.s32.totalorder 1, %s10
    %p141 = scmp.lt.s32.totalorder %s10, 3
    %p142 = pnand %p140, %p141
    %p143 = pneg %p142
    // Predicated region
    $region25: #{pallas_forward.6} parent=5 // pred_check
      _
    $region26: #{pallas_forward.6} parent=5 // pred_check_branch
      %145 = sbr.rel (%p142) target = $region28
    $region27: #{pallas_forward.6} parent=5 // pred_region
      %s146 = ssub.s32 %s10, 1
      %s147 = smul.u32 8, %s15
      %p148 = scmp.lt.s32.totalorder %s147, 15
      %s149 = scalar_select %p148, %s147, 15
      %s150 = smul.addr %s149, 4
      %s151 = scalar_lea.vmem %s0, %s150
      %p152 = pneg %p36
      %p153 = pneg %p33
      %p154 = pneg %p57
      %p155 = pneg %p54
      %p156 = pneg %p83
      %p157 = pneg %p80
      %s158 = smul.u32 8, %s15
      %p159 = scmp.lt.s32.totalorder %s158, 15
      %s160 = scalar_select %p159, %s158, 15
      %s161 = smul.addr %s160, 2
      %s162 = smul.addr %s161, 4
      %s163 = scalar_lea.vmem %s2, %s162
      %p164 = pneg %p109
      %p165 = pneg %p106
      %p166 = scmp.lt.s32.totalorder %s15, 1
      %s167 = scalar_select %p166, %s15, 1
      %s168 = smul.addr %s167, 2
      %s169 = smul.addr %s168, 8
      %s170 = scalar_lea.vmem %s3, %s169
      %s171 = smul.u32 8, %s15
      %p172 = scmp.lt.s32.totalorder %s171, 15
      %s173 = scalar_select %p172, %s171, 15
      %s174 = smul.addr %s173, 4
      %s175 = scalar_lea.vmem %s0, %s174
      %s176 = smul.u32 8, %s15
      %s177 = smul.u32 8, %s15
      %p178 = scmp.lt.s32.totalorder %s177, 15
      %s179 = scalar_select %p178, %s177, 15
      %s180 = smul.addr %s179, 2
      %s181 = smul.addr %s180, 4
      %s182 = scalar_lea.vmem %s2, %s181
      %s183 = smul.u32 8, %s15
      %p184 = scmp.lt.s32.totalorder %s15, 1
      %s185 = scalar_select %p184, %s15, 1
      %s186 = smul.addr %s185, 2
      %s187 = smul.addr %s186, 8
      %s188 = scalar_lea.vmem %s3, %s187
      %v190 = vld [vmem:[%s175] sm:$0xf]
      %v191 = vld [vmem:[%s175 + $0x4] sm:$0xf]
      %v192 = vld [vmem:[%s175 + $0x8] sm:$0xf]
      %v193 = vld [vmem:[%s175 + $0xc] sm:$0xf]
      %v194 = vld [vmem:[%s175 + $0x10] sm:$0xf]
      %v195 = vld [vmem:[%s175 + $0x14] sm:$0xf]
      %v196 = vld [vmem:[%s175 + $0x18] sm:$0xf]
      %v197 = vld [vmem:[%s175 + $0x1c] sm:$0xf]
      %v198 = vld [vmem:[%s1] sm:$0xff]
      %v199 = vld [vmem:[%s1 + $0x8] sm:$0xff]
      %v200 = vld [vmem:[%s1 + $0x10] sm:$0xff]
      %v201 = vld [vmem:[%s1 + $0x18] sm:$0xff]
      %v202 = vld [vmem:[%s1 + $0x20] sm:$0xff]
      %v203 = vld [vmem:[%s1 + $0x28] sm:$0xff]
      %v204 = vld [vmem:[%s1 + $0x30] sm:$0x33]
      %v213 = vunpack.c.l.b16 %v190
      %v214 = vunpack.c.l.b16 %v191
      %v215 = vunpack.c.l.b16 %v192
      %v216 = vunpack.c.l.b16 %v193
      %v217 = vunpack.c.l.b16 %v194
      %v218 = vunpack.c.l.b16 %v195
      %v219 = vunpack.c.l.b16 %v196
      %v220 = vunpack.c.l.b16 %v197
      %v221 = vpack.c.b16 %v214, %v213
      %v222 = vpack.c.b16 %v216, %v215
      %v223 = vpack.c.b16 %v218, %v217
      %v224 = vpack.c.b16 %v220, %v219
      %v232 = vunpack.c.l.b16 %v198
      %v233 = vunpack.c.h.b16 %v198
      %v234 = vunpack.c.l.b16 %v199
      %v235 = vunpack.c.h.b16 %v199
      %v236 = vunpack.c.l.b16 %v200
      %v237 = vunpack.c.h.b16 %v200
      %v238 = vunpack.c.l.b16 %v201
      %v239 = vunpack.c.h.b16 %v201
      %v240 = vunpack.c.l.b16 %v202
      %v241 = vunpack.c.h.b16 %v202
      %v242 = vunpack.c.l.b16 %v203
      %v243 = vunpack.c.h.b16 %v203
      %v244 = vunpack.c.l.b16 %v204
      %v245 = vunpack.c.h.b16 %v204
      %v246 = vpack.c.b16 %v234, %v232
      %v247 = vpack.c.b16 %v235, %v233
      %v248 = vpack.c.b16 %v238, %v236
      %v249 = vpack.c.b16 %v239, %v237
      %v250 = vpack.c.b16 %v242, %v240
      %v251 = vpack.c.b16 %v243, %v241
      %v252 = vpack.c.b16 %v244, %v244
      %v253 = vpack.c.b16 %v245, %v245
      %vm260 = vcmask 424960
      %v262 = vsel %vm260, %v221, 0
      %v265 = vsel %vm260, %v222, 0
      %v268 = vsel %vm260, %v223, 0
      %v271 = vsel %vm260, %v224, 0
      %vm273 = vcmask 1041408
      %v275 = vsel %vm273, %v252, 0
      %v278 = vsel %vm273, %v253, 0
      %280 = vmatprep.subr.bf16.mxu0 0
      %281 = vmatpush1.bf16.msra.mxu0 0
      %282 = vmatprep.subr.bf16.mxu0 0
      %283 = vmatpush1.bf16.msra.mxu0 0
      %284 = vmatprep.subr.bf16.mxu0 0
      %285 = vmatpush1.bf16.msra.mxu0 0
      %286 = vmatprep.subr.bf16.mxu0 0
      %287 = vmatpush1.bf16.msra.mxu0 0
      %288 = vmatprep.subr.bf16.mxu0 %v278
      %289 = vmatpush1.bf16.msra.mxu0 %v275
      %290 = vmatprep.subr.bf16.mxu0 %v251
      %291 = vmatpush1.bf16.msra.mxu0 %v250
      %292 = vmatprep.subr.bf16.mxu0 %v249
      %293 = vmatpush1.bf16.msra.mxu0 %v248
      %294 = vmatprep.subr.bf16.mxu0 %v247
      %295 = vmatpush1.bf16.msra.mxu0 %v246
      %296 = vmatprep.subr.bf16.mxu0 0
      %297 = vmatpush2.bf16.msra.mxu0 0
      %298 = vmatprep.subr.bf16.mxu0 0
      %299 = vmatpush2.bf16.msra.mxu0 0
      %300 = vmatprep.subr.bf16.mxu0 0
      %301 = vmatpush2.bf16.msra.mxu0 0
      %302 = vmatprep.subr.bf16.mxu0 0
      %303 = vmatpush2.bf16.msra.mxu0 0
      %304 = vmatprep.subr.bf16.mxu0 0
      %305 = vmatpush2.bf16.msra.mxu0 0
      %306 = vmatprep.subr.bf16.mxu0 0
      %307 = vmatpush2.bf16.msra.mxu0 0
      %308 = vmatprep.subr.bf16.mxu0 0
      %309 = vmatpush2.bf16.msra.mxu0 0
      %310 = vmatprep.subr.bf16.mxu0 0
      %311 = vmatpush2.bf16.msra.mxu0 0
      %312 = vmatprep.mubr.bf16.mxu0 0
      %313 = vmatmul.mubr.bf16.gmra.mxu0 %v262
      %v314 = vpop.f32.mrf.mxu0
      %v315 = vadd.f32 0.0, %v314
      %v316 = vpop.f32.mrf.mxu0
      %v317 = vadd.f32 0.0, %v316
      %v318 = vpop.f32.mrf.mxu0
      %v319 = vadd.f32 0.0, %v318
      %v320 = vpop.f32.mrf.mxu0
      %v321 = vadd.f32 0.0, %v320
      %322 = vmatprep.mubr.bf16.mxu0 0
      %323 = vmatmul.mubr.bf16.gmra.mxu0 %v265
      %v324 = vpop.f32.mrf.mxu0
      %v325 = vadd.f32 0.0, %v324
      %v326 = vpop.f32.mrf.mxu0
      %v327 = vadd.f32 0.0, %v326
      %v328 = vpop.f32.mrf.mxu0
      %v329 = vadd.f32 0.0, %v328
      %v330 = vpop.f32.mrf.mxu0
      %v331 = vadd.f32 0.0, %v330
      %332 = vmatprep.mubr.bf16.mxu0 0
      %333 = vmatmul.mubr.bf16.gmra.mxu0 %v268
      %v334 = vpop.f32.mrf.mxu0
      %v335 = vadd.f32 0.0, %v334
      %v336 = vpop.f32.mrf.mxu0
      %v337 = vadd.f32 0.0, %v336
      %v338 = vpop.f32.mrf.mxu0
      %v339 = vadd.f32 0.0, %v338
      %v340 = vpop.f32.mrf.mxu0
      %v341 = vadd.f32 0.0, %v340
      %342 = vmatprep.mubr.bf16.mxu0 0
      %343 = vmatmul.mubr.bf16.gmra.mxu0 %v271
      %v344 = vpop.f32.mrf.mxu0
      %v345 = vadd.f32 0.0, %v344
      %v346 = vpop.f32.mrf.mxu0
      %v347 = vadd.f32 0.0, %v346
      %v348 = vpop.f32.mrf.mxu0
      %v349 = vadd.f32 0.0, %v348
      %v350 = vpop.f32.mrf.mxu0
      %v351 = vadd.f32 0.0, %v350
      %352 = vdwg.mxu0
      %v353 = vpack.c.bf16 %v319, %v315
      %v354 = vpack.c.bf16 %v321, %v317
      %v355 = vpack.c.bf16 %v329, %v325
      %v356 = vpack.c.bf16 %v331, %v327
      %v357 = vpack.c.bf16 %v339, %v335
      %v358 = vpack.c.bf16 %v341, %v337
      %v359 = vpack.c.bf16 %v349, %v345
      %v360 = vpack.c.bf16 %v351, %v347
      %v369 = vunpack.c.l.b16 %v353
      %v370 = vunpack.c.l.b16 %v354
      %v371 = vunpack.c.h.b16 %v353
      %v372 = vunpack.c.h.b16 %v354
      %v373 = vunpack.c.l.b16 %v355
      %v374 = vunpack.c.l.b16 %v356
      %v375 = vunpack.c.h.b16 %v355
      %v376 = vunpack.c.h.b16 %v356
      %v377 = vunpack.c.l.b16 %v357
      %v378 = vunpack.c.l.b16 %v358
      %v379 = vunpack.c.h.b16 %v357
      %v380 = vunpack.c.h.b16 %v358
      %v381 = vunpack.c.l.b16 %v359
      %v382 = vunpack.c.l.b16 %v360
      %v383 = vunpack.c.h.b16 %v359
      %v384 = vunpack.c.h.b16 %v360
      %v385 = vpack.c.b16 %v370, %v369
      %v386 = vpack.c.b16 %v372, %v371
      %v387 = vpack.c.b16 %v374, %v373
      %v388 = vpack.c.b16 %v376, %v375
      %v389 = vpack.c.b16 %v378, %v377
      %v390 = vpack.c.b16 %v380, %v379
      %v391 = vpack.c.b16 %v382, %v381
      %v392 = vpack.c.b16 %v384, %v383
      %401 = vst [vmem:[%s182] sm:$0xff] %v385
      %402 = vst [vmem:[%s182 + $0x8] sm:$0xff] %v386
      %403 = vst [vmem:[%s182 + $0x10] sm:$0xff] %v387
      %404 = vst [vmem:[%s182 + $0x18] sm:$0xff] %v388
      %405 = vst [vmem:[%s182 + $0x20] sm:$0xff] %v389
      %406 = vst [vmem:[%s182 + $0x28] sm:$0xff] %v390
      %407 = vst [vmem:[%s182 + $0x30] sm:$0xff] %v391
      %408 = vst [vmem:[%s182 + $0x38] sm:$0xff] %v392
      %v409 = vlaneseq
      %v410 = vshrl.u32 %v409, 7
      %vm411 = vcmp.eq.s32.totalorder %v410, 0
      %v412 = vsel %vm411, 1, 0
      %v413 = vcvt.s32.f32 %v412
      %vm414 = vcmp.eq.s32.totalorder %v410, 1
      %v415 = vsel %vm414, 1, 0
      %v416 = vcvt.s32.f32 %v415
      %v417 = vmul.f32 %v315, %v315
      %v418 = vmul.f32 %v317, %v317
      %v419 = vmul.f32 %v319, %v319
      %v420 = vmul.f32 %v321, %v321
      %v421 = vmul.f32 %v325, %v325
      %v422 = vmul.f32 %v327, %v327
      %v423 = vmul.f32 %v329, %v329
      %v424 = vmul.f32 %v331, %v331
      %v425 = vmul.f32 %v335, %v335
      %v426 = vmul.f32 %v337, %v337
      %v427 = vmul.f32 %v339, %v339
      %v428 = vmul.f32 %v341, %v341
      %v429 = vmul.f32 %v345, %v345
      %v430 = vmul.f32 %v347, %v347
      %v431 = vmul.f32 %v349, %v349
      %v432 = vmul.f32 %v351, %v351
      %vm433 = vcmask 523264
      %v435 = vsel %vm433, %v416, 0
      %437 = vmatprep.subr.mxu0 0.0
      %438 = vmatpush1.msra.mxu0 0.0
      %439 = vmatprep.subr.mxu0 0.0
      %440 = vmatpush1.msra.mxu0 0.0
      %441 = vmatprep.subr.mxu0 0.0
      %442 = vmatpush1.msra.mxu0 0.0
      %443 = vmatprep.subr.mxu0 0.0
      %444 = vmatpush1.msra.mxu0 0.0
      %445 = vmatprep.subr.mxu0 0.0
      %446 = vmatpush1.msra.mxu0 0.0
      %447 = vmatprep.subr.mxu0 0.0
      %448 = vmatpush1.msra.mxu0 0.0
      %449 = vmatprep.subr.mxu0 0.0
      %450 = vmatpush1.msra.mxu0 0.0
      %451 = vmatprep.subr.mxu0 0.0
      %452 = vmatpush1.msra.mxu0 0.0
      %453 = vmatprep.subr.mxu0 %v432
      %454 = vmatpush1.msra.mxu0 %v431
      %455 = vmatprep.subr.mxu0 %v430
      %456 = vmatpush1.msra.mxu0 %v429
      %457 = vmatprep.subr.mxu0 %v428
      %458 = vmatpush1.msra.mxu0 %v427
      %459 = vmatprep.subr.mxu0 %v426
      %460 = vmatpush1.msra.mxu0 %v425
      %461 = vmatprep.subr.mxu0 %v424
      %462 = vmatpush1.msra.mxu0 %v423
      %463 = vmatprep.subr.mxu0 %v422
      %464 = vmatpush1.msra.mxu0 %v421
      %465 = vmatprep.subr.mxu0 %v420
      %466 = vmatpush1.msra.mxu0 %v419
      %467 = vmatprep.subr.mxu0 %v418
      %468 = vmatpush1.msra.mxu0 %v417
      %469 = vmatprep.subr.mxu0 0.0
      %470 = vmatpush2.msra.mxu0 0.0
      %471 = vmatprep.subr.mxu0 0.0
      %472 = vmatpush2.msra.mxu0 0.0
      %473 = vmatprep.subr.mxu0 0.0
      %474 = vmatpush2.msra.mxu0 0.0
      %475 = vmatprep.subr.mxu0 0.0
      %476 = vmatpush2.msra.mxu0 0.0
      %477 = vmatprep.subr.mxu0 0.0
      %478 = vmatpush2.msra.mxu0 0.0
      %479 = vmatprep.subr.mxu0 0.0
      %480 = vmatpush2.msra.mxu0 0.0
      %481 = vmatprep.subr.mxu0 0.0
      %482 = vmatpush2.msra.mxu0 0.0
      %483 = vmatprep.subr.mxu0 0.0
      %484 = vmatpush2.msra.mxu0 0.0
      %485 = vmatprep.subr.mxu0 0.0
      %486 = vmatpush2.msra.mxu0 0.0
      %487 = vmatprep.subr.mxu0 0.0
      %488 = vmatpush2.msra.mxu0 0.0
      %489 = vmatprep.subr.mxu0 0.0
      %490 = vmatpush2.msra.mxu0 0.0
      %491 = vmatprep.subr.mxu0 0.0
      %492 = vmatpush2.msra.mxu0 0.0
      %493 = vmatprep.subr.mxu0 0.0
      %494 = vmatpush2.msra.mxu0 0.0
      %495 = vmatprep.subr.mxu0 0.0
      %496 = vmatpush2.msra.mxu0 0.0
      %497 = vmatprep.subr.mxu0 0.0
      %498 = vmatpush2.msra.mxu0 0.0
      %499 = vmatprep.subr.mxu0 0.0
      %500 = vmatpush2.msra.mxu0 0.0
      %501 = vmatprep.mubr.f32.mxu0 0.0
      %502 = vmatmul.mubr.f32.gmra.mxu0 %v435
      %v503 = vpop.f32.mrf.mxu0
      %v504 = vadd.f32 0.0, %v503
      %v505 = vpop.f32.mrf.mxu0
      %v506 = vadd.f32 0.0, %v505
      %507 = vdwg.mxu0
      %v509 = vsel %vm433, %v413, 0
      %511 = vmatprep.subr.mxu0 0.0
      %512 = vmatpush1.msra.mxu0 0.0
      %513 = vmatprep.subr.mxu0 0.0
      %514 = vmatpush1.msra.mxu0 0.0
      %515 = vmatprep.subr.mxu0 0.0
      %516 = vmatpush1.msra.mxu0 0.0
      %517 = vmatprep.subr.mxu0 0.0
      %518 = vmatpush1.msra.mxu0 0.0
      %519 = vmatprep.subr.mxu0 0.0
      %520 = vmatpush1.msra.mxu0 0.0
      %521 = vmatprep.subr.mxu0 0.0
      %522 = vmatpush1.msra.mxu0 0.0
      %523 = vmatprep.subr.mxu0 0.0
      %524 = vmatpush1.msra.mxu0 0.0
      %525 = vmatprep.subr.mxu0 0.0
      %526 = vmatpush1.msra.mxu0 0.0
      %527 = vmatprep.subr.mxu0 %v351
      %528 = vmatpush1.msra.mxu0 %v349
      %529 = vmatprep.subr.mxu0 %v347
      %530 = vmatpush1.msra.mxu0 %v345
      %531 = vmatprep.subr.mxu0 %v341
      %532 = vmatpush1.msra.mxu0 %v339
      %533 = vmatprep.subr.mxu0 %v337
      %534 = vmatpush1.msra.mxu0 %v335
      %535 = vmatprep.subr.mxu0 %v331
      %536 = vmatpush1.msra.mxu0 %v329
      %537 = vmatprep.subr.mxu0 %v327
      %538 = vmatpush1.msra.mxu0 %v325
      %539 = vmatprep.subr.mxu0 %v321
      %540 = vmatpush1.msra.mxu0 %v319
      %541 = vmatprep.subr.mxu0 %v317
      %542 = vmatpush1.msra.mxu0 %v315
      %543 = vmatprep.subr.mxu0 0.0
      %544 = vmatpush2.msra.mxu0 0.0
      %545 = vmatprep.subr.mxu0 0.0
      %546 = vmatpush2.msra.mxu0 0.0
      %547 = vmatprep.subr.mxu0 0.0
      %548 = vmatpush2.msra.mxu0 0.0
      %549 = vmatprep.subr.mxu0 0.0
      %550 = vmatpush2.msra.mxu0 0.0
      %551 = vmatprep.subr.mxu0 0.0
      %552 = vmatpush2.msra.mxu0 0.0
      %553 = vmatprep.subr.mxu0 0.0
      %554 = vmatpush2.msra.mxu0 0.0
      %555 = vmatprep.subr.mxu0 0.0
      %556 = vmatpush2.msra.mxu0 0.0
      %557 = vmatprep.subr.mxu0 0.0
      %558 = vmatpush2.msra.mxu0 0.0
      %559 = vmatprep.subr.mxu0 0.0
      %560 = vmatpush2.msra.mxu0 0.0
      %561 = vmatprep.subr.mxu0 0.0
      %562 = vmatpush2.msra.mxu0 0.0
      %563 = vmatprep.subr.mxu0 0.0
      %564 = vmatpush2.msra.mxu0 0.0
      %565 = vmatprep.subr.mxu0 0.0
      %566 = vmatpush2.msra.mxu0 0.0
      %567 = vmatprep.subr.mxu0 0.0
      %568 = vmatpush2.msra.mxu0 0.0
      %569 = vmatprep.subr.mxu0 0.0
      %570 = vmatpush2.msra.mxu0 0.0
      %571 = vmatprep.subr.mxu0 0.0
      %572 = vmatpush2.msra.mxu0 0.0
      %573 = vmatprep.subr.mxu0 0.0
      %574 = vmatpush2.msra.mxu0 0.0
      %575 = vmatprep.mubr.f32.mxu0 0.0
      %576 = vmatmul.mubr.f32.gmra.mxu0 %v509
      %v577 = vpop.f32.mrf.mxu0
      %v578 = vadd.f32 %v504, %v577
      %v579 = vpop.f32.mrf.mxu0
      %v580 = vadd.f32 %v506, %v579
      %581 = vdwg.mxu0
      %582 = vst [vmem:[%s188] sm:$0xff] %v578
      %583 = vst [vmem:[%s188 + $0x8] sm:$0xff] %v580
      %s584 = smul.u32 8, %s15
      %p585 = scmp.lt.s32.totalorder %s584, 15
      %s586 = scalar_select %p585, %s584, 15
      %s587 = smul.addr %s586, 2
      %s588 = smul.addr %s587, 4
      %s589 = scalar_lea.vmem %s2, %s588
      %p590 = scmp.lt.s32.totalorder %s15, 1
      %s591 = scalar_select %p590, %s15, 1
      %s592 = smul.addr %s591, 2
      %s593 = smul.addr %s592, 8
      %s594 = scalar_lea.vmem %s3, %s593
      // Predicated region
      $region29: #{pallas_forward.6} parent=27 // pred_check
        %p595 = pneg %p80
      $region30: #{pallas_forward.6} parent=27 // pred_check_branch
        %597 = sbr.rel (%p595) target = $region32
      $region31: #{pallas_forward.6} parent=27 // pred_region
        %s598 = smul.u32 8, %s15
      $region32: #{pallas_forward.6} parent=27 // pred_fallthru
        _
      // Predicated region
      $region33: #{pallas_forward.6} parent=27 // pred_check
        %p599 = pneg %p106
      $region34: #{pallas_forward.6} parent=27 // pred_check_branch
        %601 = sbr.rel (%p599) target = $region36
      $region35: #{pallas_forward.6} parent=27 // pred_region
        _
      $region36: #{pallas_forward.6} parent=27 // pred_fallthru
        _
    $region28: #{pallas_forward.6} parent=5 // pred_fallthru
      _
    %p602 = scmp.le.s32.totalorder 2, %s10
    // Predicated region
    $region37: #{pallas_forward.6} parent=5 // pred_check
      %p603 = pneg %p602
    $region38: #{pallas_forward.6} parent=5 // pred_check_branch
      %605 = sbr.rel (%p603) target = $region40
    $region39: #{pallas_forward.6} parent=5 // pred_region
      %s606 = ssub.s32 %s10, 2
      // Predicated region
      $region41: #{pallas_forward.6} parent=39 // pred_check
        %p607 = pneg %p86
      $region42: #{pallas_forward.6} parent=39 // pred_check_branch
        %609 = sbr.rel (%p607) target = $region44
      $region43: #{pallas_forward.6} parent=39 // pred_region
        %s610 = smul.u32 8, %s16
        %p611 = scmp.lt.s32.totalorder %s610, 15
        %s612 = scalar_select %p611, %s610, 15
        %s613 = smul.addr %s612, 2
        %s614 = smul.addr %s613, 4
        %s615 = scalar_lea.vmem %s2, %s614
      $region44: #{pallas_forward.6} parent=39 // pred_fallthru
        _
      // Predicated region
      $region45: #{pallas_forward.6} parent=39 // pred_check
        %p616 = pneg %p112
      $region46: #{pallas_forward.6} parent=39 // pred_check_branch
        %618 = sbr.rel (%p616) target = $region48
      $region47: #{pallas_forward.6} parent=39 // pred_region
        %p619 = scmp.lt.s32.totalorder %s16, 1
        %s620 = scalar_select %p619, %s16, 1
        %s621 = smul.addr %s620, 2
        %s622 = smul.addr %s621, 8
        %s623 = scalar_lea.vmem %s3, %s622
      $region48: #{pallas_forward.6} parent=39 // pred_fallthru
        _
    $region40: #{pallas_forward.6} parent=5 // pred_fallthru
      _
  $region6: #{pallas_forward.6} parent=0 // loop_footer
    %s14 = sadd.s32 1, %s10
  $region7: #{pallas_forward.6} parent=0 // loop_footer_branch
    %9 = sbr.rel target = $region3
  $region8: #{pallas_forward.6} parent=0 // loop_exit
    _

// kernel: pallas_forward.9
$region0: #{pallas_forward.9}
  #allocation0 [shape = 'u32[]', space=smem, size = 0x4, offset = 0x4, fixed_abs, tag = 'smem constant byte address 0x4 - core index']
  #allocation1 [shape = 'u32[144,128]{1,0:T(1,128)}', space=vmem, size = 0x12000, scoped, tag = 'internal scratch']
  %s0 = inlined_call_operand.vmem [shape: bf16[128,128], index: 0, kind: input, shape index: {}]
  %s1 = inlined_call_operand.vmem [shape: f32[1,128], index: 1, kind: input, shape index: {}]
  %s2 = inlined_call_operand.vmem [shape: f32[1,128], index: 2, kind: input, shape index: {}]
  %s3 = inlined_call_operand.vmem [shape: bf16[128,128], index: 3, kind: output, shape index: {}]
  %s4 = sld [smem:[#allocation0]]
  $region45: #{pallas_forward.9} parent=0
    _
  %s6 = ssub.s32 1, %s4
  %s7 = scalar_select 0, %s6, %s4
  loop: start=0, step=1, limit=4
  $region2: #{pallas_forward.9} parent=0 // loop_pre_header
    _
  $region3: #{pallas_forward.9} parent=0 // loop_header
    %s9 = sphi 0, %s13
    %p10 = scmp.ge.s32.totalorder %s9, 4
    %s19 = sphi 0, %s21
    %s22 = sphi 0, %s19
    %s23 = sphi 0, %s22
    %s39 = sphi 0, %s23
    %s43 = sphi 0, %s43
    %s45 = sphi 0, %s43
    %s46 = sphi 0, %s45
    %s60 = sphi 0, %s46
    %s64 = sphi 0, %s64
    %s66 = sphi 0, %s64
    %s67 = sphi 0, %s66
    %s81 = sphi 0, %s67
    %s87 = sphi 0, %s89
    %s90 = sphi 0, %s87
    %s91 = sphi 0, %s90
    %s107 = sphi 0, %s91
  $region4: #{pallas_forward.9} parent=0 // loop_header_branch
    %12 = sbr.rel (%p10) target = $region8
  $region5: #{pallas_forward.9} parent=0 // loop_body
    %s14 = ssub.s32 %s9, 1
    %s15 = ssub.s32 %s9, 2
    %s16 = sadd.s32 %s9, 1
    %s17 = ssub.s32 %s9, %s16
    %p18 = scmp.eq.s32.totalorder %s17, 0
    %s20 = sadd.s32 %s19, 1
    %s21 = scalar_select %p18, %s19, %s20
    %p24 = pneg %p18
    %p25 = scmp.eq.s32.totalorder %s9, 1
    %p26 = por %p24, %p25
    %p27 = scmp.ne.s32.totalorder %s19, %s22
    %p28 = scmp.eq.s32.totalorder %s9, 0
    %p29 = por %p27, %p28
    %p30 = scmp.ne.s32.totalorder %s19, %s22
    %p31 = scmp.eq.s32.totalorder %s14, 1
    %p32 = por %p30, %p31
    %p33 = scmp.ne.s32.totalorder %s22, %s23
    %p34 = scmp.eq.s32.totalorder %s14, 0
    %p35 = por %p33, %p34
    %p36 = scmp.ne.s32.totalorder %s22, %s23
    %p37 = scmp.eq.s32.totalorder %s15, 1
    %p38 = por %p36, %p37
    %p40 = scmp.ne.s32.totalorder %s23, %s39
    %p41 = scmp.eq.s32.totalorder %s15, 0
    %p42 = por %p40, %p41
    %s44 = sadd.s32 %s43, 1
    %p47 = scmp.eq.s32.totalorder %s9, 1
    %p48 = scmp.ne.s32.totalorder %s43, %s45
    %p49 = scmp.eq.s32.totalorder %s9, 0
    %p50 = por %p48, %p49
    %p51 = scmp.ne.s32.totalorder %s43, %s45
    %p52 = scmp.eq.s32.totalorder %s14, 1
    %p53 = por %p51, %p52
    %p54 = scmp.ne.s32.totalorder %s45, %s46
    %p55 = scmp.eq.s32.totalorder %s14, 0
    %p56 = por %p54, %p55
    %p57 = scmp.ne.s32.totalorder %s45, %s46
    %p58 = scmp.eq.s32.totalorder %s15, 1
    %p59 = por %p57, %p58
    %p61 = scmp.ne.s32.totalorder %s46, %s60
    %p62 = scmp.eq.s32.totalorder %s15, 0
    %p63 = por %p61, %p62
    %s65 = sadd.s32 %s64, 1
    %p68 = scmp.eq.s32.totalorder %s9, 1
    %p69 = scmp.ne.s32.totalorder %s64, %s66
    %p70 = scmp.eq.s32.totalorder %s9, 0
    %p71 = por %p69, %p70
    %p72 = scmp.ne.s32.totalorder %s64, %s66
    %p73 = scmp.eq.s32.totalorder %s14, 1
    %p74 = por %p72, %p73
    %p75 = scmp.ne.s32.totalorder %s66, %s67
    %p76 = scmp.eq.s32.totalorder %s14, 0
    %p77 = por %p75, %p76
    %p78 = scmp.ne.s32.totalorder %s66, %s67
    %p79 = scmp.eq.s32.totalorder %s15, 1
    %p80 = por %p78, %p79
    %p82 = scmp.ne.s32.totalorder %s67, %s81
    %p83 = scmp.eq.s32.totalorder %s15, 0
    %p84 = por %p82, %p83
    %s85 = ssub.s32 %s9, %s16
    %p86 = scmp.eq.s32.totalorder %s85, 0
    %s88 = sadd.s32 %s87, 1
    %s89 = scalar_select %p86, %s87, %s88
    %p92 = pneg %p86
    %p93 = scmp.eq.s32.totalorder %s9, 1
    %p94 = por %p92, %p93
    %p95 = scmp.ne.s32.totalorder %s87, %s90
    %p96 = scmp.eq.s32.totalorder %s9, 0
    %p97 = por %p95, %p96
    %p98 = scmp.ne.s32.totalorder %s87, %s90
    %p99 = scmp.eq.s32.totalorder %s14, 1
    %p100 = por %p98, %p99
    %p101 = scmp.ne.s32.totalorder %s90, %s91
    %p102 = scmp.eq.s32.totalorder %s14, 0
    %p103 = por %p101, %p102
    %p104 = scmp.ne.s32.totalorder %s90, %s91
    %p105 = scmp.eq.s32.totalorder %s15, 1
    %p106 = por %p104, %p105
    %p108 = scmp.ne.s32.totalorder %s91, %s107
    %p109 = scmp.eq.s32.totalorder %s15, 0
    %p110 = por %p108, %p109
    %p111 = scmp.le.s32.totalorder 1, %s9
    %p112 = scmp.lt.s32.totalorder %s9, 3
    %p113 = pnand %p111, %p112
    %p114 = pneg %p113
    // Predicated region
    $region9: #{pallas_forward.9} parent=5 // pred_check
      _
    $region10: #{pallas_forward.9} parent=5 // pred_check_branch
      %116 = sbr.rel (%p113) target = $region12
    $region11: #{pallas_forward.9} parent=5 // pred_region
      %s117 = ssub.s32 %s9, 1
      // Predicated region
      $region13: #{pallas_forward.9} parent=11 // pred_check
        %p118 = pneg %p56
      $region14: #{pallas_forward.9} parent=11 // pred_check_branch
        %120 = sbr.rel (%p118) target = $region16
      $region15: #{pallas_forward.9} parent=11 // pred_region
        _
      $region16: #{pallas_forward.9} parent=11 // pred_fallthru
        _
      // Predicated region
      $region17: #{pallas_forward.9} parent=11 // pred_check
        %p121 = pneg %p77
      $region18: #{pallas_forward.9} parent=11 // pred_check_branch
        %123 = sbr.rel (%p121) target = $region20
      $region19: #{pallas_forward.9} parent=11 // pred_region
        _
      $region20: #{pallas_forward.9} parent=11 // pred_fallthru
        _
    $region12: #{pallas_forward.9} parent=5 // pred_fallthru
      _
    %p124 = scmp.lt.s32.totalorder %s9, 2
    // Predicated region
    $region21: #{pallas_forward.9} parent=5 // pred_check
      %p125 = pneg %p124
    $region22: #{pallas_forward.9} parent=5 // pred_check_branch
      %127 = sbr.rel (%p125) target = $region24
    $region23: #{pallas_forward.9} parent=5 // pred_region
      // Predicated region
      $region25: #{pallas_forward.9} parent=23 // pred_check
        %p128 = pneg %p29
      $region26: #{pallas_forward.9} parent=23 // pred_check_branch
        %130 = sbr.rel (%p128) target = $region28
      $region27: #{pallas_forward.9} parent=23 // pred_region
        %s131 = smul.u32 8, %s9
        %p132 = scmp.lt.s32.totalorder %s131, 15
        %s133 = scalar_select %p132, %s131, 15
        %s134 = smul.addr %s133, 4
        %s135 = scalar_lea.vmem %s0, %s134
        %s136 = smul.u32 8, %s9
      $region28: #{pallas_forward.9} parent=23 // pred_fallthru
        _
    $region24: #{pallas_forward.9} parent=5 // pred_fallthru
      _
    %p137 = scmp.le.s32.totalorder 1, %s9
    %p138 = scmp.lt.s32.totalorder %s9, 3
    %p139 = pnand %p137, %p138
    %p140 = pneg %p139
    // Predicated region
    $region29: #{pallas_forward.9} parent=5 // pred_check
      _
    $region30: #{pallas_forward.9} parent=5 // pred_check_branch
      %142 = sbr.rel (%p139) target = $region32
    $region31: #{pallas_forward.9} parent=5 // pred_region
      %s143 = ssub.s32 %s9, 1
      %s144 = smul.u32 8, %s14
      %p145 = scmp.lt.s32.totalorder %s144, 15
      %s146 = scalar_select %p145, %s144, 15
      %s147 = smul.addr %s146, 4
      %s148 = scalar_lea.vmem %s0, %s147
      %p149 = pneg %p35
      %p150 = pneg %p32
      %p151 = pneg %p56
      %p152 = pneg %p53
      %p153 = pneg %p77
      %p154 = pneg %p74
      %p155 = pneg %p103
      %p156 = pneg %p100
      %s157 = smul.u32 8, %s14
      %p158 = scmp.lt.s32.totalorder %s157, 15
      %s159 = scalar_select %p158, %s157, 15
      %s160 = smul.addr %s159, 4
      %s161 = scalar_lea.vmem %s3, %s160
      %s162 = smul.u32 8, %s14
      %p163 = scmp.lt.s32.totalorder %s162, 15
      %s164 = scalar_select %p163, %s162, 15
      %s165 = smul.addr %s164, 4
      %s166 = scalar_lea.vmem %s0, %s165
      %s167 = smul.u32 8, %s14
      %s168 = smul.u32 8, %s14
      %p169 = scmp.lt.s32.totalorder %s168, 15
      %s170 = scalar_select %p169, %s168, 15
      %s171 = smul.addr %s170, 4
      %s172 = scalar_lea.vmem %s3, %s171
      %s173 = smul.u32 8, %s14
      %v174 = vld [vmem:[%s166] sm:$0xf]
      %v175 = vld [vmem:[%s166 + $0x4] sm:$0xf]
      %v176 = vld [vmem:[%s166 + $0x8] sm:$0xf]
      %v177 = vld [vmem:[%s166 + $0xc] sm:$0xf]
      %v178 = vld [vmem:[%s166 + $0x10] sm:$0xf]
      %v179 = vld [vmem:[%s166 + $0x14] sm:$0xf]
      %v180 = vld [vmem:[%s166 + $0x18] sm:$0xf]
      %v181 = vld [vmem:[%s166 + $0x1c] sm:$0xf]
      %v182 = vunpack.c.l.bf16 %v174
      %v183 = vunpack.c.l.bf16 %v175
      %v184 = vunpack.c.l.bf16 %v176
      %v185 = vunpack.c.l.bf16 %v177
      %v186 = vunpack.c.l.bf16 %v178
      %v187 = vunpack.c.l.bf16 %v179
      %v188 = vunpack.c.l.bf16 %v180
      %v189 = vunpack.c.l.bf16 %v181
      %v190 = vld [vmem:[%s1] sm:$0x1]
      %v192 = vlaneseq
      %v193 = vshrl.u32 %v192, 7
      %v194 = vsub.s32 0, %v193
      %v195 = vrot.slane %v190, %v194
      %v197 = vmul.f32 %v182, %v195
      %v198 = vmul.f32 %v183, %v195
      %v199 = vmul.f32 %v184, %v195
      %v200 = vmul.f32 %v185, %v195
      %v201 = vmul.f32 %v186, %v195
      %v202 = vmul.f32 %v187, %v195
      %v203 = vmul.f32 %v188, %v195
      %v204 = vmul.f32 %v189, %v195
      %v205 = vld [vmem:[%s2] sm:$0x1]
      %v207 = vlaneseq
      %v208 = vshrl.u32 %v207, 7
      %v209 = vsub.s32 0, %v208
      %v210 = vrot.slane %v205, %v209
      %v212 = vadd.f32 %v197, %v210
      %v213 = vadd.f32 %v198, %v210
      %v214 = vadd.f32 %v199, %v210
      %v215 = vadd.f32 %v200, %v210
      %v216 = vadd.f32 %v201, %v210
      %v217 = vadd.f32 %v202, %v210
      %v218 = vadd.f32 %v203, %v210
      %v219 = vadd.f32 %v204, %v210
      %v220 = vmax.f32 %v212, 0.0
      %v221 = vmax.f32 %v213, 0.0
      %v222 = vmax.f32 %v214, 0.0
      %v223 = vmax.f32 %v215, 0.0
      %v224 = vmax.f32 %v216, 0.0
      %v225 = vmax.f32 %v217, 0.0
      %v226 = vmax.f32 %v218, 0.0
      %v227 = vmax.f32 %v219, 0.0
      %v228 = vpack.c.bf16 %v221, %v220
      %v229 = vpack.c.bf16 %v223, %v222
      %v230 = vpack.c.bf16 %v225, %v224
      %v231 = vpack.c.bf16 %v227, %v226
      %v236 = vunpack.c.l.b16 %v228
      %v237 = vunpack.c.h.b16 %v228
      %v238 = vunpack.c.l.b16 %v229
      %v239 = vunpack.c.h.b16 %v229
      %v240 = vunpack.c.l.b16 %v230
      %v241 = vunpack.c.h.b16 %v230
      %v242 = vunpack.c.l.b16 %v231
      %v243 = vunpack.c.h.b16 %v231
      %v244 = vpack.c.b16 %v236, %v236
      %v245 = vpack.c.b16 %v237, %v237
      %v246 = vpack.c.b16 %v238, %v238
      %v247 = vpack.c.b16 %v239, %v239
      %v248 = vpack.c.b16 %v240, %v240
      %v249 = vpack.c.b16 %v241, %v241
      %v250 = vpack.c.b16 %v242, %v242
      %v251 = vpack.c.b16 %v243, %v243
      %260 = vst [vmem:[%s172] sm:$0xf] %v244
      %261 = vst [vmem:[%s172 + $0x4] sm:$0xf] %v245
      %262 = vst [vmem:[%s172 + $0x8] sm:$0xf] %v246
      %263 = vst [vmem:[%s172 + $0xc] sm:$0xf] %v247
      %264 = vst [vmem:[%s172 + $0x10] sm:$0xf] %v248
      %265 = vst [vmem:[%s172 + $0x14] sm:$0xf] %v249
      %266 = vst [vmem:[%s172 + $0x18] sm:$0xf] %v250
      %267 = vst [vmem:[%s172 + $0x1c] sm:$0xf] %v251
      %s268 = smul.u32 8, %s14
      %p269 = scmp.lt.s32.totalorder %s268, 15
      %s270 = scalar_select %p269, %s268, 15
      %s271 = smul.addr %s270, 4
      %s272 = scalar_lea.vmem %s3, %s271
      // Predicated region
      $region33: #{pallas_forward.9} parent=31 // pred_check
        %p273 = pneg %p100
      $region34: #{pallas_forward.9} parent=31 // pred_check_branch
        %275 = sbr.rel (%p273) target = $region36
      $region35: #{pallas_forward.9} parent=31 // pred_region
        %s276 = smul.u32 8, %s14
      $region36: #{pallas_forward.9} parent=31 // pred_fallthru
        _
    $region32: #{pallas_forward.9} parent=5 // pred_fallthru
      _
    %p277 = scmp.le.s32.totalorder 2, %s9
    // Predicated region
    $region37: #{pallas_forward.9} parent=5 // pred_check
      %p278 = pneg %p277
    $region38: #{pallas_forward.9} parent=5 // pred_check_branch
      %280 = sbr.rel (%p278) target = $region40
    $region39: #{pallas_forward.9} parent=5 // pred_region
      %s281 = ssub.s32 %s9, 2
      // Predicated region
      $region41: #{pallas_forward.9} parent=39 // pred_check
        %p282 = pneg %p106
      $region42: #{pallas_forward.9} parent=39 // pred_check_branch
        %284 = sbr.rel (%p282) target = $region44
      $region43: #{pallas_forward.9} parent=39 // pred_region
        %s285 = smul.u32 8, %s15
        %p286 = scmp.lt.s32.totalorder %s285, 15
        %s287 = scalar_select %p286, %s285, 15
        %s288 = smul.addr %s287, 4
        %s289 = scalar_lea.vmem %s3, %s288
      $region44: #{pallas_forward.9} parent=39 // pred_fallthru
        _
    $region40: #{pallas_forward.9} parent=5 // pred_fallthru
      _
  $region6: #{pallas_forward.9} parent=0 // loop_footer
    %s13 = sadd.s32 1, %s9
  $region7: #{pallas_forward.9} parent=0 // loop_footer_branch
    %8 = sbr.rel target = $region3
  $region8: #{pallas_forward.9} parent=0 // loop_exit
    _

// kernel: pallas_forward.8
$region0: #{pallas_forward.8}
  #allocation0 [shape = 'u32[]', space=smem, size = 0x4, offset = 0x4, fixed_abs, tag = 'smem constant byte address 0x4 - core index']
  #allocation1 [shape = 'u32[144,128]{1,0:T(1,128)}', space=vmem, size = 0x12000, scoped, tag = 'internal scratch']
  %s0 = inlined_call_operand.vmem [shape: bf16[128,144], index: 0, kind: input, shape index: {}]
  %s1 = inlined_call_operand.vmem [shape: bf16[144,128], index: 1, kind: input, shape index: {}]
  %s2 = inlined_call_operand.vmem [shape: bf16[128,128], index: 2, kind: output, shape index: {0}]
  %s3 = inlined_call_operand.vmem [shape: f32[16,128], index: 3, kind: output, shape index: {1}]
  %4 = xla_tuple %s2, %s3
  %s5 = sld [smem:[#allocation0]]
  $region49: #{pallas_forward.8} parent=0
    _
  %s7 = ssub.s32 1, %s5
  %s8 = scalar_select 0, %s7, %s5
  loop: start=0, step=1, limit=4
  $region2: #{pallas_forward.8} parent=0 // loop_pre_header
    _
  $region3: #{pallas_forward.8} parent=0 // loop_header
    %s10 = sphi 0, %s14
    %p11 = scmp.ge.s32.totalorder %s10, 4
    %s20 = sphi 0, %s22
    %s23 = sphi 0, %s20
    %s24 = sphi 0, %s23
    %s40 = sphi 0, %s24
    %s44 = sphi 0, %s44
    %s46 = sphi 0, %s44
    %s47 = sphi 0, %s46
    %s61 = sphi 0, %s47
    %s67 = sphi 0, %s69
    %s70 = sphi 0, %s67
    %s71 = sphi 0, %s70
    %s87 = sphi 0, %s71
    %s93 = sphi 0, %s95
    %s96 = sphi 0, %s93
    %s97 = sphi 0, %s96
    %s113 = sphi 0, %s97
  $region4: #{pallas_forward.8} parent=0 // loop_header_branch
    %13 = sbr.rel (%p11) target = $region8
  $region5: #{pallas_forward.8} parent=0 // loop_body
    %s15 = ssub.s32 %s10, 1
    %s16 = ssub.s32 %s10, 2
    %s17 = sadd.s32 %s10, 1
    %s18 = ssub.s32 %s10, %s17
    %p19 = scmp.eq.s32.totalorder %s18, 0
    %s21 = sadd.s32 %s20, 1
    %s22 = scalar_select %p19, %s20, %s21
    %p25 = pneg %p19
    %p26 = scmp.eq.s32.totalorder %s10, 1
    %p27 = por %p25, %p26
    %p28 = scmp.ne.s32.totalorder %s20, %s23
    %p29 = scmp.eq.s32.totalorder %s10, 0
    %p30 = por %p28, %p29
    %p31 = scmp.ne.s32.totalorder %s20, %s23
    %p32 = scmp.eq.s32.totalorder %s15, 1
    %p33 = por %p31, %p32
    %p34 = scmp.ne.s32.totalorder %s23, %s24
    %p35 = scmp.eq.s32.totalorder %s15, 0
    %p36 = por %p34, %p35
    %p37 = scmp.ne.s32.totalorder %s23, %s24
    %p38 = scmp.eq.s32.totalorder %s16, 1
    %p39 = por %p37, %p38
    %p41 = scmp.ne.s32.totalorder %s24, %s40
    %p42 = scmp.eq.s32.totalorder %s16, 0
    %p43 = por %p41, %p42
    %s45 = sadd.s32 %s44, 1
    %p48 = scmp.eq.s32.totalorder %s10, 1
    %p49 = scmp.ne.s32.totalorder %s44, %s46
    %p50 = scmp.eq.s32.totalorder %s10, 0
    %p51 = por %p49, %p50
    %p52 = scmp.ne.s32.totalorder %s44, %s46
    %p53 = scmp.eq.s32.totalorder %s15, 1
    %p54 = por %p52, %p53
    %p55 = scmp.ne.s32.totalorder %s46, %s47
    %p56 = scmp.eq.s32.totalorder %s15, 0
    %p57 = por %p55, %p56
    %p58 = scmp.ne.s32.totalorder %s46, %s47
    %p59 = scmp.eq.s32.totalorder %s16, 1
    %p60 = por %p58, %p59
    %p62 = scmp.ne.s32.totalorder %s47, %s61
    %p63 = scmp.eq.s32.totalorder %s16, 0
    %p64 = por %p62, %p63
    %s65 = ssub.s32 %s10, %s17
    %p66 = scmp.eq.s32.totalorder %s65, 0
    %s68 = sadd.s32 %s67, 1
    %s69 = scalar_select %p66, %s67, %s68
    %p72 = pneg %p66
    %p73 = scmp.eq.s32.totalorder %s10, 1
    %p74 = por %p72, %p73
    %p75 = scmp.ne.s32.totalorder %s67, %s70
    %p76 = scmp.eq.s32.totalorder %s10, 0
    %p77 = por %p75, %p76
    %p78 = scmp.ne.s32.totalorder %s67, %s70
    %p79 = scmp.eq.s32.totalorder %s15, 1
    %p80 = por %p78, %p79
    %p81 = scmp.ne.s32.totalorder %s70, %s71
    %p82 = scmp.eq.s32.totalorder %s15, 0
    %p83 = por %p81, %p82
    %p84 = scmp.ne.s32.totalorder %s70, %s71
    %p85 = scmp.eq.s32.totalorder %s16, 1
    %p86 = por %p84, %p85
    %p88 = scmp.ne.s32.totalorder %s71, %s87
    %p89 = scmp.eq.s32.totalorder %s16, 0
    %p90 = por %p88, %p89
    %s91 = ssub.s32 %s10, %s17
    %p92 = scmp.eq.s32.totalorder %s91, 0
    %s94 = sadd.s32 %s93, 1
    %s95 = scalar_select %p92, %s93, %s94
    %p98 = pneg %p92
    %p99 = scmp.eq.s32.totalorder %s10, 1
    %p100 = por %p98, %p99
    %p101 = scmp.ne.s32.totalorder %s93, %s96
    %p102 = scmp.eq.s32.totalorder %s10, 0
    %p103 = por %p101, %p102
    %p104 = scmp.ne.s32.totalorder %s93, %s96
    %p105 = scmp.eq.s32.totalorder %s15, 1
    %p106 = por %p104, %p105
    %p107 = scmp.ne.s32.totalorder %s96, %s97
    %p108 = scmp.eq.s32.totalorder %s15, 0
    %p109 = por %p107, %p108
    %p110 = scmp.ne.s32.totalorder %s96, %s97
    %p111 = scmp.eq.s32.totalorder %s16, 1
    %p112 = por %p110, %p111
    %p114 = scmp.ne.s32.totalorder %s97, %s113
    %p115 = scmp.eq.s32.totalorder %s16, 0
    %p116 = por %p114, %p115
    %p117 = scmp.le.s32.totalorder 1, %s10
    %p118 = scmp.lt.s32.totalorder %s10, 3
    %p119 = pnand %p117, %p118
    %p120 = pneg %p119
    // Predicated region
    $region9: #{pallas_forward.8} parent=5 // pred_check
      _
    $region10: #{pallas_forward.8} parent=5 // pred_check_branch
      %122 = sbr.rel (%p119) target = $region12
    $region11: #{pallas_forward.8} parent=5 // pred_region
      %s123 = ssub.s32 %s10, 1
      // Predicated region
      $region13: #{pallas_forward.8} parent=11 // pred_check
        %p124 = pneg %p57
      $region14: #{pallas_forward.8} parent=11 // pred_check_branch
        %126 = sbr.rel (%p124) target = $region16
      $region15: #{pallas_forward.8} parent=11 // pred_region
        _
      $region16: #{pallas_forward.8} parent=11 // pred_fallthru
        _
    $region12: #{pallas_forward.8} parent=5 // pred_fallthru
      _
    %p127 = scmp.lt.s32.totalorder %s10, 2
    // Predicated region
    $region17: #{pallas_forward.8} parent=5 // pred_check
      %p128 = pneg %p127
    $region18: #{pallas_forward.8} parent=5 // pred_check_branch
      %130 = sbr.rel (%p128) target = $region20
    $region19: #{pallas_forward.8} parent=5 // pred_region
      // Predicated region
      $region21: #{pallas_forward.8} parent=19 // pred_check
        %p131 = pneg %p30
      $region22: #{pallas_forward.8} parent=19 // pred_check_branch
        %133 = sbr.rel (%p131) target = $region24
      $region23: #{pallas_forward.8} parent=19 // pred_region
        %s134 = smul.u32 8, %s10
        %p135 = scmp.lt.s32.totalorder %s134, 15
        %s136 = scalar_select %p135, %s134, 15
        %s137 = smul.addr %s136, 2
        %s138 = smul.addr %s137, 4
        %s139 = scalar_lea.vmem %s0, %s138
        %s140 = smul.u32 8, %s10
      $region24: #{pallas_forward.8} parent=19 // pred_fallthru
        _
    $region20: #{pallas_forward.8} parent=5 // pred_fallthru
      _
    %p141 = scmp.le.s32.totalorder 1, %s10
    %p142 = scmp.lt.s32.totalorder %s10, 3
    %p143 = pnand %p141, %p142
    %p144 = pneg %p143
    // Predicated region
    $region25: #{pallas_forward.8} parent=5 // pred_check
      _
    $region26: #{pallas_forward.8} parent=5 // pred_check_branch
      %146 = sbr.rel (%p143) target = $region28
    $region27: #{pallas_forward.8} parent=5 // pred_region
      %s147 = ssub.s32 %s10, 1
      %s148 = smul.u32 8, %s15
      %p149 = scmp.lt.s32.totalorder %s148, 15
      %s150 = scalar_select %p149, %s148, 15
      %s151 = smul.addr %s150, 2
      %s152 = smul.addr %s151, 4
      %s153 = scalar_lea.vmem %s0, %s152
      %p154 = pneg %p36
      %p155 = pneg %p33
      %p156 = pneg %p57
      %p157 = pneg %p54
      %p158 = pneg %p83
      %p159 = pneg %p80
      %s160 = smul.u32 8, %s15
      %p161 = scmp.lt.s32.totalorder %s160, 15
      %s162 = scalar_select %p161, %s160, 15
      %s163 = smul.addr %s162, 4
      %s164 = scalar_lea.vmem %s2, %s163
      %p165 = pneg %p109
      %p166 = pneg %p106
      %p167 = scmp.lt.s32.totalorder %s15, 1
      %s168 = scalar_select %p167, %s15, 1
      %s169 = smul.addr %s168, 8
      %s170 = scalar_lea.vmem %s3, %s169
      %s171 = smul.u32 8, %s15
      %p172 = scmp.lt.s32.totalorder %s171, 15
      %s173 = scalar_select %p172, %s171, 15
      %s174 = smul.addr %s173, 2
      %s175 = smul.addr %s174, 4
      %s176 = scalar_lea.vmem %s0, %s175
      %s177 = smul.u32 8, %s15
      %s178 = smul.u32 8, %s15
      %p179 = scmp.lt.s32.totalorder %s178, 15
      %s180 = scalar_select %p179, %s178, 15
      %s181 = smul.addr %s180, 4
      %s182 = scalar_lea.vmem %s2, %s181
      %s183 = smul.u32 8, %s15
      %p184 = scmp.lt.s32.totalorder %s15, 1
      %s185 = scalar_select %p184, %s15, 1
      %s186 = smul.addr %s185, 8
      %s187 = scalar_lea.vmem %s3, %s186
      %v189 = vld [vmem:[%s176] sm:$0xff]
      %v190 = vld [vmem:[%s176 + $0x8] sm:$0xff]
      %v191 = vld [vmem:[%s176 + $0x10] sm:$0xff]
      %v192 = vld [vmem:[%s176 + $0x18] sm:$0xff]
      %v193 = vld [vmem:[%s176 + $0x20] sm:$0xff]
      %v194 = vld [vmem:[%s176 + $0x28] sm:$0xff]
      %v195 = vld [vmem:[%s176 + $0x30] sm:$0xff]
      %v196 = vld [vmem:[%s176 + $0x38] sm:$0xff]
      %v197 = vld [vmem:[%s1] sm:$0xf]
      %v198 = vld [vmem:[%s1 + $0x4] sm:$0xf]
      %v199 = vld [vmem:[%s1 + $0x8] sm:$0xf]
      %v200 = vld [vmem:[%s1 + $0xc] sm:$0xf]
      %v201 = vld [vmem:[%s1 + $0x10] sm:$0xf]
      %v202 = vld [vmem:[%s1 + $0x14] sm:$0xf]
      %v203 = vld [vmem:[%s1 + $0x18] sm:$0xf]
      %v204 = vld [vmem:[%s1 + $0x1c] sm:$0xf]
      %v205 = vld [vmem:[%s1 + $0x20] sm:$0xf]
      %v206 = vld [vmem:[%s1 + $0x24] sm:$0xf]
      %v207 = vld [vmem:[%s1 + $0x28] sm:$0xf]
      %v208 = vld [vmem:[%s1 + $0x2c] sm:$0xf]
      %v209 = vld [vmem:[%s1 + $0x30] sm:$0xf]
      %v210 = vld [vmem:[%s1 + $0x34] sm:$0xf]
      %v211 = vld [vmem:[%s1 + $0x38] sm:$0xf]
      %v212 = vld [vmem:[%s1 + $0x3c] sm:$0xf]
      %v213 = vld [vmem:[%s1 + $0x40] sm:$0xf]
      %v214 = vld [vmem:[%s1 + $0x44] sm:$0xf]
      %v223 = vunpack.c.l.b16 %v189
      %v224 = vunpack.c.h.b16 %v189
      %v225 = vunpack.c.l.b16 %v190
      %v226 = vunpack.c.h.b16 %v190
      %v227 = vunpack.c.l.b16 %v191
      %v228 = vunpack.c.h.b16 %v191
      %v229 = vunpack.c.l.b16 %v192
      %v230 = vunpack.c.h.b16 %v192
      %v231 = vunpack.c.l.b16 %v193
      %v232 = vunpack.c.h.b16 %v193
      %v233 = vunpack.c.l.b16 %v194
      %v234 = vunpack.c.h.b16 %v194
      %v235 = vunpack.c.l.b16 %v195
      %v236 = vunpack.c.h.b16 %v195
      %v237 = vunpack.c.l.b16 %v196
      %v238 = vunpack.c.h.b16 %v196
      %v239 = vpack.c.b16 %v225, %v223
      %v240 = vpack.c.b16 %v226, %v224
      %v241 = vpack.c.b16 %v229, %v227
      %v242 = vpack.c.b16 %v230, %v228
      %v243 = vpack.c.b16 %v233, %v231
      %v244 = vpack.c.b16 %v234, %v232
      %v245 = vpack.c.b16 %v237, %v235
      %v246 = vpack.c.b16 %v238, %v236
      %v269 = vunpack.c.l.b16 %v197
      %v270 = vunpack.c.l.b16 %v198
      %v271 = vunpack.c.l.b16 %v199
      %v272 = vunpack.c.l.b16 %v200
      %v273 = vunpack.c.l.b16 %v201
      %v274 = vunpack.c.l.b16 %v202
      %v275 = vunpack.c.l.b16 %v203
      %v276 = vunpack.c.l.b16 %v204
      %v277 = vunpack.c.l.b16 %v205
      %v278 = vunpack.c.l.b16 %v206
      %v279 = vunpack.c.l.b16 %v207
      %v280 = vunpack.c.l.b16 %v208
      %v281 = vunpack.c.l.b16 %v209
      %v282 = vunpack.c.l.b16 %v210
      %v283 = vunpack.c.l.b16 %v211
      %v284 = vunpack.c.l.b16 %v212
      %v285 = vunpack.c.l.b16 %v213
      %v286 = vunpack.c.l.b16 %v214
      %v287 = vpack.c.b16 %v270, %v269
      %v288 = vpack.c.b16 %v272, %v271
      %v289 = vpack.c.b16 %v274, %v273
      %v290 = vpack.c.b16 %v276, %v275
      %v291 = vpack.c.b16 %v278, %v277
      %v292 = vpack.c.b16 %v280, %v279
      %v293 = vpack.c.b16 %v282, %v281
      %v294 = vpack.c.b16 %v284, %v283
      %v295 = vpack.c.b16 %v286, %v285
      %vm305 = vcmask 130048
      %v307 = vsel %vm305, %v240, 0
      %v310 = vsel %vm305, %v242, 0
      %v313 = vsel %vm305, %v244, 0
      %v316 = vsel %vm305, %v246, 0
      %318 = vmatprep.subr.bf16.mxu0 0
      %319 = vmatpush1.bf16.msra.mxu0 %v294
      %320 = vmatprep.subr.bf16.mxu0 0
      %321 = vmatpush1.bf16.msra.mxu0 %v293
      %322 = vmatprep.subr.bf16.mxu0 0
      %323 = vmatpush1.bf16.msra.mxu0 %v292
      %324 = vmatprep.subr.bf16.mxu0 0
      %325 = vmatpush1.bf16.msra.mxu0 %v291
      %326 = vmatprep.subr.bf16.mxu0 0
      %327 = vmatpush1.bf16.msra.mxu0 %v290
      %328 = vmatprep.subr.bf16.mxu0 0
      %329 = vmatpush1.bf16.msra.mxu0 %v289
      %330 = vmatprep.subr.bf16.mxu0 0
      %331 = vmatpush1.bf16.msra.mxu0 %v288
      %332 = vmatprep.subr.bf16.mxu0 0
      %333 = vmatpush1.bf16.msra.mxu0 %v287
      %334 = vmatprep.subr.bf16.mxu0 0
      %335 = vmatpush2.bf16.msra.mxu0 0
      %336 = vmatprep.subr.bf16.mxu0 0
      %337 = vmatpush2.bf16.msra.mxu0 0
      %338 = vmatprep.subr.bf16.mxu0 0
      %339 = vmatpush2.bf16.msra.mxu0 0
      %340 = vmatprep.subr.bf16.mxu0 0
      %341 = vmatpush2.bf16.msra.mxu0 0
      %342 = vmatprep.subr.bf16.mxu0 0
      %343 = vmatpush2.bf16.msra.mxu0 0
      %344 = vmatprep.subr.bf16.mxu0 0
      %345 = vmatpush2.bf16.msra.mxu0 0
      %346 = vmatprep.subr.bf16.mxu0 0
      %347 = vmatpush2.bf16.msra.mxu0 0
      %348 = vmatprep.subr.bf16.mxu0 0
      %349 = vmatpush2.bf16.msra.mxu0 %v295
      %350 = vmatprep.mubr.bf16.mxu0 %v307
      %351 = vmatmul.mubr.bf16.gmra.mxu0 %v239
      %v352 = vpop.f32.mrf.mxu0
      %v353 = vadd.f32 0.0, %v352
      %v354 = vpop.f32.mrf.mxu0
      %v355 = vpop.f32.mrf.mxu0
      %v356 = vadd.f32 0.0, %v355
      %v357 = vpop.f32.mrf.mxu0
      %358 = vmatprep.mubr.bf16.mxu0 %v310
      %359 = vmatmul.mubr.bf16.gmra.mxu0 %v241
      %v360 = vpop.f32.mrf.mxu0
      %v361 = vadd.f32 0.0, %v360
      %v362 = vpop.f32.mrf.mxu0
      %v363 = vpop.f32.mrf.mxu0
      %v364 = vadd.f32 0.0, %v363
      %v365 = vpop.f32.mrf.mxu0
      %366 = vmatprep.mubr.bf16.mxu0 %v313
      %367 = vmatmul.mubr.bf16.gmra.mxu0 %v243
      %v368 = vpop.f32.mrf.mxu0
      %v369 = vadd.f32 0.0, %v368
      %v370 = vpop.f32.mrf.mxu0
      %v371 = vpop.f32.mrf.mxu0
      %v372 = vadd.f32 0.0, %v371
      %v373 = vpop.f32.mrf.mxu0
      %374 = vmatprep.mubr.bf16.mxu0 %v316
      %375 = vmatmul.mubr.bf16.gmra.mxu0 %v245
      %v376 = vpop.f32.mrf.mxu0
      %v377 = vadd.f32 0.0, %v376
      %v378 = vpop.f32.mrf.mxu0
      %v379 = vpop.f32.mrf.mxu0
      %v380 = vadd.f32 0.0, %v379
      %v381 = vpop.f32.mrf.mxu0
      %382 = vdwg.mxu0
      %v383 = vpack.c.bf16 %v356, %v353
      %v384 = vpack.c.bf16 %v364, %v361
      %v385 = vpack.c.bf16 %v372, %v369
      %v386 = vpack.c.bf16 %v380, %v377
      %v391 = vunpack.c.l.b16 %v383
      %v392 = vunpack.c.h.b16 %v383
      %v393 = vunpack.c.l.b16 %v384
      %v394 = vunpack.c.h.b16 %v384
      %v395 = vunpack.c.l.b16 %v385
      %v396 = vunpack.c.h.b16 %v385
      %v397 = vunpack.c.l.b16 %v386
      %v398 = vunpack.c.h.b16 %v386
      %v399 = vpack.c.b16 %v391, %v391
      %v400 = vpack.c.b16 %v392, %v392
      %v401 = vpack.c.b16 %v393, %v393
      %v402 = vpack.c.b16 %v394, %v394
      %v403 = vpack.c.b16 %v395, %v395
      %v404 = vpack.c.b16 %v396, %v396
      %v405 = vpack.c.b16 %v397, %v397
      %v406 = vpack.c.b16 %v398, %v398
      %415 = vst [vmem:[%s182] sm:$0xf] %v399
      %416 = vst [vmem:[%s182 + $0x4] sm:$0xf] %v400
      %417 = vst [vmem:[%s182 + $0x8] sm:$0xf] %v401
      %418 = vst [vmem:[%s182 + $0xc] sm:$0xf] %v402
      %419 = vst [vmem:[%s182 + $0x10] sm:$0xf] %v403
      %420 = vst [vmem:[%s182 + $0x14] sm:$0xf] %v404
      %421 = vst [vmem:[%s182 + $0x18] sm:$0xf] %v405
      %422 = vst [vmem:[%s182 + $0x1c] sm:$0xf] %v406
      %v423 = vlaneseq
      %v424 = vshrl.u32 %v423, 7
      %vm425 = vcmp.eq.s32.totalorder %v424, 0
      %v426 = vsel %vm425, 1, 0
      %v427 = vcvt.s32.f32 %v426
      %vm428 = vcmp.eq.s32.totalorder %v424, 1
      %v429 = vsel %vm428, 1, 0
      %v430 = vcvt.s32.f32 %v429
      %v431 = vmul.f32 %v353, %v353
      %v432 = vmul.f32 %v356, %v356
      %v433 = vmul.f32 %v361, %v361
      %v434 = vmul.f32 %v364, %v364
      %v435 = vmul.f32 %v369, %v369
      %v436 = vmul.f32 %v372, %v372
      %v437 = vmul.f32 %v377, %v377
      %v438 = vmul.f32 %v380, %v380
      %vm439 = vcmask 523264
      %v441 = vsel %vm439, %v430, 0
      %443 = vmatprep.subr.mxu0 0.0
      %444 = vmatpush1.msra.mxu0 0.0
      %445 = vmatprep.subr.mxu0 0.0
      %446 = vmatpush1.msra.mxu0 0.0
      %447 = vmatprep.subr.mxu0 0.0
      %448 = vmatpush1.msra.mxu0 0.0
      %449 = vmatprep.subr.mxu0 0.0
      %450 = vmatpush1.msra.mxu0 0.0
      %451 = vmatprep.subr.mxu0 0.0
      %452 = vmatpush1.msra.mxu0 0.0
      %453 = vmatprep.subr.mxu0 0.0
      %454 = vmatpush1.msra.mxu0 0.0
      %455 = vmatprep.subr.mxu0 0.0
      %456 = vmatpush1.msra.mxu0 0.0
      %457 = vmatprep.subr.mxu0 0.0
      %458 = vmatpush1.msra.mxu0 0.0
      %459 = vmatprep.subr.mxu0 0.0
      %460 = vmatpush1.msra.mxu0 %v438
      %461 = vmatprep.subr.mxu0 0.0
      %462 = vmatpush1.msra.mxu0 %v437
      %463 = vmatprep.subr.mxu0 0.0
      %464 = vmatpush1.msra.mxu0 %v436
      %465 = vmatprep.subr.mxu0 0.0
      %466 = vmatpush1.msra.mxu0 %v435
      %467 = vmatprep.subr.mxu0 0.0
      %468 = vmatpush1.msra.mxu0 %v434
      %469 = vmatprep.subr.mxu0 0.0
      %470 = vmatpush1.msra.mxu0 %v433
      %471 = vmatprep.subr.mxu0 0.0
      %472 = vmatpush1.msra.mxu0 %v432
      %473 = vmatprep.subr.mxu0 0.0
      %474 = vmatpush1.msra.mxu0 %v431
      %475 = vmatprep.subr.mxu0 0.0
      %476 = vmatpush2.msra.mxu0 0.0
      %477 = vmatprep.subr.mxu0 0.0
      %478 = vmatpush2.msra.mxu0 0.0
      %479 = vmatprep.subr.mxu0 0.0
      %480 = vmatpush2.msra.mxu0 0.0
      %481 = vmatprep.subr.mxu0 0.0
      %482 = vmatpush2.msra.mxu0 0.0
      %483 = vmatprep.subr.mxu0 0.0
      %484 = vmatpush2.msra.mxu0 0.0
      %485 = vmatprep.subr.mxu0 0.0
      %486 = vmatpush2.msra.mxu0 0.0
      %487 = vmatprep.subr.mxu0 0.0
      %488 = vmatpush2.msra.mxu0 0.0
      %489 = vmatprep.subr.mxu0 0.0
      %490 = vmatpush2.msra.mxu0 0.0
      %491 = vmatprep.subr.mxu0 0.0
      %492 = vmatpush2.msra.mxu0 0.0
      %493 = vmatprep.subr.mxu0 0.0
      %494 = vmatpush2.msra.mxu0 0.0
      %495 = vmatprep.subr.mxu0 0.0
      %496 = vmatpush2.msra.mxu0 0.0
      %497 = vmatprep.subr.mxu0 0.0
      %498 = vmatpush2.msra.mxu0 0.0
      %499 = vmatprep.subr.mxu0 0.0
      %500 = vmatpush2.msra.mxu0 0.0
      %501 = vmatprep.subr.mxu0 0.0
      %502 = vmatpush2.msra.mxu0 0.0
      %503 = vmatprep.subr.mxu0 0.0
      %504 = vmatpush2.msra.mxu0 0.0
      %505 = vmatprep.subr.mxu0 0.0
      %506 = vmatpush2.msra.mxu0 0.0
      %507 = vmatprep.mubr.f32.mxu0 0.0
      %508 = vmatmul.mubr.f32.gmra.mxu0 %v441
      %v509 = vpop.f32.mrf.mxu0
      %v510 = vadd.f32 0.0, %v509
      %v511 = vpop.f32.mrf.mxu0
      %512 = vdwg.mxu0
      %v514 = vsel %vm439, %v427, 0
      %516 = vmatprep.subr.mxu0 0.0
      %517 = vmatpush1.msra.mxu0 0.0
      %518 = vmatprep.subr.mxu0 0.0
      %519 = vmatpush1.msra.mxu0 0.0
      %520 = vmatprep.subr.mxu0 0.0
      %521 = vmatpush1.msra.mxu0 0.0
      %522 = vmatprep.subr.mxu0 0.0
      %523 = vmatpush1.msra.mxu0 0.0
      %524 = vmatprep.subr.mxu0 0.0
      %525 = vmatpush1.msra.mxu0 0.0
      %526 = vmatprep.subr.mxu0 0.0
      %527 = vmatpush1.msra.mxu0 0.0
      %528 = vmatprep.subr.mxu0 0.0
      %529 = vmatpush1.msra.mxu0 0.0
      %530 = vmatprep.subr.mxu0 0.0
      %531 = vmatpush1.msra.mxu0 0.0
      %532 = vmatprep.subr.mxu0 0.0
      %533 = vmatpush1.msra.mxu0 %v380
      %534 = vmatprep.subr.mxu0 0.0
      %535 = vmatpush1.msra.mxu0 %v377
      %536 = vmatprep.subr.mxu0 0.0
      %537 = vmatpush1.msra.mxu0 %v372
      %538 = vmatprep.subr.mxu0 0.0
      %539 = vmatpush1.msra.mxu0 %v369
      %540 = vmatprep.subr.mxu0 0.0
      %541 = vmatpush1.msra.mxu0 %v364
      %542 = vmatprep.subr.mxu0 0.0
      %543 = vmatpush1.msra.mxu0 %v361
      %544 = vmatprep.subr.mxu0 0.0
      %545 = vmatpush1.msra.mxu0 %v356
      %546 = vmatprep.subr.mxu0 0.0
      %547 = vmatpush1.msra.mxu0 %v353
      %548 = vmatprep.subr.mxu0 0.0
      %549 = vmatpush2.msra.mxu0 0.0
      %550 = vmatprep.subr.mxu0 0.0
      %551 = vmatpush2.msra.mxu0 0.0
      %552 = vmatprep.subr.mxu0 0.0
      %553 = vmatpush2.msra.mxu0 0.0
      %554 = vmatprep.subr.mxu0 0.0
      %555 = vmatpush2.msra.mxu0 0.0
      %556 = vmatprep.subr.mxu0 0.0
      %557 = vmatpush2.msra.mxu0 0.0
      %558 = vmatprep.subr.mxu0 0.0
      %559 = vmatpush2.msra.mxu0 0.0
      %560 = vmatprep.subr.mxu0 0.0
      %561 = vmatpush2.msra.mxu0 0.0
      %562 = vmatprep.subr.mxu0 0.0
      %563 = vmatpush2.msra.mxu0 0.0
      %564 = vmatprep.subr.mxu0 0.0
      %565 = vmatpush2.msra.mxu0 0.0
      %566 = vmatprep.subr.mxu0 0.0
      %567 = vmatpush2.msra.mxu0 0.0
      %568 = vmatprep.subr.mxu0 0.0
      %569 = vmatpush2.msra.mxu0 0.0
      %570 = vmatprep.subr.mxu0 0.0
      %571 = vmatpush2.msra.mxu0 0.0
      %572 = vmatprep.subr.mxu0 0.0
      %573 = vmatpush2.msra.mxu0 0.0
      %574 = vmatprep.subr.mxu0 0.0
      %575 = vmatpush2.msra.mxu0 0.0
      %576 = vmatprep.subr.mxu0 0.0
      %577 = vmatpush2.msra.mxu0 0.0
      %578 = vmatprep.subr.mxu0 0.0
      %579 = vmatpush2.msra.mxu0 0.0
      %580 = vmatprep.mubr.f32.mxu0 0.0
      %581 = vmatmul.mubr.f32.gmra.mxu0 %v514
      %v582 = vpop.f32.mrf.mxu0
      %v583 = vadd.f32 %v510, %v582
      %v584 = vpop.f32.mrf.mxu0
      %585 = vdwg.mxu0
      %586 = vst [vmem:[%s187] sm:$0xff] %v583
      %s587 = smul.u32 8, %s15
      %p588 = scmp.lt.s32.totalorder %s587, 15
      %s589 = scalar_select %p588, %s587, 15
      %s590 = smul.addr %s589, 4
      %s591 = scalar_lea.vmem %s2, %s590
      %p592 = scmp.lt.s32.totalorder %s15, 1
      %s593 = scalar_select %p592, %s15, 1
      %s594 = smul.addr %s593, 8
      %s595 = scalar_lea.vmem %s3, %s594
      // Predicated region
      $region29: #{pallas_forward.8} parent=27 // pred_check
        %p596 = pneg %p80
      $region30: #{pallas_forward.8} parent=27 // pred_check_branch
        %598 = sbr.rel (%p596) target = $region32
      $region31: #{pallas_forward.8} parent=27 // pred_region
        %s599 = smul.u32 8, %s15
      $region32: #{pallas_forward.8} parent=27 // pred_fallthru
        _
      // Predicated region
      $region33: #{pallas_forward.8} parent=27 // pred_check
        %p600 = pneg %p106
      $region34: #{pallas_forward.8} parent=27 // pred_check_branch
        %602 = sbr.rel (%p600) target = $region36
      $region35: #{pallas_forward.8} parent=27 // pred_region
        _
      $region36: #{pallas_forward.8} parent=27 // pred_fallthru
        _
    $region28: #{pallas_forward.8} parent=5 // pred_fallthru
      _
    %p603 = scmp.le.s32.totalorder 2, %s10
    // Predicated region
    $region37: #{pallas_forward.8} parent=5 // pred_check
      %p604 = pneg %p603
    $region38: #{pallas_forward.8} parent=5 // pred_check_branch
      %606 = sbr.rel (%p604) target = $region40
    $region39: #{pallas_forward.8} parent=5 // pred_region
      %s607 = ssub.s32 %s10, 2
      // Predicated region
      $region41: #{pallas_forward.8} parent=39 // pred_check
        %p608 = pneg %p86
      $region42: #{pallas_forward.8} parent=39 // pred_check_branch
        %610 = sbr.rel (%p608) target = $region44
      $region43: #{pallas_forward.8} parent=39 // pred_region
        %s611 = smul.u32 8, %s16
        %p612 = scmp.lt.s32.totalorder %s611, 15
        %s613 = scalar_select %p612, %s611, 15
        %s614 = smul.addr %s613, 4
        %s615 = scalar_lea.vmem %s2, %s614
      $region44: #{pallas_forward.8} parent=39 // pred_fallthru
        _
      // Predicated region
      $region45: #{pallas_forward.8} parent=39 // pred_check
        %p616 = pneg %p112
      $region46: #{pallas_forward.8} parent=39 // pred_check_branch
        %618 = sbr.rel (%p616) target = $region48
      $region47: #{pallas_forward.8} parent=39 // pred_region
        %p619 = scmp.lt.s32.totalorder %s16, 1
        %s620 = scalar_select %p619, %s16, 1
        %s621 = smul.addr %s620, 8
        %s622 = scalar_lea.vmem %s3, %s621
      $region48: #{pallas_forward.8} parent=39 // pred_fallthru
        _
    $region40: #{pallas_forward.8} parent=5 // pred_fallthru
      _
  $region6: #{pallas_forward.8} parent=0 // loop_footer
    %s14 = sadd.s32 1, %s10
  $region7: #{pallas_forward.8} parent=0 // loop_footer_branch
    %9 = sbr.rel target = $region3
  $region8: #{pallas_forward.8} parent=0 // loop_exit
    _

// kernel: pallas_forward.11
$region0: #{pallas_forward.11}
  #allocation0 [shape = 'u32[]', space=smem, size = 0x4, offset = 0x4, fixed_abs, tag = 'smem constant byte address 0x4 - core index']
  #allocation1 [shape = 'u32[144,128]{1,0:T(1,128)}', space=vmem, size = 0x12000, scoped, tag = 'internal scratch']
  %s0 = inlined_call_operand.vmem [shape: bf16[128,128], index: 0, kind: input, shape index: {}]
  %s1 = inlined_call_operand.vmem [shape: f32[1,128], index: 1, kind: input, shape index: {}]
  %s2 = inlined_call_operand.vmem [shape: f32[1,128], index: 2, kind: input, shape index: {}]
  %s3 = inlined_call_operand.vmem [shape: bf16[128,256], index: 3, kind: input, shape index: {}]
  %s4 = inlined_call_operand.vmem [shape: f32[1,128], index: 4, kind: input, shape index: {}]
  %s5 = inlined_call_operand.vmem [shape: f32[1,128], index: 5, kind: input, shape index: {}]
  %s6 = inlined_call_operand.vmem [shape: f32[128,128], index: 6, kind: output, shape index: {}]
  %s7 = sld [smem:[#allocation0]]
  $region98: #{pallas_forward.11} parent=0
    _
  %s9 = ssub.s32 1, %s7
  %s10 = scalar_select 0, %s9, %s7
  $region1: #{pallas_forward.11} parent=0
    #allocation2 [shape = 'u8[32768]{0}', space=vmem, size = 0x8000, scoped, tag = 'input window, operand 3']
    loop: start=0, step=1, limit=4
    $region2: #{pallas_forward.11} parent=1 // loop_pre_header
      _
    $region3: #{pallas_forward.11} parent=1 // loop_header
      %s12 = sphi 0, %s16
      %p13 = scmp.ge.s32.totalorder %s12, 4
      %s22 = sphi 0, %s24
      %s25 = sphi 0, %s22
      %s26 = sphi 0, %s25
      %s42 = sphi 0, %s26
      %s46 = sphi 0, %s46
      %s48 = sphi 0, %s46
      %s49 = sphi 0, %s48
      %s63 = sphi 0, %s49
      %s67 = sphi 0, %s67
      %s69 = sphi 0, %s67
      %s70 = sphi 0, %s69
      %s84 = sphi 0, %s70
      %s90 = sphi 0, %s92
      %s93 = sphi 0, %s90
      %s94 = sphi 0, %s93
      %s110 = sphi 0, %s94
      %s114 = sphi 0, %s114
      %s116 = sphi 0, %s114
      %s117 = sphi 0, %s116
      %s131 = sphi 0, %s117
      %s135 = sphi 0, %s135
      %s137 = sphi 0, %s135
      %s138 = sphi 0, %s137
      %s152 = sphi 0, %s138
      %s158 = sphi 0, %s160
      %s161 = sphi 0, %s158
      %s162 = sphi 0, %s161
      %s178 = sphi 0, %s162
    $region4: #{pallas_forward.11} parent=1 // loop_header_branch
      %15 = sbr.rel (%p13) target = $region8
    $region5: #{pallas_forward.11} parent=1 // loop_body
      %s17 = ssub.s32 %s12, 1
      %s18 = ssub.s32 %s12, 2
      %s19 = sadd.s32 %s12, 1
      %s20 = ssub.s32 %s12, %s19
      %p21 = scmp.eq.s32.totalorder %s20, 0
      %s23 = sadd.s32 %s22, 1
      %s24 = scalar_select %p21, %s22, %s23
      %p27 = pneg %p21
      %p28 = scmp.eq.s32.totalorder %s12, 1
      %p29 = por %p27, %p28
      %p30 = scmp.ne.s32.totalorder %s22, %s25
      %p31 = scmp.eq.s32.totalorder %s12, 0
      %p32 = por %p30, %p31
      %p33 = scmp.ne.s32.totalorder %s22, %s25
      %p34 = scmp.eq.s32.totalorder %s17, 1
      %p35 = por %p33, %p34
      %p36 = scmp.ne.s32.totalorder %s25, %s26
      %p37 = scmp.eq.s32.totalorder %s17, 0
      %p38 = por %p36, %p37
      %p39 = scmp.ne.s32.totalorder %s25, %s26
      %p40 = scmp.eq.s32.totalorder %s18, 1
      %p41 = por %p39, %p40
      %p43 = scmp.ne.s32.totalorder %s26, %s42
      %p44 = scmp.eq.s32.totalorder %s18, 0
      %p45 = por %p43, %p44
      %s47 = sadd.s32 %s46, 1
      %p50 = scmp.eq.s32.totalorder %s12, 1
      %p51 = scmp.ne.s32.totalorder %s46, %s48
      %p52 = scmp.eq.s32.totalorder %s12, 0
      %p53 = por %p51, %p52
      %p54 = scmp.ne.s32.totalorder %s46, %s48
      %p55 = scmp.eq.s32.totalorder %s17, 1
      %p56 = por %p54, %p55
      %p57 = scmp.ne.s32.totalorder %s48, %s49
      %p58 = scmp.eq.s32.totalorder %s17, 0
      %p59 = por %p57, %p58
      %p60 = scmp.ne.s32.totalorder %s48, %s49
      %p61 = scmp.eq.s32.totalorder %s18, 1
      %p62 = por %p60, %p61
      %p64 = scmp.ne.s32.totalorder %s49, %s63
      %p65 = scmp.eq.s32.totalorder %s18, 0
      %p66 = por %p64, %p65
      %s68 = sadd.s32 %s67, 1
      %p71 = scmp.eq.s32.totalorder %s12, 1
      %p72 = scmp.ne.s32.totalorder %s67, %s69
      %p73 = scmp.eq.s32.totalorder %s12, 0
      %p74 = por %p72, %p73
      %p75 = scmp.ne.s32.totalorder %s67, %s69
      %p76 = scmp.eq.s32.totalorder %s17, 1
      %p77 = por %p75, %p76
      %p78 = scmp.ne.s32.totalorder %s69, %s70
      %p79 = scmp.eq.s32.totalorder %s17, 0
      %p80 = por %p78, %p79
      %p81 = scmp.ne.s32.totalorder %s69, %s70
      %p82 = scmp.eq.s32.totalorder %s18, 1
      %p83 = por %p81, %p82
      %p85 = scmp.ne.s32.totalorder %s70, %s84
      %p86 = scmp.eq.s32.totalorder %s18, 0
      %p87 = por %p85, %p86
      %s88 = ssub.s32 %s12, %s19
      %p89 = scmp.eq.s32.totalorder %s88, 0
      %s91 = sadd.s32 %s90, 1
      %s92 = scalar_select %p89, %s90, %s91
      %p95 = pneg %p89
      %p96 = scmp.eq.s32.totalorder %s12, 1
      %p97 = por %p95, %p96
      %p98 = scmp.ne.s32.totalorder %s90, %s93
      %p99 = scmp.eq.s32.totalorder %s12, 0
      %p100 = por %p98, %p99
      %p101 = scmp.ne.s32.totalorder %s90, %s93
      %p102 = scmp.eq.s32.totalorder %s17, 1
      %p103 = por %p101, %p102
      %p104 = scmp.ne.s32.totalorder %s93, %s94
      %p105 = scmp.eq.s32.totalorder %s17, 0
      %p106 = por %p104, %p105
      %p107 = scmp.ne.s32.totalorder %s93, %s94
      %p108 = scmp.eq.s32.totalorder %s18, 1
      %p109 = por %p107, %p108
      %p111 = scmp.ne.s32.totalorder %s94, %s110
      %p112 = scmp.eq.s32.totalorder %s18, 0
      %p113 = por %p111, %p112
      %s115 = sadd.s32 %s114, 1
      %p118 = scmp.eq.s32.totalorder %s12, 1
      %p119 = scmp.ne.s32.totalorder %s114, %s116
      %p120 = scmp.eq.s32.totalorder %s12, 0
      %p121 = por %p119, %p120
      %p122 = scmp.ne.s32.totalorder %s114, %s116
      %p123 = scmp.eq.s32.totalorder %s17, 1
      %p124 = por %p122, %p123
      %p125 = scmp.ne.s32.totalorder %s116, %s117
      %p126 = scmp.eq.s32.totalorder %s17, 0
      %p127 = por %p125, %p126
      %p128 = scmp.ne.s32.totalorder %s116, %s117
      %p129 = scmp.eq.s32.totalorder %s18, 1
      %p130 = por %p128, %p129
      %p132 = scmp.ne.s32.totalorder %s117, %s131
      %p133 = scmp.eq.s32.totalorder %s18, 0
      %p134 = por %p132, %p133
      %s136 = sadd.s32 %s135, 1
      %p139 = scmp.eq.s32.totalorder %s12, 1
      %p140 = scmp.ne.s32.totalorder %s135, %s137
      %p141 = scmp.eq.s32.totalorder %s12, 0
      %p142 = por %p140, %p141
      %p143 = scmp.ne.s32.totalorder %s135, %s137
      %p144 = scmp.eq.s32.totalorder %s17, 1
      %p145 = por %p143, %p144
      %p146 = scmp.ne.s32.totalorder %s137, %s138
      %p147 = scmp.eq.s32.totalorder %s17, 0
      %p148 = por %p146, %p147
      %p149 = scmp.ne.s32.totalorder %s137, %s138
      %p150 = scmp.eq.s32.totalorder %s18, 1
      %p151 = por %p149, %p150
      %p153 = scmp.ne.s32.totalorder %s138, %s152
      %p154 = scmp.eq.s32.totalorder %s18, 0
      %p155 = por %p153, %p154
      %s156 = ssub.s32 %s12, %s19
      %p157 = scmp.eq.s32.totalorder %s156, 0
      %s159 = sadd.s32 %s158, 1
      %s160 = scalar_select %p157, %s158, %s159
      %p163 = pneg %p157
      %p164 = scmp.eq.s32.totalorder %s12, 1
      %p165 = por %p163, %p164
      %p166 = scmp.ne.s32.totalorder %s158, %s161
      %p167 = scmp.eq.s32.totalorder %s12, 0
      %p168 = por %p166, %p167
      %p169 = scmp.ne.s32.totalorder %s158, %s161
      %p170 = scmp.eq.s32.totalorder %s17, 1
      %p171 = por %p169, %p170
      %p172 = scmp.ne.s32.totalorder %s161, %s162
      %p173 = scmp.eq.s32.totalorder %s17, 0
      %p174 = por %p172, %p173
      %p175 = scmp.ne.s32.totalorder %s161, %s162
      %p176 = scmp.eq.s32.totalorder %s18, 1
      %p177 = por %p175, %p176
      %p179 = scmp.ne.s32.totalorder %s162, %s178
      %p180 = scmp.eq.s32.totalorder %s18, 0
      %p181 = por %p179, %p180
      %p182 = scmp.le.s32.totalorder 1, %s12
      %p183 = scmp.lt.s32.totalorder %s12, 3
      %p184 = pnand %p182, %p183
      %p185 = pneg %p184
      // Predicated region
      $region9: #{pallas_forward.11} parent=5 // pred_check
        _
      $region10: #{pallas_forward.11} parent=5 // pred_check_branch
        %187 = sbr.rel (%p184) target = $region12
      $region11: #{pallas_forward.11} parent=5 // pred_region
        %s188 = ssub.s32 %s12, 1
        // Predicated region
        $region13: #{pallas_forward.11} parent=11 // pred_check
          %p189 = pneg %p59
        $region14: #{pallas_forward.11} parent=11 // pred_check_branch
          %191 = sbr.rel (%p189) target = $region16
        $region15: #{pallas_forward.11} parent=11 // pred_region
          _
        $region16: #{pallas_forward.11} parent=11 // pred_fallthru
          _
        // Predicated region
        $region17: #{pallas_forward.11} parent=11 // pred_check
          %p192 = pneg %p80
        $region18: #{pallas_forward.11} parent=11 // pred_check_branch
          %194 = sbr.rel (%p192) target = $region20
        $region19: #{pallas_forward.11} parent=11 // pred_region
          _
        $region20: #{pallas_forward.11} parent=11 // pred_fallthru
          _
        // Predicated region
        $region21: #{pallas_forward.11} parent=11 // pred_check
          %p195 = pneg %p127
        $region22: #{pallas_forward.11} parent=11 // pred_check_branch
          %197 = sbr.rel (%p195) target = $region24
        $region23: #{pallas_forward.11} parent=11 // pred_region
          _
        $region24: #{pallas_forward.11} parent=11 // pred_fallthru
          _
        // Predicated region
        $region25: #{pallas_forward.11} parent=11 // pred_check
          %p198 = pneg %p148
        $region26: #{pallas_forward.11} parent=11 // pred_check_branch
          %200 = sbr.rel (%p198) target = $region28
        $region27: #{pallas_forward.11} parent=11 // pred_region
          _
        $region28: #{pallas_forward.11} parent=11 // pred_fallthru
          _
      $region12: #{pallas_forward.11} parent=5 // pred_fallthru
        _
      %p201 = scmp.lt.s32.totalorder %s12, 2
      // Predicated region
      $region29: #{pallas_forward.11} parent=5 // pred_check
        %p202 = pneg %p201
      $region30: #{pallas_forward.11} parent=5 // pred_check_branch
        %204 = sbr.rel (%p202) target = $region32
      $region31: #{pallas_forward.11} parent=5 // pred_region
        // Predicated region
        $region33: #{pallas_forward.11} parent=31 // pred_check
          %p205 = pneg %p32
        $region34: #{pallas_forward.11} parent=31 // pred_check_branch
          %207 = sbr.rel (%p205) target = $region36
        $region35: #{pallas_forward.11} parent=31 // pred_region
          %s208 = smul.u32 8, %s12
          %p209 = scmp.lt.s32.totalorder %s208, 15
          %s210 = scalar_select %p209, %s208, 15
          %s211 = smul.addr %s210, 4
          %s212 = scalar_lea.vmem %s0, %s211
          %s213 = smul.u32 8, %s12
        $region36: #{pallas_forward.11} parent=31 // pred_fallthru
          _
        // Predicated region
        $region37: #{pallas_forward.11} parent=31 // pred_check
          %p214 = pneg %p100
        $region38: #{pallas_forward.11} parent=31 // pred_check_branch
          %216 = sbr.rel (%p214) target = $region40
        $region39: #{pallas_forward.11} parent=31 // pred_region
          %s217 = sand.u32 %s90, 1
          %s218 = sand.u32 %s90, 1
          %s219 = smul.addr %s218, 32
          %s220 = scalar_lea.vmem [#allocation2], %s219
          %s221 = smul.u32 8, %s12
          %s222 = smul.addr %s221, 2
          %s223 = smul.addr %s222, 4
          %s224 = scalar_lea.vmem %s3, %s223
          // Predicated region
          $region41: #{pallas_forward.11} parent=39 // pred_check
            _
          $region42: #{pallas_forward.11} parent=39 // pred_check_branch
            %226 = sbr.rel (0) target = $region44
          $region43: #{pallas_forward.11} parent=39 // pred_region
            // Predicated region
            $region45: #{pallas_forward.11} parent=43 // pred_check
              _
            $region46: #{pallas_forward.11} parent=43 // pred_check_branch
              %228 = sbr.rel target = $region48
            $region47: #{pallas_forward.11} parent=43 // pred_region
              // Predicated region
              $region60: #{pallas_forward.11} parent=47 // pred_check
                _
              $region61: #{pallas_forward.11} parent=47 // pred_check_branch
                %258 = sbr.rel (0) target = $region63
              $region62: #{pallas_forward.11} parent=47 // pred_region
                loop: start=0, step=1, limit=1
                $region64: #{pallas_forward.11} parent=62 // loop_pre_header
                  _
                $region65: #{pallas_forward.11} parent=62 // loop_header
                  %s260 = sphi 0, %s264
                  %p261 = scmp.ge.s32.totalorder %s260, 1
                  %s265 = sphi %s224, %s224
                  %s266 = sphi %s220, %s220
                $region66: #{pallas_forward.11} parent=62 // loop_header_branch
                  %263 = sbr.rel (%p261) target = $region70
                $region67: #{pallas_forward.11} parent=62 // loop_body
                  _
                $region68: #{pallas_forward.11} parent=62 // loop_footer
                  %s264 = sadd.s32 1, %s260
                $region69: #{pallas_forward.11} parent=62 // loop_footer_branch
                  %259 = sbr.rel target = $region65
                $region70: #{pallas_forward.11} parent=62 // loop_exit
                  _
                %s268 = ssub.s32 16, 1
                loop: start=0, step=1, limit=1
                $region71: #{pallas_forward.11} parent=62 // loop_pre_header
                  _
                $region72: #{pallas_forward.11} parent=62 // loop_header
                  %s270 = sphi 0, %s274
                  %p271 = scmp.ge.s32.totalorder %s270, 1
                  %s275 = sphi %s224, %s224
                  %s276 = sphi %s220, %s220
                $region73: #{pallas_forward.11} parent=62 // loop_header_branch
                  %273 = sbr.rel (%p271) target = $region77
                $region74: #{pallas_forward.11} parent=62 // loop_body
                  %v277 = vld [vmem:[%s275] sm:%s268]
                  %278 = vst [vmem:[%s276] sm:%s268] %v277
                  %v279 = vld [vmem:[%s275 + $0x8] sm:%s268]
                  %280 = vst [vmem:[%s276 + $0x4] sm:%s268] %v279
                  %v281 = vld [vmem:[%s275 + $0x10] sm:%s268]
                  %282 = vst [vmem:[%s276 + $0x8] sm:%s268] %v281
                  %v283 = vld [vmem:[%s275 + $0x18] sm:%s268]
                  %284 = vst [vmem:[%s276 + $0xc] sm:%s268] %v283
                  %v285 = vld [vmem:[%s275 + $0x20] sm:%s268]
                  %286 = vst [vmem:[%s276 + $0x10] sm:%s268] %v285
                  %v287 = vld [vmem:[%s275 + $0x28] sm:%s268]
                  %288 = vst [vmem:[%s276 + $0x14] sm:%s268] %v287
                  %v289 = vld [vmem:[%s275 + $0x30] sm:%s268]
                  %290 = vst [vmem:[%s276 + $0x18] sm:%s268] %v289
                  %v291 = vld [vmem:[%s275 + $0x38] sm:%s268]
                  %292 = vst [vmem:[%s276 + $0x1c] sm:%s268] %v291
                $region75: #{pallas_forward.11} parent=62 // loop_footer
                  %s274 = sadd.s32 1, %s270
                $region76: #{pallas_forward.11} parent=62 // loop_footer_branch
                  %269 = sbr.rel target = $region72
                $region77: #{pallas_forward.11} parent=62 // loop_exit
                  _
              $region63: #{pallas_forward.11} parent=47 // pred_fallthru
                _
            $region48: #{pallas_forward.11} parent=43 // pred_fallthru
              _
            // Predicated region
            $region49: #{pallas_forward.11} parent=43 // pred_check
              _
            $region50: #{pallas_forward.11} parent=43 // pred_check_branch
              %230 = sbr.rel (0) target = $region52
            $region51: #{pallas_forward.11} parent=43 // pred_region
              %s232 = ssub.s32 16, 1
              loop: start=0, step=1, limit=1
              $region53: #{pallas_forward.11} parent=51 // loop_pre_header
                _
              $region54: #{pallas_forward.11} parent=51 // loop_header
                %s234 = sphi 0, %s238
                %p235 = scmp.ge.s32.totalorder %s234, 1
                %s239 = sphi %s224, %s224
                %s240 = sphi %s220, %s220
              $region55: #{pallas_forward.11} parent=51 // loop_header_branch
                %237 = sbr.rel (%p235) target = $region59
              $region56: #{pallas_forward.11} parent=51 // loop_body
                %v241 = vld [vmem:[%s239] sm:%s232]
                %242 = vst [vmem:[%s240] sm:%s232] %v241
                %v243 = vld [vmem:[%s239 + $0x8] sm:%s232]
                %244 = vst [vmem:[%s240 + $0x4] sm:%s232] %v243
                %v245 = vld [vmem:[%s239 + $0x10] sm:%s232]
                %246 = vst [vmem:[%s240 + $0x8] sm:%s232] %v245
                %v247 = vld [vmem:[%s239 + $0x18] sm:%s232]
                %248 = vst [vmem:[%s240 + $0xc] sm:%s232] %v247
                %v249 = vld [vmem:[%s239 + $0x20] sm:%s232]
                %250 = vst [vmem:[%s240 + $0x10] sm:%s232] %v249
                %v251 = vld [vmem:[%s239 + $0x28] sm:%s232]
                %252 = vst [vmem:[%s240 + $0x14] sm:%s232] %v251
                %v253 = vld [vmem:[%s239 + $0x30] sm:%s232]
                %254 = vst [vmem:[%s240 + $0x18] sm:%s232] %v253
                %v255 = vld [vmem:[%s239 + $0x38] sm:%s232]
                %256 = vst [vmem:[%s240 + $0x1c] sm:%s232] %v255
              $region57: #{pallas_forward.11} parent=51 // loop_footer
                %s238 = sadd.s32 1, %s234
              $region58: #{pallas_forward.11} parent=51 // loop_footer_branch
                %233 = sbr.rel target = $region54
              $region59: #{pallas_forward.11} parent=51 // loop_exit
                _
            $region52: #{pallas_forward.11} parent=43 // pred_fallthru
              _
          $region44: #{pallas_forward.11} parent=39 // pred_fallthru
            _
          %293 = vnop
        $region40: #{pallas_forward.11} parent=31 // pred_fallthru
          _
      $region32: #{pallas_forward.11} parent=5 // pred_fallthru
        _
      %p294 = scmp.le.s32.totalorder 1, %s12
      %p295 = scmp.lt.s32.totalorder %s12, 3
      %p296 = pnand %p294, %p295
      %p297 = pneg %p296
      // Predicated region
      $region78: #{pallas_forward.11} parent=5 // pred_check
        _
      $region79: #{pallas_forward.11} parent=5 // pred_check_branch
        %299 = sbr.rel (%p296) target = $region81
      $region80: #{pallas_forward.11} parent=5 // pred_region
        %s300 = ssub.s32 %s12, 1
        %s301 = sand.u32 %s93, 1
        %s302 = sand.u32 %s93, 1
        %s303 = smul.addr %s302, 32
        %s304 = scalar_lea.vmem [#allocation2], %s303
        // Predicated region
        $region82: #{pallas_forward.11} parent=80 // pred_check
          %p305 = pneg %p106
        $region83: #{pallas_forward.11} parent=80 // pred_check_branch
          %307 = sbr.rel (%p305) target = $region85
        $region84: #{pallas_forward.11} parent=80 // pred_region
          _
        $region85: #{pallas_forward.11} parent=80 // pred_fallthru
          _
        %s308 = smul.u32 8, %s17
        %p309 = scmp.lt.s32.totalorder %s308, 15
        %s310 = scalar_select %p309, %s308, 15
        %s311 = smul.addr %s310, 4
        %s312 = scalar_lea.vmem %s0, %s311
        %p313 = pneg %p38
        %p314 = pneg %p35
        %p315 = pneg %p59
        %p316 = pneg %p56
        %p317 = pneg %p80
        %p318 = pneg %p77
        %s319 = sand.u32 %s93, 1
        %s320 = sand.u32 %s93, 1
        %s321 = smul.addr %s320, 32
        %s322 = scalar_lea.vmem [#allocation2], %s321
        %p323 = pneg %p106
        %p324 = pneg %p103
        %p325 = pneg %p127
        %p326 = pneg %p124
        %p327 = pneg %p148
        %p328 = pneg %p145
        %p329 = pneg %p174
        %p330 = pneg %p171
        %s331 = smul.u32 8, %s17
        %p332 = scmp.lt.s32.totalorder %s331, 15
        %s333 = scalar_select %p332, %s331, 15
        %s334 = smul.addr %s333, 8
        %s335 = scalar_lea.vmem %s6, %s334
        %s336 = smul.u32 8, %s17
        %p337 = scmp.lt.s32.totalorder %s336, 15
        %s338 = scalar_select %p337, %s336, 15
        %s339 = smul.addr %s338, 4
        %s340 = scalar_lea.vmem %s0, %s339
        %s341 = smul.u32 8, %s17
        %s342 = smul.u32 8, %s17
        %s343 = smul.u32 8, %s17
        %p344 = scmp.lt.s32.totalorder %s343, 15
        %s345 = scalar_select %p344, %s343, 15
        %s346 = smul.addr %s345, 8
        %s347 = scalar_lea.vmem %s6, %s346
        %s348 = smul.u32 8, %s17
        %v349 = vld [vmem:[%s340] sm:$0xf]
        %v350 = vld [vmem:[%s340 + $0x4] sm:$0xf]
        %v351 = vld [vmem:[%s340 + $0x8] sm:$0xf]
        %v352 = vld [vmem:[%s340 + $0xc] sm:$0xf]
        %v353 = vld [vmem:[%s340 + $0x10] sm:$0xf]
        %v354 = vld [vmem:[%s340 + $0x14] sm:$0xf]
        %v355 = vld [vmem:[%s340 + $0x18] sm:$0xf]
        %v356 = vld [vmem:[%s340 + $0x1c] sm:$0xf]
        %v357 = vunpack.c.l.bf16 %v349
        %v358 = vunpack.c.l.bf16 %v350
        %v359 = vunpack.c.l.bf16 %v351
        %v360 = vunpack.c.l.bf16 %v352
        %v361 = vunpack.c.l.bf16 %v353
        %v362 = vunpack.c.l.bf16 %v354
        %v363 = vunpack.c.l.bf16 %v355
        %v364 = vunpack.c.l.bf16 %v356
        %v365 = vld [vmem:[%s1] sm:$0x1]
        %v367 = vlaneseq
        %v368 = vshrl.u32 %v367, 7
        %v369 = vsub.s32 0, %v368
        %v370 = vrot.slane %v365, %v369
        %v372 = vmul.f32 %v357, %v370
        %v373 = vmul.f32 %v358, %v370
        %v374 = vmul.f32 %v359, %v370
        %v375 = vmul.f32 %v360, %v370
        %v376 = vmul.f32 %v361, %v370
        %v377 = vmul.f32 %v362, %v370
        %v378 = vmul.f32 %v363, %v370
        %v379 = vmul.f32 %v364, %v370
        %v380 = vld [vmem:[%s2] sm:$0x1]
        %v382 = vlaneseq
        %v383 = vshrl.u32 %v382, 7
        %v384 = vsub.s32 0, %v383
        %v385 = vrot.slane %v380, %v384
        %v387 = vadd.f32 %v372, %v385
        %v388 = vadd.f32 %v373, %v385
        %v389 = vadd.f32 %v374, %v385
        %v390 = vadd.f32 %v375, %v385
        %v391 = vadd.f32 %v376, %v385
        %v392 = vadd.f32 %v377, %v385
        %v393 = vadd.f32 %v378, %v385
        %v394 = vadd.f32 %v379, %v385
        %v395 = vmax.f32 %v387, 0.0
        %v396 = vmax.f32 %v388, 0.0
        %v397 = vmax.f32 %v389, 0.0
        %v398 = vmax.f32 %v390, 0.0
        %v399 = vmax.f32 %v391, 0.0
        %v400 = vmax.f32 %v392, 0.0
        %v401 = vmax.f32 %v393, 0.0
        %v402 = vmax.f32 %v394, 0.0
        %v403 = vld [vmem:[%s304] sm:$0xf]
        %v404 = vld [vmem:[%s304 + $0x4] sm:$0xf]
        %v405 = vld [vmem:[%s304 + $0x8] sm:$0xf]
        %v406 = vld [vmem:[%s304 + $0xc] sm:$0xf]
        %v407 = vld [vmem:[%s304 + $0x10] sm:$0xf]
        %v408 = vld [vmem:[%s304 + $0x14] sm:$0xf]
        %v409 = vld [vmem:[%s304 + $0x18] sm:$0xf]
        %v410 = vld [vmem:[%s304 + $0x1c] sm:$0xf]
        %v411 = vunpack.c.l.bf16 %v403
        %v412 = vunpack.c.l.bf16 %v404
        %v413 = vunpack.c.l.bf16 %v405
        %v414 = vunpack.c.l.bf16 %v406
        %v415 = vunpack.c.l.bf16 %v407
        %v416 = vunpack.c.l.bf16 %v408
        %v417 = vunpack.c.l.bf16 %v409
        %v418 = vunpack.c.l.bf16 %v410
        %v419 = vld [vmem:[%s4] sm:$0x1]
        %v421 = vlaneseq
        %v422 = vshrl.u32 %v421, 7
        %v423 = vsub.s32 0, %v422
        %v424 = vrot.slane %v419, %v423
        %v426 = vmul.f32 %v411, %v424
        %v427 = vmul.f32 %v412, %v424
        %v428 = vmul.f32 %v413, %v424
        %v429 = vmul.f32 %v414, %v424
        %v430 = vmul.f32 %v415, %v424
        %v431 = vmul.f32 %v416, %v424
        %v432 = vmul.f32 %v417, %v424
        %v433 = vmul.f32 %v418, %v424
        %v434 = vld [vmem:[%s5] sm:$0x1]
        %v436 = vlaneseq
        %v437 = vshrl.u32 %v436, 7
        %v438 = vsub.s32 0, %v437
        %v439 = vrot.slane %v434, %v438
        %v441 = vadd.f32 %v426, %v439
        %v442 = vadd.f32 %v427, %v439
        %v443 = vadd.f32 %v428, %v439
        %v444 = vadd.f32 %v429, %v439
        %v445 = vadd.f32 %v430, %v439
        %v446 = vadd.f32 %v431, %v439
        %v447 = vadd.f32 %v432, %v439
        %v448 = vadd.f32 %v433, %v439
        %v449 = vadd.f32 %v395, %v441
        %v450 = vadd.f32 %v396, %v442
        %v451 = vadd.f32 %v397, %v443
        %v452 = vadd.f32 %v398, %v444
        %v453 = vadd.f32 %v399, %v445
        %v454 = vadd.f32 %v400, %v446
        %v455 = vadd.f32 %v401, %v447
        %v456 = vadd.f32 %v402, %v448
        %v457 = vmax.f32 %v449, 0.0
        %v458 = vmax.f32 %v450, 0.0
        %v459 = vmax.f32 %v451, 0.0
        %v460 = vmax.f32 %v452, 0.0
        %v461 = vmax.f32 %v453, 0.0
        %v462 = vmax.f32 %v454, 0.0
        %v463 = vmax.f32 %v455, 0.0
        %v464 = vmax.f32 %v456, 0.0
        %465 = vst [vmem:[%s347] sm:$0xff] %v457
        %466 = vst [vmem:[%s347 + $0x8] sm:$0xff] %v458
        %467 = vst [vmem:[%s347 + $0x10] sm:$0xff] %v459
        %468 = vst [vmem:[%s347 + $0x18] sm:$0xff] %v460
        %469 = vst [vmem:[%s347 + $0x20] sm:$0xff] %v461
        %470 = vst [vmem:[%s347 + $0x28] sm:$0xff] %v462
        %471 = vst [vmem:[%s347 + $0x30] sm:$0xff] %v463
        %472 = vst [vmem:[%s347 + $0x38] sm:$0xff] %v464
        %s473 = smul.u32 8, %s17
        %p474 = scmp.lt.s32.totalorder %s473, 15
        %s475 = scalar_select %p474, %s473, 15
        %s476 = smul.addr %s475, 8
        %s477 = scalar_lea.vmem %s6, %s476
        // Predicated region
        $region86: #{pallas_forward.11} parent=80 // pred_check
          %p478 = pneg %p171
        $region87: #{pallas_forward.11} parent=80 // pred_check_branch
          %480 = sbr.rel (%p478) target = $region89
        $region88: #{pallas_forward.11} parent=80 // pred_region
          %s481 = smul.u32 8, %s17
        $region89: #{pallas_forward.11} parent=80 // pred_fallthru
          _
      $region81: #{pallas_forward.11} parent=5 // pred_fallthru
        _
      %p482 = scmp.le.s32.totalorder 2, %s12
      // Predicated region
      $region90: #{pallas_forward.11} parent=5 // pred_check
        %p483 = pneg %p482
      $region91: #{pallas_forward.11} parent=5 // pred_check_branch
        %485 = sbr.rel (%p483) target = $region93
      $region92: #{pallas_forward.11} parent=5 // pred_region
        %s486 = ssub.s32 %s12, 2
        // Predicated region
        $region94: #{pallas_forward.11} parent=92 // pred_check
          %p487 = pneg %p177
        $region95: #{pallas_forward.11} parent=92 // pred_check_branch
          %489 = sbr.rel (%p487) target = $region97
        $region96: #{pallas_forward.11} parent=92 // pred_region
          %s490 = smul.u32 8, %s18
          %p491 = scmp.lt.s32.totalorder %s490, 15
          %s492 = scalar_select %p491, %s490, 15
          %s493 = smul.addr %s492, 8
          %s494 = scalar_lea.vmem %s6, %s493
        $region97: #{pallas_forward.11} parent=92 // pred_fallthru
          _
      $region93: #{pallas_forward.11} parent=5 // pred_fallthru
        _
    $region6: #{pallas_forward.11} parent=1 // loop_footer
      %s16 = sadd.s32 1, %s12
    $region7: #{pallas_forward.11} parent=1 // loop_footer_branch
      %11 = sbr.rel target = $region3
    $region8: #{pallas_forward.11} parent=1 // loop_exit
      _

// kernel: pallas_forward.10
$region0: #{pallas_forward.10}
  #allocation0 [shape = 'u32[]', space=smem, size = 0x4, offset = 0x4, fixed_abs, tag = 'smem constant byte address 0x4 - core index']
  #allocation1 [shape = 'u32[144,128]{1,0:T(1,128)}', space=vmem, size = 0x12000, scoped, tag = 'internal scratch']
  %s0 = inlined_call_operand.vmem [shape: bf16[128,72], index: 0, kind: input, shape index: {}]
  %s1 = inlined_call_operand.vmem [shape: bf16[72,128], index: 1, kind: input, shape index: {}]
  %s2 = inlined_call_operand.vmem [shape: bf16[128,128], index: 2, kind: output, shape index: {0}]
  %s3 = inlined_call_operand.vmem [shape: f32[16,128], index: 3, kind: output, shape index: {1}]
  %4 = xla_tuple %s2, %s3
  %s5 = sld [smem:[#allocation0]]
  $region49: #{pallas_forward.10} parent=0
    _
  %s7 = ssub.s32 1, %s5
  %s8 = scalar_select 0, %s7, %s5
  loop: start=0, step=1, limit=4
  $region2: #{pallas_forward.10} parent=0 // loop_pre_header
    _
  $region3: #{pallas_forward.10} parent=0 // loop_header
    %s10 = sphi 0, %s14
    %p11 = scmp.ge.s32.totalorder %s10, 4
    %s20 = sphi 0, %s22
    %s23 = sphi 0, %s20
    %s24 = sphi 0, %s23
    %s40 = sphi 0, %s24
    %s44 = sphi 0, %s44
    %s46 = sphi 0, %s44
    %s47 = sphi 0, %s46
    %s61 = sphi 0, %s47
    %s67 = sphi 0, %s69
    %s70 = sphi 0, %s67
    %s71 = sphi 0, %s70
    %s87 = sphi 0, %s71
    %s93 = sphi 0, %s95
    %s96 = sphi 0, %s93
    %s97 = sphi 0, %s96
    %s113 = sphi 0, %s97
  $region4: #{pallas_forward.10} parent=0 // loop_header_branch
    %13 = sbr.rel (%p11) target = $region8
  $region5: #{pallas_forward.10} parent=0 // loop_body
    %s15 = ssub.s32 %s10, 1
    %s16 = ssub.s32 %s10, 2
    %s17 = sadd.s32 %s10, 1
    %s18 = ssub.s32 %s10, %s17
    %p19 = scmp.eq.s32.totalorder %s18, 0
    %s21 = sadd.s32 %s20, 1
    %s22 = scalar_select %p19, %s20, %s21
    %p25 = pneg %p19
    %p26 = scmp.eq.s32.totalorder %s10, 1
    %p27 = por %p25, %p26
    %p28 = scmp.ne.s32.totalorder %s20, %s23
    %p29 = scmp.eq.s32.totalorder %s10, 0
    %p30 = por %p28, %p29
    %p31 = scmp.ne.s32.totalorder %s20, %s23
    %p32 = scmp.eq.s32.totalorder %s15, 1
    %p33 = por %p31, %p32
    %p34 = scmp.ne.s32.totalorder %s23, %s24
    %p35 = scmp.eq.s32.totalorder %s15, 0
    %p36 = por %p34, %p35
    %p37 = scmp.ne.s32.totalorder %s23, %s24
    %p38 = scmp.eq.s32.totalorder %s16, 1
    %p39 = por %p37, %p38
    %p41 = scmp.ne.s32.totalorder %s24, %s40
    %p42 = scmp.eq.s32.totalorder %s16, 0
    %p43 = por %p41, %p42
    %s45 = sadd.s32 %s44, 1
    %p48 = scmp.eq.s32.totalorder %s10, 1
    %p49 = scmp.ne.s32.totalorder %s44, %s46
    %p50 = scmp.eq.s32.totalorder %s10, 0
    %p51 = por %p49, %p50
    %p52 = scmp.ne.s32.totalorder %s44, %s46
    %p53 = scmp.eq.s32.totalorder %s15, 1
    %p54 = por %p52, %p53
    %p55 = scmp.ne.s32.totalorder %s46, %s47
    %p56 = scmp.eq.s32.totalorder %s15, 0
    %p57 = por %p55, %p56
    %p58 = scmp.ne.s32.totalorder %s46, %s47
    %p59 = scmp.eq.s32.totalorder %s16, 1
    %p60 = por %p58, %p59
    %p62 = scmp.ne.s32.totalorder %s47, %s61
    %p63 = scmp.eq.s32.totalorder %s16, 0
    %p64 = por %p62, %p63
    %s65 = ssub.s32 %s10, %s17
    %p66 = scmp.eq.s32.totalorder %s65, 0
    %s68 = sadd.s32 %s67, 1
    %s69 = scalar_select %p66, %s67, %s68
    %p72 = pneg %p66
    %p73 = scmp.eq.s32.totalorder %s10, 1
    %p74 = por %p72, %p73
    %p75 = scmp.ne.s32.totalorder %s67, %s70
    %p76 = scmp.eq.s32.totalorder %s10, 0
    %p77 = por %p75, %p76
    %p78 = scmp.ne.s32.totalorder %s67, %s70
    %p79 = scmp.eq.s32.totalorder %s15, 1
    %p80 = por %p78, %p79
    %p81 = scmp.ne.s32.totalorder %s70, %s71
    %p82 = scmp.eq.s32.totalorder %s15, 0
    %p83 = por %p81, %p82
    %p84 = scmp.ne.s32.totalorder %s70, %s71
    %p85 = scmp.eq.s32.totalorder %s16, 1
    %p86 = por %p84, %p85
    %p88 = scmp.ne.s32.totalorder %s71, %s87
    %p89 = scmp.eq.s32.totalorder %s16, 0
    %p90 = por %p88, %p89
    %s91 = ssub.s32 %s10, %s17
    %p92 = scmp.eq.s32.totalorder %s91, 0
    %s94 = sadd.s32 %s93, 1
    %s95 = scalar_select %p92, %s93, %s94
    %p98 = pneg %p92
    %p99 = scmp.eq.s32.totalorder %s10, 1
    %p100 = por %p98, %p99
    %p101 = scmp.ne.s32.totalorder %s93, %s96
    %p102 = scmp.eq.s32.totalorder %s10, 0
    %p103 = por %p101, %p102
    %p104 = scmp.ne.s32.totalorder %s93, %s96
    %p105 = scmp.eq.s32.totalorder %s15, 1
    %p106 = por %p104, %p105
    %p107 = scmp.ne.s32.totalorder %s96, %s97
    %p108 = scmp.eq.s32.totalorder %s15, 0
    %p109 = por %p107, %p108
    %p110 = scmp.ne.s32.totalorder %s96, %s97
    %p111 = scmp.eq.s32.totalorder %s16, 1
    %p112 = por %p110, %p111
    %p114 = scmp.ne.s32.totalorder %s97, %s113
    %p115 = scmp.eq.s32.totalorder %s16, 0
    %p116 = por %p114, %p115
    %p117 = scmp.le.s32.totalorder 1, %s10
    %p118 = scmp.lt.s32.totalorder %s10, 3
    %p119 = pnand %p117, %p118
    %p120 = pneg %p119
    // Predicated region
    $region9: #{pallas_forward.10} parent=5 // pred_check
      _
    $region10: #{pallas_forward.10} parent=5 // pred_check_branch
      %122 = sbr.rel (%p119) target = $region12
    $region11: #{pallas_forward.10} parent=5 // pred_region
      %s123 = ssub.s32 %s10, 1
      // Predicated region
      $region13: #{pallas_forward.10} parent=11 // pred_check
        %p124 = pneg %p57
      $region14: #{pallas_forward.10} parent=11 // pred_check_branch
        %126 = sbr.rel (%p124) target = $region16
      $region15: #{pallas_forward.10} parent=11 // pred_region
        _
      $region16: #{pallas_forward.10} parent=11 // pred_fallthru
        _
    $region12: #{pallas_forward.10} parent=5 // pred_fallthru
      _
    %p127 = scmp.lt.s32.totalorder %s10, 2
    // Predicated region
    $region17: #{pallas_forward.10} parent=5 // pred_check
      %p128 = pneg %p127
    $region18: #{pallas_forward.10} parent=5 // pred_check_branch
      %130 = sbr.rel (%p128) target = $region20
    $region19: #{pallas_forward.10} parent=5 // pred_region
      // Predicated region
      $region21: #{pallas_forward.10} parent=19 // pred_check
        %p131 = pneg %p30
      $region22: #{pallas_forward.10} parent=19 // pred_check_branch
        %133 = sbr.rel (%p131) target = $region24
      $region23: #{pallas_forward.10} parent=19 // pred_region
        %s134 = smul.u32 8, %s10
        %p135 = scmp.lt.s32.totalorder %s134, 15
        %s136 = scalar_select %p135, %s134, 15
        %s137 = smul.addr %s136, 4
        %s138 = scalar_lea.vmem %s0, %s137
        %s139 = smul.u32 8, %s10
      $region24: #{pallas_forward.10} parent=19 // pred_fallthru
        _
    $region20: #{pallas_forward.10} parent=5 // pred_fallthru
      _
    %p140 = scmp.le.s32.totalorder 1, %s10
    %p141 = scmp.lt.s32.totalorder %s10, 3
    %p142 = pnand %p140, %p141
    %p143 = pneg %p142
    // Predicated region
    $region25: #{pallas_forward.10} parent=5 // pred_check
      _
    $region26: #{pallas_forward.10} parent=5 // pred_check_branch
      %145 = sbr.rel (%p142) target = $region28
    $region27: #{pallas_forward.10} parent=5 // pred_region
      %s146 = ssub.s32 %s10, 1
      %s147 = smul.u32 8, %s15
      %p148 = scmp.lt.s32.totalorder %s147, 15
      %s149 = scalar_select %p148, %s147, 15
      %s150 = smul.addr %s149, 4
      %s151 = scalar_lea.vmem %s0, %s150
      %p152 = pneg %p36
      %p153 = pneg %p33
      %p154 = pneg %p57
      %p155 = pneg %p54
      %p156 = pneg %p83
      %p157 = pneg %p80
      %s158 = smul.u32 8, %s15
      %p159 = scmp.lt.s32.totalorder %s158, 15
      %s160 = scalar_select %p159, %s158, 15
      %s161 = smul.addr %s160, 4
      %s162 = scalar_lea.vmem %s2, %s161
      %p163 = pneg %p109
      %p164 = pneg %p106
      %p165 = scmp.lt.s32.totalorder %s15, 1
      %s166 = scalar_select %p165, %s15, 1
      %s167 = smul.addr %s166, 8
      %s168 = scalar_lea.vmem %s3, %s167
      %s169 = smul.u32 8, %s15
      %p170 = scmp.lt.s32.totalorder %s169, 15
      %s171 = scalar_select %p170, %s169, 15
      %s172 = smul.addr %s171, 4
      %s173 = scalar_lea.vmem %s0, %s172
      %s174 = smul.u32 8, %s15
      %s175 = smul.u32 8, %s15
      %p176 = scmp.lt.s32.totalorder %s175, 15
      %s177 = scalar_select %p176, %s175, 15
      %s178 = smul.addr %s177, 4
      %s179 = scalar_lea.vmem %s2, %s178
      %s180 = smul.u32 8, %s15
      %p181 = scmp.lt.s32.totalorder %s15, 1
      %s182 = scalar_select %p181, %s15, 1
      %s183 = smul.addr %s182, 8
      %s184 = scalar_lea.vmem %s3, %s183
      %v186 = vld [vmem:[%s173] sm:$0xf]
      %v187 = vld [vmem:[%s173 + $0x4] sm:$0xf]
      %v188 = vld [vmem:[%s173 + $0x8] sm:$0xf]
      %v189 = vld [vmem:[%s173 + $0xc] sm:$0xf]
      %v190 = vld [vmem:[%s173 + $0x10] sm:$0xf]
      %v191 = vld [vmem:[%s173 + $0x14] sm:$0xf]
      %v192 = vld [vmem:[%s173 + $0x18] sm:$0xf]
      %v193 = vld [vmem:[%s173 + $0x1c] sm:$0xf]
      %v194 = vld [vmem:[%s1] sm:$0xf]
      %v195 = vld [vmem:[%s1 + $0x4] sm:$0xf]
      %v196 = vld [vmem:[%s1 + $0x8] sm:$0xf]
      %v197 = vld [vmem:[%s1 + $0xc] sm:$0xf]
      %v198 = vld [vmem:[%s1 + $0x10] sm:$0xf]
      %v199 = vld [vmem:[%s1 + $0x14] sm:$0xf]
      %v200 = vld [vmem:[%s1 + $0x18] sm:$0xf]
      %v201 = vld [vmem:[%s1 + $0x1c] sm:$0xf]
      %v202 = vld [vmem:[%s1 + $0x20] sm:$0xf]
      %v211 = vunpack.c.l.b16 %v186
      %v212 = vunpack.c.l.b16 %v187
      %v213 = vunpack.c.l.b16 %v188
      %v214 = vunpack.c.l.b16 %v189
      %v215 = vunpack.c.l.b16 %v190
      %v216 = vunpack.c.l.b16 %v191
      %v217 = vunpack.c.l.b16 %v192
      %v218 = vunpack.c.l.b16 %v193
      %v219 = vpack.c.b16 %v212, %v211
      %v220 = vpack.c.b16 %v214, %v213
      %v221 = vpack.c.b16 %v216, %v215
      %v222 = vpack.c.b16 %v218, %v217
      %v232 = vunpack.c.l.b16 %v194
      %v233 = vunpack.c.l.b16 %v195
      %v234 = vunpack.c.l.b16 %v196
      %v235 = vunpack.c.l.b16 %v197
      %v236 = vunpack.c.l.b16 %v198
      %v237 = vunpack.c.l.b16 %v199
      %v238 = vunpack.c.l.b16 %v200
      %v239 = vunpack.c.l.b16 %v201
      %v240 = vunpack.c.l.b16 %v202
      %v241 = vpack.c.b16 %v233, %v232
      %v242 = vpack.c.b16 %v235, %v234
      %v243 = vpack.c.b16 %v237, %v236
      %v244 = vpack.c.b16 %v239, %v238
      %v245 = vpack.c.b16 %v240, %v240
      %vm250 = vcmask 588800
      %v252 = vsel %vm250, %v219, 0
      %v255 = vsel %vm250, %v220, 0
      %v258 = vsel %vm250, %v221, 0
      %v261 = vsel %vm250, %v222, 0
      %vm263 = vcmask 1043456
      %v265 = vsel %vm263, %v245, 0
      %267 = vmatprep.subr.bf16.mxu0 0
      %268 = vmatpush1.bf16.msra.mxu0 0
      %269 = vmatprep.subr.bf16.mxu0 0
      %270 = vmatpush1.bf16.msra.mxu0 0
      %271 = vmatprep.subr.bf16.mxu0 0
      %272 = vmatpush1.bf16.msra.mxu0 0
      %273 = vmatprep.subr.bf16.mxu0 0
      %274 = vmatpush1.bf16.msra.mxu0 %v265
      %275 = vmatprep.subr.bf16.mxu0 0
      %276 = vmatpush1.bf16.msra.mxu0 %v244
      %277 = vmatprep.subr.bf16.mxu0 0
      %278 = vmatpush1.bf16.msra.mxu0 %v243
      %279 = vmatprep.subr.bf16.mxu0 0
      %280 = vmatpush1.bf16.msra.mxu0 %v242
      %281 = vmatprep.subr.bf16.mxu0 0
      %282 = vmatpush1.bf16.msra.mxu0 %v241
      %283 = vmatprep.subr.bf16.mxu0 0
      %284 = vmatpush2.bf16.msra.mxu0 0
      %285 = vmatprep.subr.bf16.mxu0 0
      %286 = vmatpush2.bf16.msra.mxu0 0
      %287 = vmatprep.subr.bf16.mxu0 0
      %288 = vmatpush2.bf16.msra.mxu0 0
      %289 = vmatprep.subr.bf16.mxu0 0
      %290 = vmatpush2.bf16.msra.mxu0 0
      %291 = vmatprep.subr.bf16.mxu0 0
      %292 = vmatpush2.bf16.msra.mxu0 0
      %293 = vmatprep.subr.bf16.mxu0 0
      %294 = vmatpush2.bf16.msra.mxu0 0
      %295 = vmatprep.subr.bf16.mxu0 0
      %296 = vmatpush2.bf16.msra.mxu0 0
      %297 = vmatprep.subr.bf16.mxu0 0
      %298 = vmatpush2.bf16.msra.mxu0 0
      %299 = vmatprep.mubr.bf16.mxu0 0
      %300 = vmatmul.mubr.bf16.gmra.mxu0 %v252
      %v301 = vpop.f32.mrf.mxu0
      %v302 = vadd.f32 0.0, %v301
      %v303 = vpop.f32.mrf.mxu0
      %v304 = vpop.f32.mrf.mxu0
      %v305 = vadd.f32 0.0, %v304
      %v306 = vpop.f32.mrf.mxu0
      %307 = vmatprep.mubr.bf16.mxu0 0
      %308 = vmatmul.mubr.bf16.gmra.mxu0 %v255
      %v309 = vpop.f32.mrf.mxu0
      %v310 = vadd.f32 0.0, %v309
      %v311 = vpop.f32.mrf.mxu0
      %v312 = vpop.f32.mrf.mxu0
      %v313 = vadd.f32 0.0, %v312
      %v314 = vpop.f32.mrf.mxu0
      %315 = vmatprep.mubr.bf16.mxu0 0
      %316 = vmatmul.mubr.bf16.gmra.mxu0 %v258
      %v317 = vpop.f32.mrf.mxu0
      %v318 = vadd.f32 0.0, %v317
      %v319 = vpop.f32.mrf.mxu0
      %v320 = vpop.f32.mrf.mxu0
      %v321 = vadd.f32 0.0, %v320
      %v322 = vpop.f32.mrf.mxu0
      %323 = vmatprep.mubr.bf16.mxu0 0
      %324 = vmatmul.mubr.bf16.gmra.mxu0 %v261
      %v325 = vpop.f32.mrf.mxu0
      %v326 = vadd.f32 0.0, %v325
      %v327 = vpop.f32.mrf.mxu0
      %v328 = vpop.f32.mrf.mxu0
      %v329 = vadd.f32 0.0, %v328
      %v330 = vpop.f32.mrf.mxu0
      %331 = vdwg.mxu0
      %v332 = vpack.c.bf16 %v305, %v302
      %v333 = vpack.c.bf16 %v313, %v310
      %v334 = vpack.c.bf16 %v321, %v318
      %v335 = vpack.c.bf16 %v329, %v326
      %v340 = vunpack.c.l.b16 %v332
      %v341 = vunpack.c.h.b16 %v332
      %v342 = vunpack.c.l.b16 %v333
      %v343 = vunpack.c.h.b16 %v333
      %v344 = vunpack.c.l.b16 %v334
      %v345 = vunpack.c.h.b16 %v334
      %v346 = vunpack.c.l.b16 %v335
      %v347 = vunpack.c.h.b16 %v335
      %v348 = vpack.c.b16 %v340, %v340
      %v349 = vpack.c.b16 %v341, %v341
      %v350 = vpack.c.b16 %v342, %v342
      %v351 = vpack.c.b16 %v343, %v343
      %v352 = vpack.c.b16 %v344, %v344
      %v353 = vpack.c.b16 %v345, %v345
      %v354 = vpack.c.b16 %v346, %v346
      %v355 = vpack.c.b16 %v347, %v347
      %364 = vst [vmem:[%s179] sm:$0xf] %v348
      %365 = vst [vmem:[%s179 + $0x4] sm:$0xf] %v349
      %366 = vst [vmem:[%s179 + $0x8] sm:$0xf] %v350
      %367 = vst [vmem:[%s179 + $0xc] sm:$0xf] %v351
      %368 = vst [vmem:[%s179 + $0x10] sm:$0xf] %v352
      %369 = vst [vmem:[%s179 + $0x14] sm:$0xf] %v353
      %370 = vst [vmem:[%s179 + $0x18] sm:$0xf] %v354
      %371 = vst [vmem:[%s179 + $0x1c] sm:$0xf] %v355
      %v372 = vlaneseq
      %v373 = vshrl.u32 %v372, 7
      %vm374 = vcmp.eq.s32.totalorder %v373, 0
      %v375 = vsel %vm374, 1, 0
      %v376 = vcvt.s32.f32 %v375
      %vm377 = vcmp.eq.s32.totalorder %v373, 1
      %v378 = vsel %vm377, 1, 0
      %v379 = vcvt.s32.f32 %v378
      %v380 = vmul.f32 %v302, %v302
      %v381 = vmul.f32 %v305, %v305
      %v382 = vmul.f32 %v310, %v310
      %v383 = vmul.f32 %v313, %v313
      %v384 = vmul.f32 %v318, %v318
      %v385 = vmul.f32 %v321, %v321
      %v386 = vmul.f32 %v326, %v326
      %v387 = vmul.f32 %v329, %v329
      %vm388 = vcmask 523264
      %v390 = vsel %vm388, %v379, 0
      %392 = vmatprep.subr.mxu0 0.0
      %393 = vmatpush1.msra.mxu0 0.0
      %394 = vmatprep.subr.mxu0 0.0
      %395 = vmatpush1.msra.mxu0 0.0
      %396 = vmatprep.subr.mxu0 0.0
      %397 = vmatpush1.msra.mxu0 0.0
      %398 = vmatprep.subr.mxu0 0.0
      %399 = vmatpush1.msra.mxu0 0.0
      %400 = vmatprep.subr.mxu0 0.0
      %401 = vmatpush1.msra.mxu0 0.0
      %402 = vmatprep.subr.mxu0 0.0
      %403 = vmatpush1.msra.mxu0 0.0
      %404 = vmatprep.subr.mxu0 0.0
      %405 = vmatpush1.msra.mxu0 0.0
      %406 = vmatprep.subr.mxu0 0.0
      %407 = vmatpush1.msra.mxu0 0.0
      %408 = vmatprep.subr.mxu0 0.0
      %409 = vmatpush1.msra.mxu0 %v387
      %410 = vmatprep.subr.mxu0 0.0
      %411 = vmatpush1.msra.mxu0 %v386
      %412 = vmatprep.subr.mxu0 0.0
      %413 = vmatpush1.msra.mxu0 %v385
      %414 = vmatprep.subr.mxu0 0.0
      %415 = vmatpush1.msra.mxu0 %v384
      %416 = vmatprep.subr.mxu0 0.0
      %417 = vmatpush1.msra.mxu0 %v383
      %418 = vmatprep.subr.mxu0 0.0
      %419 = vmatpush1.msra.mxu0 %v382
      %420 = vmatprep.subr.mxu0 0.0
      %421 = vmatpush1.msra.mxu0 %v381
      %422 = vmatprep.subr.mxu0 0.0
      %423 = vmatpush1.msra.mxu0 %v380
      %424 = vmatprep.subr.mxu0 0.0
      %425 = vmatpush2.msra.mxu0 0.0
      %426 = vmatprep.subr.mxu0 0.0
      %427 = vmatpush2.msra.mxu0 0.0
      %428 = vmatprep.subr.mxu0 0.0
      %429 = vmatpush2.msra.mxu0 0.0
      %430 = vmatprep.subr.mxu0 0.0
      %431 = vmatpush2.msra.mxu0 0.0
      %432 = vmatprep.subr.mxu0 0.0
      %433 = vmatpush2.msra.mxu0 0.0
      %434 = vmatprep.subr.mxu0 0.0
      %435 = vmatpush2.msra.mxu0 0.0
      %436 = vmatprep.subr.mxu0 0.0
      %437 = vmatpush2.msra.mxu0 0.0
      %438 = vmatprep.subr.mxu0 0.0
      %439 = vmatpush2.msra.mxu0 0.0
      %440 = vmatprep.subr.mxu0 0.0
      %441 = vmatpush2.msra.mxu0 0.0
      %442 = vmatprep.subr.mxu0 0.0
      %443 = vmatpush2.msra.mxu0 0.0
      %444 = vmatprep.subr.mxu0 0.0
      %445 = vmatpush2.msra.mxu0 0.0
      %446 = vmatprep.subr.mxu0 0.0
      %447 = vmatpush2.msra.mxu0 0.0
      %448 = vmatprep.subr.mxu0 0.0
      %449 = vmatpush2.msra.mxu0 0.0
      %450 = vmatprep.subr.mxu0 0.0
      %451 = vmatpush2.msra.mxu0 0.0
      %452 = vmatprep.subr.mxu0 0.0
      %453 = vmatpush2.msra.mxu0 0.0
      %454 = vmatprep.subr.mxu0 0.0
      %455 = vmatpush2.msra.mxu0 0.0
      %456 = vmatprep.mubr.f32.mxu0 0.0
      %457 = vmatmul.mubr.f32.gmra.mxu0 %v390
      %v458 = vpop.f32.mrf.mxu0
      %v459 = vadd.f32 0.0, %v458
      %v460 = vpop.f32.mrf.mxu0
      %461 = vdwg.mxu0
      %v463 = vsel %vm388, %v376, 0
      %465 = vmatprep.subr.mxu0 0.0
      %466 = vmatpush1.msra.mxu0 0.0
      %467 = vmatprep.subr.mxu0 0.0
      %468 = vmatpush1.msra.mxu0 0.0
      %469 = vmatprep.subr.mxu0 0.0
      %470 = vmatpush1.msra.mxu0 0.0
      %471 = vmatprep.subr.mxu0 0.0
      %472 = vmatpush1.msra.mxu0 0.0
      %473 = vmatprep.subr.mxu0 0.0
      %474 = vmatpush1.msra.mxu0 0.0
      %475 = vmatprep.subr.mxu0 0.0
      %476 = vmatpush1.msra.mxu0 0.0
      %477 = vmatprep.subr.mxu0 0.0
      %478 = vmatpush1.msra.mxu0 0.0
      %479 = vmatprep.subr.mxu0 0.0
      %480 = vmatpush1.msra.mxu0 0.0
      %481 = vmatprep.subr.mxu0 0.0
      %482 = vmatpush1.msra.mxu0 %v329
      %483 = vmatprep.subr.mxu0 0.0
      %484 = vmatpush1.msra.mxu0 %v326
      %485 = vmatprep.subr.mxu0 0.0
      %486 = vmatpush1.msra.mxu0 %v321
      %487 = vmatprep.subr.mxu0 0.0
      %488 = vmatpush1.msra.mxu0 %v318
      %489 = vmatprep.subr.mxu0 0.0
      %490 = vmatpush1.msra.mxu0 %v313
      %491 = vmatprep.subr.mxu0 0.0
      %492 = vmatpush1.msra.mxu0 %v310
      %493 = vmatprep.subr.mxu0 0.0
      %494 = vmatpush1.msra.mxu0 %v305
      %495 = vmatprep.subr.mxu0 0.0
      %496 = vmatpush1.msra.mxu0 %v302
      %497 = vmatprep.subr.mxu0 0.0
      %498 = vmatpush2.msra.mxu0 0.0
      %499 = vmatprep.subr.mxu0 0.0
      %500 = vmatpush2.msra.mxu0 0.0
      %501 = vmatprep.subr.mxu0 0.0
      %502 = vmatpush2.msra.mxu0 0.0
      %503 = vmatprep.subr.mxu0 0.0
      %504 = vmatpush2.msra.mxu0 0.0
      %505 = vmatprep.subr.mxu0 0.0
      %506 = vmatpush2.msra.mxu0 0.0
      %507 = vmatprep.subr.mxu0 0.0
      %508 = vmatpush2.msra.mxu0 0.0
      %509 = vmatprep.subr.mxu0 0.0
      %510 = vmatpush2.msra.mxu0 0.0
      %511 = vmatprep.subr.mxu0 0.0
      %512 = vmatpush2.msra.mxu0 0.0
      %513 = vmatprep.subr.mxu0 0.0
      %514 = vmatpush2.msra.mxu0 0.0
      %515 = vmatprep.subr.mxu0 0.0
      %516 = vmatpush2.msra.mxu0 0.0
      %517 = vmatprep.subr.mxu0 0.0
      %518 = vmatpush2.msra.mxu0 0.0
      %519 = vmatprep.subr.mxu0 0.0
      %520 = vmatpush2.msra.mxu0 0.0
      %521 = vmatprep.subr.mxu0 0.0
      %522 = vmatpush2.msra.mxu0 0.0
      %523 = vmatprep.subr.mxu0 0.0
      %524 = vmatpush2.msra.mxu0 0.0
      %525 = vmatprep.subr.mxu0 0.0
      %526 = vmatpush2.msra.mxu0 0.0
      %527 = vmatprep.subr.mxu0 0.0
      %528 = vmatpush2.msra.mxu0 0.0
      %529 = vmatprep.mubr.f32.mxu0 0.0
      %530 = vmatmul.mubr.f32.gmra.mxu0 %v463
      %v531 = vpop.f32.mrf.mxu0
      %v532 = vadd.f32 %v459, %v531
      %v533 = vpop.f32.mrf.mxu0
      %534 = vdwg.mxu0
      %535 = vst [vmem:[%s184] sm:$0xff] %v532
      %s536 = smul.u32 8, %s15
      %p537 = scmp.lt.s32.totalorder %s536, 15
      %s538 = scalar_select %p537, %s536, 15
      %s539 = smul.addr %s538, 4
      %s540 = scalar_lea.vmem %s2, %s539
      %p541 = scmp.lt.s32.totalorder %s15, 1
      %s542 = scalar_select %p541, %s15, 1
      %s543 = smul.addr %s542, 8
      %s544 = scalar_lea.vmem %s3, %s543
      // Predicated region
      $region29: #{pallas_forward.10} parent=27 // pred_check
        %p545 = pneg %p80
      $region30: #{pallas_forward.10} parent=27 // pred_check_branch
        %547 = sbr.rel (%p545) target = $region32
      $region31: #{pallas_forward.10} parent=27 // pred_region
        %s548 = smul.u32 8, %s15
      $region32: #{pallas_forward.10} parent=27 // pred_fallthru
        _
      // Predicated region
      $region33: #{pallas_forward.10} parent=27 // pred_check
        %p549 = pneg %p106
      $region34: #{pallas_forward.10} parent=27 // pred_check_branch
        %551 = sbr.rel (%p549) target = $region36
      $region35: #{pallas_forward.10} parent=27 // pred_region
        _
      $region36: #{pallas_forward.10} parent=27 // pred_fallthru
        _
    $region28: #{pallas_forward.10} parent=5 // pred_fallthru
      _
    %p552 = scmp.le.s32.totalorder 2, %s10
    // Predicated region
    $region37: #{pallas_forward.10} parent=5 // pred_check
      %p553 = pneg %p552
    $region38: #{pallas_forward.10} parent=5 // pred_check_branch
      %555 = sbr.rel (%p553) target = $region40
    $region39: #{pallas_forward.10} parent=5 // pred_region
      %s556 = ssub.s32 %s10, 2
      // Predicated region
      $region41: #{pallas_forward.10} parent=39 // pred_check
        %p557 = pneg %p86
      $region42: #{pallas_forward.10} parent=39 // pred_check_branch
        %559 = sbr.rel (%p557) target = $region44
      $region43: #{pallas_forward.10} parent=39 // pred_region
        %s560 = smul.u32 8, %s16
        %p561 = scmp.lt.s32.totalorder %s560, 15
        %s562 = scalar_select %p561, %s560, 15
        %s563 = smul.addr %s562, 4
        %s564 = scalar_lea.vmem %s2, %s563
      $region44: #{pallas_forward.10} parent=39 // pred_fallthru
        _
      // Predicated region
      $region45: #{pallas_forward.10} parent=39 // pred_check
        %p565 = pneg %p112
      $region46: #{pallas_forward.10} parent=39 // pred_check_branch
        %567 = sbr.rel (%p565) target = $region48
      $region47: #{pallas_forward.10} parent=39 // pred_region
        %p568 = scmp.lt.s32.totalorder %s16, 1
        %s569 = scalar_select %p568, %s16, 1
        %s570 = smul.addr %s569, 8
        %s571 = scalar_lea.vmem %s3, %s570
      $region48: #{pallas_forward.10} parent=39 // pred_fallthru
        _
    $region40: #{pallas_forward.10} parent=5 // pred_fallthru
      _
  $region6: #{pallas_forward.10} parent=0 // loop_footer
    %s14 = sadd.s32 1, %s10
  $region7: #{pallas_forward.10} parent=0 // loop_footer_branch
    %9 = sbr.rel target = $region3
  $region8: #{pallas_forward.10} parent=0 // loop_exit
    _

</llo_original>
